<compile_context>
chip_gen: v5e
topology: v5e:2x2
jax: 0.10.0
libtpu: 0.0.40
codegen_flags: <defaults>
</compile_context>

<pallas_src>
import numpy as np

import jax
import jax.numpy as jnp
from jax import lax
from jax.experimental import pallas as pl
from jax.experimental.pallas import tpu as pltpu


_TB = 8  # images per grid step (must be a multiple of 8)


# ------------------------------ fused kernel ------------------------------

def _net_kernel(x_ref, a1_ref, b1_ref, ce1_ref, co1_ref,
                a2_ref, b2_ref, ce2_ref, co2_ref,
                w3_ref, b3_ref, w4_ref, b4_ref, w5_ref, b5_ref,
                w6_ref, b6_ref, o_ref, y1_ref):
    f32 = jnp.float32
    tb = o_ref.shape[0]                      # images in this grid step

    # ---- conv1: 5 accumulated banded GEMMs into the VMEM scratch.
    # x_ref is (28, tb, 28): rows-major over images, so [di:di+24] is an
    # aligned outer-dim slice; rows of the GEMM are (out_row, image).
    for di in range(5):
        xs = x_ref[di:di + 24].reshape(24 * tb, 28)          # (24*tb, 28)
        t = jnp.dot(xs, a1_ref[di], preferred_element_type=f32)
        if di == 0:
            y1_ref[...] = t + b1_ref[...]                    # bias folded in
        else:
            y1_ref[...] += t

    # ---- relu1 + pool1 (2x2/2): rows 24 -> 12 via leading-dim pair max,
    # columns 24 -> 12 via two 0/1 selection GEMMs. Lanes: j*6+c -> j'*6+c.
    y1 = y1_ref[...].reshape(12, 2, tb, 144)
    rp1 = jnp.maximum(jnp.maximum(y1[:, 0], y1[:, 1]), 0.0).reshape(12 * tb, 144)
    p1 = jnp.maximum(
        jnp.dot(rp1, ce1_ref[...], preferred_element_type=f32),
        jnp.dot(rp1, co1_ref[...], preferred_element_type=f32))   # (12*tb, 72)

    # ---- conv2: 5 accumulated banded GEMMs; row slices are 8-aligned
    # because p1 rows are (spatial_row, image) with tb a multiple of 8.
    acc2 = jnp.dot(p1[0:8 * tb], a2_ref[0], preferred_element_type=f32)
    for di in range(1, 5):
        acc2 = acc2 + jnp.dot(p1[di * tb:(di + 8) * tb], a2_ref[di],
                              preferred_element_type=f32)
    y2 = jnp.maximum(acc2 + b2_ref[...], 0.0)                # (8*tb, 128)

    # ---- pool2: rows 8 -> 4, columns 8 -> 4. Lanes: j*16+c -> j'*16+c.
    y2r = y2.reshape(4, 2, tb, 128)
    rp2 = jnp.maximum(y2r[:, 0], y2r[:, 1]).reshape(4 * tb, 128)
    p2 = jnp.maximum(
        jnp.dot(rp2, ce2_ref[...], preferred_element_type=f32),
        jnp.dot(rp2, co2_ref[...], preferred_element_type=f32))   # (4*tb, 64)

    # ---- conv3 (4x4 kernel on the 4x4 map) as 4 accumulated (64,32) GEMMs,
    # then the 1x1 convs 4/5/6 as a fused MLP tail (ReLU after every layer,
    # including the logits, matching the PyTorch forward).
    h = jnp.dot(p2[0:tb], w3_ref[0], preferred_element_type=f32)
    for i in range(1, 4):
        h = h + jnp.dot(p2[i * tb:(i + 1) * tb], w3_ref[i],
                        preferred_element_type=f32)
    h = jnp.maximum(h + b3_ref[...], 0.0)                    # (tb, 32)
    h = jnp.maximum(jnp.dot(h, w4_ref[...], preferred_element_type=f32)
                    + b4_ref[...], 0.0)
    h = jnp.maximum(jnp.dot(h, w5_ref[...], preferred_element_type=f32)
                    + b5_ref[...], 0.0)
    h = jnp.maximum(jnp.dot(h, w6_ref[...], preferred_element_type=f32)
                    + b6_ref[...], 0.0)
    o_ref[...] = h                                           # (tb, 10)


# --------------------------- host-side helpers -----------------------------

def _band(n_in, n_out, k):
    """S[j_in, j_out, d] = 1 iff j_in == j_out + d (valid-conv band)."""
    s = np.zeros((n_in, n_out, k), np.float32)
    for o in range(n_out):
        for d in range(k):
            s[o + d, o, d] = 1.0
    return s


def _col_pool_selectors(j_in, c):
    """0/1 selectors for a stride-2 column pool on lanes laid out as j*c+ch."""
    j_out = j_in // 2
    e = np.zeros((j_in * c, j_out * c), np.float32)
    o = np.zeros((j_in * c, j_out * c), np.float32)
    for jo in range(j_out):
        for cc in range(c):
            e[(2 * jo) * c + cc, jo * c + cc] = 1.0
            o[(2 * jo + 1) * c + cc, jo * c + cc] = 1.0
    return jnp.asarray(e), jnp.asarray(o)


def _const_spec(shape):
    return pl.BlockSpec(shape, lambda g: (0,) * len(shape))


# ------------------------------ host wrapper ------------------------------

def net_forward(x, p, block_b=_TB):
    """x: (B, 1, 28, 28) float32 (PyTorch NCHW); returns (B, 10) logits."""
    B = x.shape[0]
    assert x.shape[1:] == (1, 28, 28), x.shape
    tb = block_b
    bp = ((B + tb - 1) // tb) * tb

    # Drop the size-1 channel dim and lay the input out rows-major over the
    # batch: (28, Bp, 28) so in-kernel row-tap slices are aligned & free.
    xi = x.reshape(B, 28, 28)
    if bp != B:
        xi = jnp.pad(xi, ((0, bp - B), (0, 0), (0, 0)))
    xt = jnp.transpose(xi, (1, 0, 2))                          # (28, Bp, 28)

    # conv1 taps folded into 5 banded (28, 24*6) matrices.
    w1k = jnp.transpose(p['w1'][:, 0], (1, 2, 0))              # (5, 5, 6)
    a1 = jnp.einsum('iod,adc->aioc', jnp.asarray(_band(28, 24, 5)),
                    w1k).reshape(5, 28, 144)
    b1r = jnp.tile(p['b1'], 24).reshape(1, 144)

    # conv2 taps folded into 5 banded (12*6, 8*16) matrices.
    w2k = jnp.transpose(p['w2'], (2, 3, 1, 0))                 # (5, 5, 6, 16)
    a2 = jnp.einsum('iod,adec->aieoc', jnp.asarray(_band(12, 8, 5)),
                    w2k).reshape(5, 72, 128)
    b2r = jnp.tile(p['b2'], 8).reshape(1, 128)

    # conv3 as 4 per-row (4*16, 32) GEMM weights; 1x1 convs as plain matrices.
    w3g = jnp.transpose(p['w3'], (2, 3, 1, 0)).reshape(4, 64, 32)
    b3r = p['b3'].reshape(1, 32)
    w4m = p['w4'].reshape(64, 32).T
    b4r = p['b4'].reshape(1, 64)
    w5m = p['w5'].reshape(32, 64).T
    b5r = p['b5'].reshape(1, 32)
    w6m = p['w6'].reshape(10, 32).T
    b6r = p['b6'].reshape(1, 10)

    ce1, co1 = _col_pool_selectors(24, 6)                      # (144, 72)
    ce2, co2 = _col_pool_selectors(8, 16)                      # (128, 64)

    consts = (a1, b1r, ce1, co1, a2, b2r, ce2, co2,
              w3g, b3r, w4m, b4r, w5m, b5r, w6m, b6r)

    in_specs = [pl.BlockSpec((28, tb, 28), lambda g: (0, g, 0))]
    in_specs += [_const_spec(c.shape) for c in consts]

    grid_spec = pltpu.PrefetchScalarGridSpec(
        num_scalar_prefetch=0,
        grid=(bp // tb,),
        in_specs=in_specs,
        out_specs=pl.BlockSpec((tb, 10), lambda g: (g, 0)),
        scratch_shapes=[pltpu.VMEM((24 * tb, 144), jnp.float32)],
    )

    # Advisory cost hint (conv FLOPs + pooling-selection GEMMs, input + logits
    # bytes); helps XLA schedule around the custom call.
    flops_per_img = 2 * (576 * 25 * 6 + 64 * 150 * 16 + 256 * 32 + 32 * 64
                         + 64 * 32 + 32 * 10)
    pool_flops_per_step = 2 * (2 * 12 * tb * 144 * 72 + 2 * 4 * tb * 128 * 64)
    cost = pl.CostEstimate(
        flops=int(bp * flops_per_img + (bp // tb) * pool_flops_per_step),
        transcendentals=0,
        bytes_accessed=int(bp * (28 * 28 * 4 + 40)),
    )

    out = pl.pallas_call(
        _net_kernel,
        out_shape=jax.ShapeDtypeStruct((bp, 10), jnp.float32),
        grid_spec=grid_spec,
        compiler_params=pltpu.CompilerParams(
            dimension_semantics=("parallel",)),
        cost_estimate=cost,
    )(xt, *consts)
    return out[:B]


# --------------------------- pure-JAX reference ---------------------------

def reference_forward(x, p):
    dn = ('NCHW', 'OIHW', 'NCHW')

    def conv(t, w, b):
        y = lax.conv_general_dilated(
            t, w, window_strides=(1, 1), padding='VALID',
            dimension_numbers=dn, precision=lax.Precision.HIGHEST)
        return y + b.reshape(1, -1, 1, 1)

    def relu(t):
        return jnp.maximum(t, 0.0)

    def pool(t):
        return lax.reduce_window(t, -jnp.inf, lax.max,
                                 (1, 1, 2, 2), (1, 1, 2, 2), 'VALID')

    y = conv(x, p['w1'], p['b1'])
    y = relu(y)
    y = pool(y)
    y = conv(y, p['w2'], p['b2'])
    y = relu(y)
    y = pool(y)
    y = conv(y, p['w3'], p['b3'])
    y = relu(y)
    y = conv(y, p['w4'], p['b4'])
    y = relu(y)
    y = conv(y, p['w5'], p['b5'])
    y = relu(y)
    y = conv(y, p['w6'], p['b6'])
    y = relu(y)                      # PyTorch Net applies ReLU to the logits too
    return y.reshape(y.shape[0], -1)


if __name__ == "__main__":
    key = jax.random.PRNGKey(0)
    ks = jax.random.split(key, 13)

    def init(k, shape, fan_in):
        bound = 1.0 / (fan_in ** 0.5)
        return jax.random.uniform(k, shape, jnp.float32, -bound, bound)

    params = {
        'w1': init(ks[0], (6, 1, 5, 5), 25),     'b1': init(ks[1], (6,), 25),
        'w2': init(ks[2], (16, 6, 5, 5), 150),   'b2': init(ks[3], (16,), 150),
        'w3': init(ks[4], (32, 16, 4, 4), 256),  'b3': init(ks[5], (32,), 256),
        'w4': init(ks[6], (64, 32, 1, 1), 32),   'b4': init(ks[7], (64,), 32),
        'w5': init(ks[8], (32, 64, 1, 1), 64),   'b5': init(ks[9], (32,), 64),
        'w6': init(ks[10], (10, 32, 1, 1), 32),  'b6': init(ks[11], (10,), 32),
    }
    # MNIST-shaped input (28x28 is required to reach a 1x1 map after conv3).
    # B=10 exercises both batch padding (to 16) and a multi-step grid.
    x = jax.random.normal(ks[12], (10, 1, 28, 28), jnp.float32)

    out = jax.jit(net_forward)(x, params)
    out = jax.block_until_ready(out)
    assert out.shape == (10, 10), out.shape
    assert bool(jnp.all(jnp.isfinite(out)))

    ref = reference_forward(x, params)
    max_diff = float(jnp.max(jnp.abs(out - ref)))
    assert jnp.allclose(out, ref, atol=2e-2, rtol=2e-2), f"max abs diff {max_diff}"

    print("KERNEL_OK")
</pallas_src>

<mosaic_0001>
module attributes {stable_mosaic.version = 11 : i64} {
  func.func @_net_kernel(%arg0: i32, %arg1: memref<28x8x28xf32, #tpu.memory_space<vmem>>, %arg2: memref<5x28x144xf32, #tpu.memory_space<vmem>>, %arg3: memref<1x144xf32, #tpu.memory_space<vmem>>, %arg4: memref<144x72xf32, #tpu.memory_space<vmem>>, %arg5: memref<144x72xf32, #tpu.memory_space<vmem>>, %arg6: memref<5x72x128xf32, #tpu.memory_space<vmem>>, %arg7: memref<1x128xf32, #tpu.memory_space<vmem>>, %arg8: memref<128x64xf32, #tpu.memory_space<vmem>>, %arg9: memref<128x64xf32, #tpu.memory_space<vmem>>, %arg10: memref<4x64x32xf32, #tpu.memory_space<vmem>>, %arg11: memref<1x32xf32, #tpu.memory_space<vmem>>, %arg12: memref<32x64xf32, #tpu.memory_space<vmem>>, %arg13: memref<1x64xf32, #tpu.memory_space<vmem>>, %arg14: memref<64x32xf32, #tpu.memory_space<vmem>>, %arg15: memref<1x32xf32, #tpu.memory_space<vmem>>, %arg16: memref<32x10xf32, #tpu.memory_space<vmem>>, %arg17: memref<1x10xf32, #tpu.memory_space<vmem>>, %arg18: memref<8x10xf32, #tpu.memory_space<vmem>>, %arg19: memref<192x144xf32, #tpu.memory_space<vmem>>) attributes {dimension_semantics = [#tpu.dimension_semantics<parallel>], iteration_bounds = array<i64: 2>, scalar_prefetch = 0 : i64, scratch_operands = 1 : i64, tpu.core_type = #tpu.core_type<tc>, window_params = [{transform_indices = @transform_0, window_bounds = array<i64: 28, 8, 28>}, {pipeline_mode = #tpu.pipeline_mode<synchronous>, transform_indices = @transform_1, window_bounds = array<i64: 5, 28, 144>}, {pipeline_mode = #tpu.pipeline_mode<synchronous>, transform_indices = @transform_2, window_bounds = array<i64: 1, 144>}, {pipeline_mode = #tpu.pipeline_mode<synchronous>, transform_indices = @transform_3, window_bounds = array<i64: 144, 72>}, {pipeline_mode = #tpu.pipeline_mode<synchronous>, transform_indices = @transform_4, window_bounds = array<i64: 144, 72>}, {pipeline_mode = #tpu.pipeline_mode<synchronous>, transform_indices = @transform_5, window_bounds = array<i64: 5, 72, 128>}, {pipeline_mode = #tpu.pipeline_mode<synchronous>, transform_indices = @transform_6, window_bounds = array<i64: 1, 128>}, {pipeline_mode = #tpu.pipeline_mode<synchronous>, transform_indices = @transform_7, window_bounds = array<i64: 128, 64>}, {pipeline_mode = #tpu.pipeline_mode<synchronous>, transform_indices = @transform_8, window_bounds = array<i64: 128, 64>}, {pipeline_mode = #tpu.pipeline_mode<synchronous>, transform_indices = @transform_9, window_bounds = array<i64: 4, 64, 32>}, {pipeline_mode = #tpu.pipeline_mode<synchronous>, transform_indices = @transform_10, window_bounds = array<i64: 1, 32>}, {pipeline_mode = #tpu.pipeline_mode<synchronous>, transform_indices = @transform_11, window_bounds = array<i64: 32, 64>}, {pipeline_mode = #tpu.pipeline_mode<synchronous>, transform_indices = @transform_12, window_bounds = array<i64: 1, 64>}, {pipeline_mode = #tpu.pipeline_mode<synchronous>, transform_indices = @transform_13, window_bounds = array<i64: 64, 32>}, {pipeline_mode = #tpu.pipeline_mode<synchronous>, transform_indices = @transform_14, window_bounds = array<i64: 1, 32>}, {pipeline_mode = #tpu.pipeline_mode<synchronous>, transform_indices = @transform_15, window_bounds = array<i64: 32, 10>}, {pipeline_mode = #tpu.pipeline_mode<synchronous>, transform_indices = @transform_16, window_bounds = array<i64: 1, 10>}, {transform_indices = @transform_17, window_bounds = array<i64: 8, 10>}]} {
    %c0 = arith.constant 0 : index
    %c0_0 = arith.constant 0 : index
    %c0_1 = arith.constant 0 : index
    %0 = vector.load %arg1[%c0, %c0_0, %c0_1] : memref<28x8x28xf32, #tpu.memory_space<vmem>>, vector<24x8x28xf32>
    %1 = vector.shape_cast %0 : vector<24x8x28xf32> to vector<192x28xf32>
    %c0_2 = arith.constant 0 : index
    %c0_3 = arith.constant 0 : index
    %c0_4 = arith.constant 0 : index
    %2 = vector.load %arg2[%c0_2, %c0_3, %c0_4] : memref<5x28x144xf32, #tpu.memory_space<vmem>>, vector<1x28x144xf32>
    %3 = vector.shape_cast %2 : vector<1x28x144xf32> to vector<28x144xf32>
    %cst = arith.constant dense<0.000000e+00> : vector<192x144xf32>
    %4 = tpu.matmul %1, %3, %cst {dimension_numbers = #tpu.dot_dimension_numbers<[1], [0], [0], [1], [0, 0, 1, 1], [], []>} : vector<192x28xf32>, vector<28x144xf32>, vector<192x144xf32> -> vector<192x144xf32>
    %c0_5 = arith.constant 0 : index
    %c0_6 = arith.constant 0 : index
    %5 = vector.load %arg3[%c0_5, %c0_6] : memref<1x144xf32, #tpu.memory_space<vmem>>, vector<1x144xf32>
    %6 = vector.broadcast %5 : vector<1x144xf32> to vector<192x144xf32>
    %7 = arith.addf %4, %6 : vector<192x144xf32>
    %c0_7 = arith.constant 0 : index
    %c0_8 = arith.constant 0 : index
    %8 = vector.load %arg19[%c0_7, %c0_8] : memref<192x144xf32, #tpu.memory_space<vmem>>, vector<192x144xf32>
    tpu.vector_store %arg19[%c0_7, %c0_8], %7 {strides = array<i32>} : memref<192x144xf32, #tpu.memory_space<vmem>>, vector<192x144xf32>,
    %c1 = arith.constant 1 : index
    %c0_9 = arith.constant 0 : index
    %c0_10 = arith.constant 0 : index
    %9 = vector.load %arg1[%c1, %c0_9, %c0_10] : memref<28x8x28xf32, #tpu.memory_space<vmem>>, vector<24x8x28xf32>
    %10 = vector.shape_cast %9 : vector<24x8x28xf32> to vector<192x28xf32>
    %c1_11 = arith.constant 1 : index
    %c0_12 = arith.constant 0 : index
    %c0_13 = arith.constant 0 : index
    %11 = vector.load %arg2[%c1_11, %c0_12, %c0_13] : memref<5x28x144xf32, #tpu.memory_space<vmem>>, vector<1x28x144xf32>
    %12 = vector.shape_cast %11 : vector<1x28x144xf32> to vector<28x144xf32>
    %cst_14 = arith.constant dense<0.000000e+00> : vector<192x144xf32>
    %13 = tpu.matmul %10, %12, %cst_14 {dimension_numbers = #tpu.dot_dimension_numbers<[1], [0], [0], [1], [0, 0, 1, 1], [], []>} : vector<192x28xf32>, vector<28x144xf32>, vector<192x144xf32> -> vector<192x144xf32>
    %c0_15 = arith.constant 0 : index
    %c0_16 = arith.constant 0 : index
    %14 = vector.load %arg19[%c0_15, %c0_16] : memref<192x144xf32, #tpu.memory_space<vmem>>, vector<192x144xf32>
    %15 = arith.addf %14, %13 : vector<192x144xf32>
    %c0_17 = arith.constant 0 : index
    %c0_18 = arith.constant 0 : index
    %16 = vector.load %arg19[%c0_17, %c0_18] : memref<192x144xf32, #tpu.memory_space<vmem>>, vector<192x144xf32>
    tpu.vector_store %arg19[%c0_17, %c0_18], %15 {strides = array<i32>} : memref<192x144xf32, #tpu.memory_space<vmem>>, vector<192x144xf32>,
    %c2 = arith.constant 2 : index
    %c0_19 = arith.constant 0 : index
    %c0_20 = arith.constant 0 : index
    %17 = vector.load %arg1[%c2, %c0_19, %c0_20] : memref<28x8x28xf32, #tpu.memory_space<vmem>>, vector<24x8x28xf32>
    %18 = vector.shape_cast %17 : vector<24x8x28xf32> to vector<192x28xf32>
    %c2_21 = arith.constant 2 : index
    %c0_22 = arith.constant 0 : index
    %c0_23 = arith.constant 0 : index
    %19 = vector.load %arg2[%c2_21, %c0_22, %c0_23] : memref<5x28x144xf32, #tpu.memory_space<vmem>>, vector<1x28x144xf32>
    %20 = vector.shape_cast %19 : vector<1x28x144xf32> to vector<28x144xf32>
    %cst_24 = arith.constant dense<0.000000e+00> : vector<192x144xf32>
    %21 = tpu.matmul %18, %20, %cst_24 {dimension_numbers = #tpu.dot_dimension_numbers<[1], [0], [0], [1], [0, 0, 1, 1], [], []>} : vector<192x28xf32>, vector<28x144xf32>, vector<192x144xf32> -> vector<192x144xf32>
    %c0_25 = arith.constant 0 : index
    %c0_26 = arith.constant 0 : index
    %22 = vector.load %arg19[%c0_25, %c0_26] : memref<192x144xf32, #tpu.memory_space<vmem>>, vector<192x144xf32>
    %23 = arith.addf %22, %21 : vector<192x144xf32>
    %c0_27 = arith.constant 0 : index
    %c0_28 = arith.constant 0 : index
    %24 = vector.load %arg19[%c0_27, %c0_28] : memref<192x144xf32, #tpu.memory_space<vmem>>, vector<192x144xf32>
    tpu.vector_store %arg19[%c0_27, %c0_28], %23 {strides = array<i32>} : memref<192x144xf32, #tpu.memory_space<vmem>>, vector<192x144xf32>,
    %c3 = arith.constant 3 : index
    %c0_29 = arith.constant 0 : index
    %c0_30 = arith.constant 0 : index
    %25 = vector.load %arg1[%c3, %c0_29, %c0_30] : memref<28x8x28xf32, #tpu.memory_space<vmem>>, vector<24x8x28xf32>
    %26 = vector.shape_cast %25 : vector<24x8x28xf32> to vector<192x28xf32>
    %c3_31 = arith.constant 3 : index
    %c0_32 = arith.constant 0 : index
    %c0_33 = arith.constant 0 : index
    %27 = vector.load %arg2[%c3_31, %c0_32, %c0_33] : memref<5x28x144xf32, #tpu.memory_space<vmem>>, vector<1x28x144xf32>
    %28 = vector.shape_cast %27 : vector<1x28x144xf32> to vector<28x144xf32>
    %cst_34 = arith.constant dense<0.000000e+00> : vector<192x144xf32>
    %29 = tpu.matmul %26, %28, %cst_34 {dimension_numbers = #tpu.dot_dimension_numbers<[1], [0], [0], [1], [0, 0, 1, 1], [], []>} : vector<192x28xf32>, vector<28x144xf32>, vector<192x144xf32> -> vector<192x144xf32>
    %c0_35 = arith.constant 0 : index
    %c0_36 = arith.constant 0 : index
    %30 = vector.load %arg19[%c0_35, %c0_36] : memref<192x144xf32, #tpu.memory_space<vmem>>, vector<192x144xf32>
    %31 = arith.addf %30, %29 : vector<192x144xf32>
    %c0_37 = arith.constant 0 : index
    %c0_38 = arith.constant 0 : index
    %32 = vector.load %arg19[%c0_37, %c0_38] : memref<192x144xf32, #tpu.memory_space<vmem>>, vector<192x144xf32>
    tpu.vector_store %arg19[%c0_37, %c0_38], %31 {strides = array<i32>} : memref<192x144xf32, #tpu.memory_space<vmem>>, vector<192x144xf32>,
    %c4 = arith.constant 4 : index
    %c0_39 = arith.constant 0 : index
    %c0_40 = arith.constant 0 : index
    %33 = vector.load %arg1[%c4, %c0_39, %c0_40] : memref<28x8x28xf32, #tpu.memory_space<vmem>>, vector<24x8x28xf32>
    %34 = vector.shape_cast %33 : vector<24x8x28xf32> to vector<192x28xf32>
    %c4_41 = arith.constant 4 : index
    %c0_42 = arith.constant 0 : index
    %c0_43 = arith.constant 0 : index
    %35 = vector.load %arg2[%c4_41, %c0_42, %c0_43] : memref<5x28x144xf32, #tpu.memory_space<vmem>>, vector<1x28x144xf32>
    %36 = vector.shape_cast %35 : vector<1x28x144xf32> to vector<28x144xf32>
    %cst_44 = arith.constant dense<0.000000e+00> : vector<192x144xf32>
    %37 = tpu.matmul %34, %36, %cst_44 {dimension_numbers = #tpu.dot_dimension_numbers<[1], [0], [0], [1], [0, 0, 1, 1], [], []>} : vector<192x28xf32>, vector<28x144xf32>, vector<192x144xf32> -> vector<192x144xf32>
    %c0_45 = arith.constant 0 : index
    %c0_46 = arith.constant 0 : index
    %38 = vector.load %arg19[%c0_45, %c0_46] : memref<192x144xf32, #tpu.memory_space<vmem>>, vector<192x144xf32>
    %39 = arith.addf %38, %37 : vector<192x144xf32>
    %c0_47 = arith.constant 0 : index
    %c0_48 = arith.constant 0 : index
    %40 = vector.load %arg19[%c0_47, %c0_48] : memref<192x144xf32, #tpu.memory_space<vmem>>, vector<192x144xf32>
    tpu.vector_store %arg19[%c0_47, %c0_48], %39 {strides = array<i32>} : memref<192x144xf32, #tpu.memory_space<vmem>>, vector<192x144xf32>,
    %c0_49 = arith.constant 0 : index
    %c0_50 = arith.constant 0 : index
    %41 = vector.load %arg19[%c0_49, %c0_50] : memref<192x144xf32, #tpu.memory_space<vmem>>, vector<192x144xf32>
    %42 = vector.shape_cast %41 : vector<192x144xf32> to vector<12x2x8x144xf32>
    %43 = vector.extract_strided_slice %42 {offsets = [0, 0, 0, 0], sizes = [12, 1, 8, 144], strides = [1, 1, 1, 1]} : vector<12x2x8x144xf32> to vector<12x1x8x144xf32>
    %44 = vector.shape_cast %43 : vector<12x1x8x144xf32> to vector<12x8x144xf32>
    %45 = vector.extract_strided_slice %42 {offsets = [0, 1, 0, 0], sizes = [12, 1, 8, 144], strides = [1, 1, 1, 1]} : vector<12x2x8x144xf32> to vector<12x1x8x144xf32>
    %46 = vector.shape_cast %45 : vector<12x1x8x144xf32> to vector<12x8x144xf32>
    %47 = arith.maximumf %44, %46 : vector<12x8x144xf32>
    %cst_51 = arith.constant 0.000000e+00 : f32
    %48 = vector.broadcast %cst_51 : f32 to vector<12x8x144xf32>
    %49 = arith.maximumf %47, %48 : vector<12x8x144xf32>
    %50 = vector.shape_cast %49 : vector<12x8x144xf32> to vector<96x144xf32>
    %c0_52 = arith.constant 0 : index
    %c0_53 = arith.constant 0 : index
    %51 = vector.load %arg4[%c0_52, %c0_53] : memref<144x72xf32, #tpu.memory_space<vmem>>, vector<144x72xf32>
    %cst_54 = arith.constant dense<0.000000e+00> : vector<96x72xf32>
    %52 = tpu.matmul %50, %51, %cst_54 {dimension_numbers = #tpu.dot_dimension_numbers<[1], [0], [0], [1], [0, 0, 1, 1], [], []>} : vector<96x144xf32>, vector<144x72xf32>, vector<96x72xf32> -> vector<96x72xf32>
    %c0_55 = arith.constant 0 : index
    %c0_56 = arith.constant 0 : index
    %53 = vector.load %arg5[%c0_55, %c0_56] : memref<144x72xf32, #tpu.memory_space<vmem>>, vector<144x72xf32>
    %cst_57 = arith.constant dense<0.000000e+00> : vector<96x72xf32>
    %54 = tpu.matmul %50, %53, %cst_57 {dimension_numbers = #tpu.dot_dimension_numbers<[1], [0], [0], [1], [0, 0, 1, 1], [], []>} : vector<96x144xf32>, vector<144x72xf32>, vector<96x72xf32> -> vector<96x72xf32>
    %55 = arith.maximumf %52, %54 : vector<96x72xf32>
    %56 = vector.extract_strided_slice %55 {offsets = [0, 0], sizes = [64, 72], strides = [1, 1]} : vector<96x72xf32> to vector<64x72xf32>
    %c0_58 = arith.constant 0 : index
    %c0_59 = arith.constant 0 : index
    %c0_60 = arith.constant 0 : index
    %57 = vector.load %arg6[%c0_58, %c0_59, %c0_60] : memref<5x72x128xf32, #tpu.memory_space<vmem>>, vector<1x72x128xf32>
    %58 = vector.shape_cast %57 : vector<1x72x128xf32> to vector<72x128xf32>
    %cst_61 = arith.constant dense<0.000000e+00> : vector<64x128xf32>
    %59 = tpu.matmul %56, %58, %cst_61 {dimension_numbers = #tpu.dot_dimension_numbers<[1], [0], [0], [1], [0, 0, 1, 1], [], []>} : vector<64x72xf32>, vector<72x128xf32>, vector<64x128xf32> -> vector<64x128xf32>
    %60 = vector.extract_strided_slice %55 {offsets = [8, 0], sizes = [64, 72], strides = [1, 1]} : vector<96x72xf32> to vector<64x72xf32>
    %c1_62 = arith.constant 1 : index
    %c0_63 = arith.constant 0 : index
    %c0_64 = arith.constant 0 : index
    %61 = vector.load %arg6[%c1_62, %c0_63, %c0_64] : memref<5x72x128xf32, #tpu.memory_space<vmem>>, vector<1x72x128xf32>
    %62 = vector.shape_cast %61 : vector<1x72x128xf32> to vector<72x128xf32>
    %cst_65 = arith.constant dense<0.000000e+00> : vector<64x128xf32>
    %63 = tpu.matmul %60, %62, %cst_65 {dimension_numbers = #tpu.dot_dimension_numbers<[1], [0], [0], [1], [0, 0, 1, 1], [], []>} : vector<64x72xf32>, vector<72x128xf32>, vector<64x128xf32> -> vector<64x128xf32>
    %64 = arith.addf %59, %63 : vector<64x128xf32>
    %65 = vector.extract_strided_slice %55 {offsets = [16, 0], sizes = [64, 72], strides = [1, 1]} : vector<96x72xf32> to vector<64x72xf32>
    %c2_66 = arith.constant 2 : index
    %c0_67 = arith.constant 0 : index
    %c0_68 = arith.constant 0 : index
    %66 = vector.load %arg6[%c2_66, %c0_67, %c0_68] : memref<5x72x128xf32, #tpu.memory_space<vmem>>, vector<1x72x128xf32>
    %67 = vector.shape_cast %66 : vector<1x72x128xf32> to vector<72x128xf32>
    %cst_69 = arith.constant dense<0.000000e+00> : vector<64x128xf32>
    %68 = tpu.matmul %65, %67, %cst_69 {dimension_numbers = #tpu.dot_dimension_numbers<[1], [0], [0], [1], [0, 0, 1, 1], [], []>} : vector<64x72xf32>, vector<72x128xf32>, vector<64x128xf32> -> vector<64x128xf32>
    %69 = arith.addf %64, %68 : vector<64x128xf32>
    %70 = vector.extract_strided_slice %55 {offsets = [24, 0], sizes = [64, 72], strides = [1, 1]} : vector<96x72xf32> to vector<64x72xf32>
    %c3_70 = arith.constant 3 : index
    %c0_71 = arith.constant 0 : index
    %c0_72 = arith.constant 0 : index
    %71 = vector.load %arg6[%c3_70, %c0_71, %c0_72] : memref<5x72x128xf32, #tpu.memory_space<vmem>>, vector<1x72x128xf32>
    %72 = vector.shape_cast %71 : vector<1x72x128xf32> to vector<72x128xf32>
    %cst_73 = arith.constant dense<0.000000e+00> : vector<64x128xf32>
    %73 = tpu.matmul %70, %72, %cst_73 {dimension_numbers = #tpu.dot_dimension_numbers<[1], [0], [0], [1], [0, 0, 1, 1], [], []>} : vector<64x72xf32>, vector<72x128xf32>, vector<64x128xf32> -> vector<64x128xf32>
    %74 = arith.addf %69, %73 : vector<64x128xf32>
    %75 = vector.extract_strided_slice %55 {offsets = [32, 0], sizes = [64, 72], strides = [1, 1]} : vector<96x72xf32> to vector<64x72xf32>
    %c4_74 = arith.constant 4 : index
    %c0_75 = arith.constant 0 : index
    %c0_76 = arith.constant 0 : index
    %76 = vector.load %arg6[%c4_74, %c0_75, %c0_76] : memref<5x72x128xf32, #tpu.memory_space<vmem>>, vector<1x72x128xf32>
    %77 = vector.shape_cast %76 : vector<1x72x128xf32> to vector<72x128xf32>
    %cst_77 = arith.constant dense<0.000000e+00> : vector<64x128xf32>
    %78 = tpu.matmul %75, %77, %cst_77 {dimension_numbers = #tpu.dot_dimension_numbers<[1], [0], [0], [1], [0, 0, 1, 1], [], []>} : vector<64x72xf32>, vector<72x128xf32>, vector<64x128xf32> -> vector<64x128xf32>
    %79 = arith.addf %74, %78 : vector<64x128xf32>
    %c0_78 = arith.constant 0 : index
    %c0_79 = arith.constant 0 : index
    %80 = vector.load %arg7[%c0_78, %c0_79] : memref<1x128xf32, #tpu.memory_space<vmem>>, vector<1x128xf32>
    %81 = vector.broadcast %80 : vector<1x128xf32> to vector<64x128xf32>
    %82 = arith.addf %79, %81 : vector<64x128xf32>
    %cst_80 = arith.constant 0.000000e+00 : f32
    %83 = vector.broadcast %cst_80 : f32 to vector<64x128xf32>
    %84 = arith.maximumf %82, %83 : vector<64x128xf32>
    %85 = vector.shape_cast %84 : vector<64x128xf32> to vector<4x2x8x128xf32>
    %86 = vector.extract_strided_slice %85 {offsets = [0, 0, 0, 0], sizes = [4, 1, 8, 128], strides = [1, 1, 1, 1]} : vector<4x2x8x128xf32> to vector<4x1x8x128xf32>
    %87 = vector.shape_cast %86 : vector<4x1x8x128xf32> to vector<4x8x128xf32>
    %88 = vector.extract_strided_slice %85 {offsets = [0, 1, 0, 0], sizes = [4, 1, 8, 128], strides = [1, 1, 1, 1]} : vector<4x2x8x128xf32> to vector<4x1x8x128xf32>
    %89 = vector.shape_cast %88 : vector<4x1x8x128xf32> to vector<4x8x128xf32>
    %90 = arith.maximumf %87, %89 : vector<4x8x128xf32>
    %91 = vector.shape_cast %90 : vector<4x8x128xf32> to vector<32x128xf32>
    %c0_81 = arith.constant 0 : index
    %c0_82 = arith.constant 0 : index
    %92 = vector.load %arg8[%c0_81, %c0_82] : memref<128x64xf32, #tpu.memory_space<vmem>>, vector<128x64xf32>
    %cst_83 = arith.constant dense<0.000000e+00> : vector<32x64xf32>
    %93 = tpu.matmul %91, %92, %cst_83 {dimension_numbers = #tpu.dot_dimension_numbers<[1], [0], [0], [1], [0, 0, 1, 1], [], []>} : vector<32x128xf32>, vector<128x64xf32>, vector<32x64xf32> -> vector<32x64xf32>
    %c0_84 = arith.constant 0 : index
    %c0_85 = arith.constant 0 : index
    %94 = vector.load %arg9[%c0_84, %c0_85] : memref<128x64xf32, #tpu.memory_space<vmem>>, vector<128x64xf32>
    %cst_86 = arith.constant dense<0.000000e+00> : vector<32x64xf32>
    %95 = tpu.matmul %91, %94, %cst_86 {dimension_numbers = #tpu.dot_dimension_numbers<[1], [0], [0], [1], [0, 0, 1, 1], [], []>} : vector<32x128xf32>, vector<128x64xf32>, vector<32x64xf32> -> vector<32x64xf32>
    %96 = arith.maximumf %93, %95 : vector<32x64xf32>
    %97 = vector.extract_strided_slice %96 {offsets = [0, 0], sizes = [8, 64], strides = [1, 1]} : vector<32x64xf32> to vector<8x64xf32>
    %c0_87 = arith.constant 0 : index
    %c0_88 = arith.constant 0 : index
    %c0_89 = arith.constant 0 : index
    %98 = vector.load %arg10[%c0_87, %c0_88, %c0_89] : memref<4x64x32xf32, #tpu.memory_space<vmem>>, vector<1x64x32xf32>
    %99 = vector.shape_cast %98 : vector<1x64x32xf32> to vector<64x32xf32>
    %cst_90 = arith.constant dense<0.000000e+00> : vector<8x32xf32>
    %100 = tpu.matmul %97, %99, %cst_90 {dimension_numbers = #tpu.dot_dimension_numbers<[1], [0], [0], [1], [0, 0, 1, 1], [], []>} : vector<8x64xf32>, vector<64x32xf32>, vector<8x32xf32> -> vector<8x32xf32>
    %101 = vector.extract_strided_slice %96 {offsets = [8, 0], sizes = [8, 64], strides = [1, 1]} : vector<32x64xf32> to vector<8x64xf32>
    %c1_91 = arith.constant 1 : index
    %c0_92 = arith.constant 0 : index
    %c0_93 = arith.constant 0 : index
    %102 = vector.load %arg10[%c1_91, %c0_92, %c0_93] : memref<4x64x32xf32, #tpu.memory_space<vmem>>, vector<1x64x32xf32>
    %103 = vector.shape_cast %102 : vector<1x64x32xf32> to vector<64x32xf32>
    %cst_94 = arith.constant dense<0.000000e+00> : vector<8x32xf32>
    %104 = tpu.matmul %101, %103, %cst_94 {dimension_numbers = #tpu.dot_dimension_numbers<[1], [0], [0], [1], [0, 0, 1, 1], [], []>} : vector<8x64xf32>, vector<64x32xf32>, vector<8x32xf32> -> vector<8x32xf32>
    %105 = arith.addf %100, %104 : vector<8x32xf32>
    %106 = vector.extract_strided_slice %96 {offsets = [16, 0], sizes = [8, 64], strides = [1, 1]} : vector<32x64xf32> to vector<8x64xf32>
    %c2_95 = arith.constant 2 : index
    %c0_96 = arith.constant 0 : index
    %c0_97 = arith.constant 0 : index
    %107 = vector.load %arg10[%c2_95, %c0_96, %c0_97] : memref<4x64x32xf32, #tpu.memory_space<vmem>>, vector<1x64x32xf32>
    %108 = vector.shape_cast %107 : vector<1x64x32xf32> to vector<64x32xf32>
    %cst_98 = arith.constant dense<0.000000e+00> : vector<8x32xf32>
    %109 = tpu.matmul %106, %108, %cst_98 {dimension_numbers = #tpu.dot_dimension_numbers<[1], [0], [0], [1], [0, 0, 1, 1], [], []>} : vector<8x64xf32>, vector<64x32xf32>, vector<8x32xf32> -> vector<8x32xf32>
    %110 = arith.addf %105, %109 : vector<8x32xf32>
    %111 = vector.extract_strided_slice %96 {offsets = [24, 0], sizes = [8, 64], strides = [1, 1]} : vector<32x64xf32> to vector<8x64xf32>
    %c3_99 = arith.constant 3 : index
    %c0_100 = arith.constant 0 : index
    %c0_101 = arith.constant 0 : index
    %112 = vector.load %arg10[%c3_99, %c0_100, %c0_101] : memref<4x64x32xf32, #tpu.memory_space<vmem>>, vector<1x64x32xf32>
    %113 = vector.shape_cast %112 : vector<1x64x32xf32> to vector<64x32xf32>
    %cst_102 = arith.constant dense<0.000000e+00> : vector<8x32xf32>
    %114 = tpu.matmul %111, %113, %cst_102 {dimension_numbers = #tpu.dot_dimension_numbers<[1], [0], [0], [1], [0, 0, 1, 1], [], []>} : vector<8x64xf32>, vector<64x32xf32>, vector<8x32xf32> -> vector<8x32xf32>
    %115 = arith.addf %110, %114 : vector<8x32xf32>
    %c0_103 = arith.constant 0 : index
    %c0_104 = arith.constant 0 : index
    %116 = vector.load %arg11[%c0_103, %c0_104] : memref<1x32xf32, #tpu.memory_space<vmem>>, vector<1x32xf32>
    %117 = vector.broadcast %116 : vector<1x32xf32> to vector<8x32xf32>
    %118 = arith.addf %115, %117 : vector<8x32xf32>
    %cst_105 = arith.constant 0.000000e+00 : f32
    %119 = vector.broadcast %cst_105 : f32 to vector<8x32xf32>
    %120 = arith.maximumf %118, %119 : vector<8x32xf32>
    %c0_106 = arith.constant 0 : index
    %c0_107 = arith.constant 0 : index
    %121 = vector.load %arg12[%c0_106, %c0_107] : memref<32x64xf32, #tpu.memory_space<vmem>>, vector<32x64xf32>
    %cst_108 = arith.constant dense<0.000000e+00> : vector<8x64xf32>
    %122 = tpu.matmul %120, %121, %cst_108 {dimension_numbers = #tpu.dot_dimension_numbers<[1], [0], [0], [1], [0, 0, 1, 1], [], []>} : vector<8x32xf32>, vector<32x64xf32>, vector<8x64xf32> -> vector<8x64xf32>
    %c0_109 = arith.constant 0 : index
    %c0_110 = arith.constant 0 : index
    %123 = vector.load %arg13[%c0_109, %c0_110] : memref<1x64xf32, #tpu.memory_space<vmem>>, vector<1x64xf32>
    %124 = vector.broadcast %123 : vector<1x64xf32> to vector<8x64xf32>
    %125 = arith.addf %122, %124 : vector<8x64xf32>
    %cst_111 = arith.constant 0.000000e+00 : f32
    %126 = vector.broadcast %cst_111 : f32 to vector<8x64xf32>
    %127 = arith.maximumf %125, %126 : vector<8x64xf32>
    %c0_112 = arith.constant 0 : index
    %c0_113 = arith.constant 0 : index
    %128 = vector.load %arg14[%c0_112, %c0_113] : memref<64x32xf32, #tpu.memory_space<vmem>>, vector<64x32xf32>
    %cst_114 = arith.constant dense<0.000000e+00> : vector<8x32xf32>
    %129 = tpu.matmul %127, %128, %cst_114 {dimension_numbers = #tpu.dot_dimension_numbers<[1], [0], [0], [1], [0, 0, 1, 1], [], []>} : vector<8x64xf32>, vector<64x32xf32>, vector<8x32xf32> -> vector<8x32xf32>
    %c0_115 = arith.constant 0 : index
    %c0_116 = arith.constant 0 : index
    %130 = vector.load %arg15[%c0_115, %c0_116] : memref<1x32xf32, #tpu.memory_space<vmem>>, vector<1x32xf32>
    %131 = vector.broadcast %130 : vector<1x32xf32> to vector<8x32xf32>
    %132 = arith.addf %129, %131 : vector<8x32xf32>
    %cst_117 = arith.constant 0.000000e+00 : f32
    %133 = vector.broadcast %cst_117 : f32 to vector<8x32xf32>
    %134 = arith.maximumf %132, %133 : vector<8x32xf32>
    %c0_118 = arith.constant 0 : index
    %c0_119 = arith.constant 0 : index
    %135 = vector.load %arg16[%c0_118, %c0_119] : memref<32x10xf32, #tpu.memory_space<vmem>>, vector<32x10xf32>
    %cst_120 = arith.constant dense<0.000000e+00> : vector<8x10xf32>
    %136 = tpu.matmul %134, %135, %cst_120 {dimension_numbers = #tpu.dot_dimension_numbers<[1], [0], [0], [1], [0, 0, 1, 1], [], []>} : vector<8x32xf32>, vector<32x10xf32>, vector<8x10xf32> -> vector<8x10xf32>
    %c0_121 = arith.constant 0 : index
    %c0_122 = arith.constant 0 : index
    %137 = vector.load %arg17[%c0_121, %c0_122] : memref<1x10xf32, #tpu.memory_space<vmem>>, vector<1x10xf32>
    %138 = vector.broadcast %137 : vector<1x10xf32> to vector<8x10xf32>
    %139 = arith.addf %136, %138 : vector<8x10xf32>
    %cst_123 = arith.constant 0.000000e+00 : f32
    %140 = vector.broadcast %cst_123 : f32 to vector<8x10xf32>
    %141 = arith.maximumf %139, %140 : vector<8x10xf32>
    %c0_124 = arith.constant 0 : index
    %c0_125 = arith.constant 0 : index
    %142 = vector.load %arg18[%c0_124, %c0_125] : memref<8x10xf32, #tpu.memory_space<vmem>>, vector<8x10xf32>
    tpu.vector_store %arg18[%c0_124, %c0_125], %141 {strides = array<i32>} : memref<8x10xf32, #tpu.memory_space<vmem>>, vector<8x10xf32>,
    return
  }
  func.func @transform_0(%arg0: i32) -> (i32, i32, i32) {
    %c0_i32 = arith.constant 0 : i32
    %c0_i32_0 = arith.constant 0 : i32
    %c0_i32_1 = arith.constant 0 : i32
    return %c0_i32, %arg0, %c0_i32_0 : i32, i32, i32
  }
  func.func @transform_1(%arg0: i32) -> (i32, i32, i32) {
    %c0_i32 = arith.constant 0 : i32
    %c0_i32_0 = arith.constant 0 : i32
    %c0_i32_1 = arith.constant 0 : i32
    %c0_i32_2 = arith.constant 0 : i32
    return %c0_i32, %c0_i32_0, %c0_i32_1 : i32, i32, i32
  }
  func.func @transform_2(%arg0: i32) -> (i32, i32) {
    %c0_i32 = arith.constant 0 : i32
    %c0_i32_0 = arith.constant 0 : i32
    %c0_i32_1 = arith.constant 0 : i32
    return %c0_i32, %c0_i32_0 : i32, i32
  }
  func.func @transform_3(%arg0: i32) -> (i32, i32) {
    %c0_i32 = arith.constant 0 : i32
    %c0_i32_0 = arith.constant 0 : i32
    %c0_i32_1 = arith.constant 0 : i32
    return %c0_i32, %c0_i32_0 : i32, i32
  }
  func.func @transform_4(%arg0: i32) -> (i32, i32) {
    %c0_i32 = arith.constant 0 : i32
    %c0_i32_0 = arith.constant 0 : i32
    %c0_i32_1 = arith.constant 0 : i32
    return %c0_i32, %c0_i32_0 : i32, i32
  }
  func.func @transform_5(%arg0: i32) -> (i32, i32, i32) {
    %c0_i32 = arith.constant 0 : i32
    %c0_i32_0 = arith.constant 0 : i32
    %c0_i32_1 = arith.constant 0 : i32
    %c0_i32_2 = arith.constant 0 : i32
    return %c0_i32, %c0_i32_0, %c0_i32_1 : i32, i32, i32
  }
  func.func @transform_6(%arg0: i32) -> (i32, i32) {
    %c0_i32 = arith.constant 0 : i32
    %c0_i32_0 = arith.constant 0 : i32
    %c0_i32_1 = arith.constant 0 : i32
    return %c0_i32, %c0_i32_0 : i32, i32
  }
  func.func @transform_7(%arg0: i32) -> (i32, i32) {
    %c0_i32 = arith.constant 0 : i32
    %c0_i32_0 = arith.constant 0 : i32
    %c0_i32_1 = arith.constant 0 : i32
    return %c0_i32, %c0_i32_0 : i32, i32
  }
  func.func @transform_8(%arg0: i32) -> (i32, i32) {
    %c0_i32 = arith.constant 0 : i32
    %c0_i32_0 = arith.constant 0 : i32
    %c0_i32_1 = arith.constant 0 : i32
    return %c0_i32, %c0_i32_0 : i32, i32
  }
  func.func @transform_9(%arg0: i32) -> (i32, i32, i32) {
    %c0_i32 = arith.constant 0 : i32
    %c0_i32_0 = arith.constant 0 : i32
    %c0_i32_1 = arith.constant 0 : i32
    %c0_i32_2 = arith.constant 0 : i32
    return %c0_i32, %c0_i32_0, %c0_i32_1 : i32, i32, i32
  }
  func.func @transform_10(%arg0: i32) -> (i32, i32) {
    %c0_i32 = arith.constant 0 : i32
    %c0_i32_0 = arith.constant 0 : i32
    %c0_i32_1 = arith.constant 0 : i32
    return %c0_i32, %c0_i32_0 : i32, i32
  }
  func.func @transform_11(%arg0: i32) -> (i32, i32) {
    %c0_i32 = arith.constant 0 : i32
    %c0_i32_0 = arith.constant 0 : i32
    %c0_i32_1 = arith.constant 0 : i32
    return %c0_i32, %c0_i32_0 : i32, i32
  }
  func.func @transform_12(%arg0: i32) -> (i32, i32) {
    %c0_i32 = arith.constant 0 : i32
    %c0_i32_0 = arith.constant 0 : i32
    %c0_i32_1 = arith.constant 0 : i32
    return %c0_i32, %c0_i32_0 : i32, i32
  }
  func.func @transform_13(%arg0: i32) -> (i32, i32) {
    %c0_i32 = arith.constant 0 : i32
    %c0_i32_0 = arith.constant 0 : i32
    %c0_i32_1 = arith.constant 0 : i32
    return %c0_i32, %c0_i32_0 : i32, i32
  }
  func.func @transform_14(%arg0: i32) -> (i32, i32) {
    %c0_i32 = arith.constant 0 : i32
    %c0_i32_0 = arith.constant 0 : i32
    %c0_i32_1 = arith.constant 0 : i32
    return %c0_i32, %c0_i32_0 : i32, i32
  }
  func.func @transform_15(%arg0: i32) -> (i32, i32) {
    %c0_i32 = arith.constant 0 : i32
    %c0_i32_0 = arith.constant 0 : i32
    %c0_i32_1 = arith.constant 0 : i32
    return %c0_i32, %c0_i32_0 : i32, i32
  }
  func.func @transform_16(%arg0: i32) -> (i32, i32) {
    %c0_i32 = arith.constant 0 : i32
    %c0_i32_0 = arith.constant 0 : i32
    %c0_i32_1 = arith.constant 0 : i32
    return %c0_i32, %c0_i32_0 : i32, i32
  }
  func.func @transform_17(%arg0: i32) -> (i32, i32) {
    %c0_i32 = arith.constant 0 : i32
    %c0_i32_0 = arith.constant 0 : i32
    return %arg0, %c0_i32 : i32, i32
  }
}

</mosaic_0001>

<llo_original>
// kernel: tile.13
$region0: #{tile.13}
  #allocation0 [shape = 's32[1]{0}', space=sflag, size = 0x4, scoped, tag = 'scoped memory for tile.13']
  %s0 = inlined_call_operand.vmem [shape: f32[6], index: 0, kind: input, shape index: {}]
  %s1 = inlined_call_operand.vmem [shape: f32[24,6], index: 1, kind: output, shape index: {}]
  // Predicated region
  $region2: #{tile.13} parent=0 // pred_check
    _
  $region3: #{tile.13} parent=0 // pred_check_branch
    %3 = sbr.rel (0) target = $region5
  $region4: #{tile.13} parent=0 // pred_region
    _
  $region5: #{tile.13} parent=0 // pred_fallthru
    _
  %v4 = vld [vmem:[%s0] ss:$0 sm:$0xff]
  %5 = vst [vmem:[%s1] sm:$0xff] %v4
  %s6 = scalar_lea.vmem %s1, 8
  %7 = vst [vmem:[%s6] sm:$0xff] %v4
  %s8 = scalar_lea.vmem %s1, 16
  %9 = vst [vmem:[%s8] sm:$0xff] %v4

// kernel: tile.14
$region0: #{tile.14}
  %s0 = inlined_call_operand.vmem [shape: f32[24,6], index: 0, kind: input, shape index: {}]
  %s1 = inlined_call_operand.vmem [shape: f32[1,144], index: 1, kind: output, shape index: {}]
  $region1: #{tile.14} parent=0
    #allocation0 [shape = 'u8[8192]{0}', space=vmem, size = 0x2000, scoped, tag = 'scoped mem for output reshape']
    %v2 = vld [vmem:[%s0] sm:$0x1]
    %vm3 = vcmask 48128
    %4 = vst.msk [vmem:[#allocation0] sm:$0x1] %vm3, %v2
    %s5 = scalar_lea.vmem %s0, 21
    %v6 = vld [vmem:[%s5] sm:$0x1]
    %s7 = scalar_lea.vmem %s0, 21
    %v8 = vld [vmem:[%s7] sm:$0x1]
    %vm9 = vcmask 15360
    %v10 = vsel %vm9, %v8, %v6
    %11 = vrot.lane.b32.xlu0 %v10, 126
    %v12 = vpop.permute.xlu0 %11
    %vm13 = vcmask 31744
    %s14 = scalar_lea.vmem [#allocation0], 8
    %15 = vst.msk [vmem:[%s14] sm:$0x1] %vm13, %v12
    %vm16 = vcmask 1048560
    %17 = vst.msk [vmem:[#allocation0] sm:$0x1] %vm16, %v12
    %s18 = scalar_lea.vmem %s0, 20
    %v19 = vld [vmem:[%s18] sm:$0x1]
    %20 = vrot.lane.b32.xlu0 %v19, 120
    %v21 = vpop.permute.xlu0 %20
    %vm22 = vcmask 1032128
    %23 = vst.msk [vmem:[#allocation0] sm:$0x1] %vm22, %v21
    %s24 = scalar_lea.vmem %s0, 19
    %v25 = vld [vmem:[%s24] sm:$0x1]
    %26 = vrot.lane.b32.xlu0 %v25, 114
    %v27 = vpop.permute.xlu0 %26
    %vm28 = vcmask 982928
    %29 = vst.msk [vmem:[#allocation0] sm:$0x1] %vm28, %v27
    %s30 = scalar_lea.vmem %s0, 18
    %v31 = vld [vmem:[%s30] sm:$0x1]
    %32 = vrot.lane.b32.xlu0 %v31, 108
    %v33 = vpop.permute.xlu0 %32
    %vm34 = vcmask 933728
    %35 = vst.msk [vmem:[#allocation0] sm:$0x1] %vm34, %v33
    %s36 = scalar_lea.vmem %s0, 17
    %v37 = vld [vmem:[%s36] sm:$0x1]
    %38 = vrot.lane.b32.xlu0 %v37, 102
    %v39 = vpop.permute.xlu0 %38
    %vm40 = vcmask 884528
    %41 = vst.msk [vmem:[#allocation0] sm:$0x1] %vm40, %v39
    %s42 = scalar_lea.vmem %s0, 16
    %v43 = vld [vmem:[%s42] sm:$0x1]
    %44 = vrot.lane.b32.xlu0 %v43, 96
    %v45 = vpop.permute.xlu0 %44
    %vm46 = vcmask 835328
    %47 = vst.msk [vmem:[#allocation0] sm:$0x1] %vm46, %v45
    %s48 = scalar_lea.vmem %s0, 15
    %v49 = vld [vmem:[%s48] sm:$0x1]
    %50 = vrot.lane.b32.xlu0 %v49, 90
    %v51 = vpop.permute.xlu0 %50
    %vm52 = vcmask 786128
    %53 = vst.msk [vmem:[#allocation0] sm:$0x1] %vm52, %v51
    %s54 = scalar_lea.vmem %s0, 14
    %v55 = vld [vmem:[%s54] sm:$0x1]
    %56 = vrot.lane.b32.xlu0 %v55, 84
    %v57 = vpop.permute.xlu0 %56
    %vm58 = vcmask 736928
    %59 = vst.msk [vmem:[#allocation0] sm:$0x1] %vm58, %v57
    %s60 = scalar_lea.vmem %s0, 13
    %v61 = vld [vmem:[%s60] sm:$0x1]
    %62 = vrot.lane.b32.xlu0 %v61, 78
    %v63 = vpop.permute.xlu0 %62
    %vm64 = vcmask 687728
    %65 = vst.msk [vmem:[#allocation0] sm:$0x1] %vm64, %v63
    %s66 = scalar_lea.vmem %s0, 12
    %v67 = vld [vmem:[%s66] sm:$0x1]
    %68 = vrot.lane.b32.xlu0 %v67, 72
    %v69 = vpop.permute.xlu0 %68
    %vm70 = vcmask 638528
    %71 = vst.msk [vmem:[#allocation0] sm:$0x1] %vm70, %v69
    %s72 = scalar_lea.vmem %s0, 11
    %v73 = vld [vmem:[%s72] sm:$0x1]
    %74 = vrot.lane.b32.xlu0 %v73, 66
    %v75 = vpop.permute.xlu0 %74
    %vm76 = vcmask 589328
    %77 = vst.msk [vmem:[#allocation0] sm:$0x1] %vm76, %v75
    %s78 = scalar_lea.vmem %s0, 10
    %v79 = vld [vmem:[%s78] sm:$0x1]
    %80 = vrot.lane.b32.xlu0 %v79, 60
    %v81 = vpop.permute.xlu0 %80
    %vm82 = vcmask 540128
    %83 = vst.msk [vmem:[#allocation0] sm:$0x1] %vm82, %v81
    %s84 = scalar_lea.vmem %s0, 9
    %v85 = vld [vmem:[%s84] sm:$0x1]
    %86 = vrot.lane.b32.xlu0 %v85, 54
    %v87 = vpop.permute.xlu0 %86
    %vm88 = vcmask 490928
    %89 = vst.msk [vmem:[#allocation0] sm:$0x1] %vm88, %v87
    %s90 = scalar_lea.vmem %s0, 8
    %v91 = vld [vmem:[%s90] sm:$0x1]
    %92 = vrot.lane.b32.xlu0 %v91, 48
    %v93 = vpop.permute.xlu0 %92
    %vm94 = vcmask 441728
    %95 = vst.msk [vmem:[#allocation0] sm:$0x1] %vm94, %v93
    %s96 = scalar_lea.vmem %s0, 7
    %v97 = vld [vmem:[%s96] sm:$0x1]
    %98 = vrot.lane.b32.xlu0 %v97, 42
    %v99 = vpop.permute.xlu0 %98
    %vm100 = vcmask 392528
    %101 = vst.msk [vmem:[#allocation0] sm:$0x1] %vm100, %v99
    %s102 = scalar_lea.vmem %s0, 6
    %v103 = vld [vmem:[%s102] sm:$0x1]
    %104 = vrot.lane.b32.xlu0 %v103, 36
    %v105 = vpop.permute.xlu0 %104
    %vm106 = vcmask 343328
    %107 = vst.msk [vmem:[#allocation0] sm:$0x1] %vm106, %v105
    %s108 = scalar_lea.vmem %s0, 5
    %v109 = vld [vmem:[%s108] sm:$0x1]
    %110 = vrot.lane.b32.xlu0 %v109, 30
    %v111 = vpop.permute.xlu0 %110
    %vm112 = vcmask 294128
    %113 = vst.msk [vmem:[#allocation0] sm:$0x1] %vm112, %v111
    %s114 = scalar_lea.vmem %s0, 4
    %v115 = vld [vmem:[%s114] sm:$0x1]
    %116 = vrot.lane.b32.xlu0 %v115, 24
    %v117 = vpop.permute.xlu0 %116
    %vm118 = vcmask 244928
    %119 = vst.msk [vmem:[#allocation0] sm:$0x1] %vm118, %v117
    %s120 = scalar_lea.vmem %s0, 3
    %v121 = vld [vmem:[%s120] sm:$0x1]
    %122 = vrot.lane.b32.xlu0 %v121, 18
    %v123 = vpop.permute.xlu0 %122
    %vm124 = vcmask 195728
    %125 = vst.msk [vmem:[#allocation0] sm:$0x1] %vm124, %v123
    %s126 = scalar_lea.vmem %s0, 2
    %v127 = vld [vmem:[%s126] sm:$0x1]
    %128 = vrot.lane.b32.xlu0 %v127, 12
    %v129 = vpop.permute.xlu0 %128
    %vm130 = vcmask 146528
    %131 = vst.msk [vmem:[#allocation0] sm:$0x1] %vm130, %v129
    %s132 = scalar_lea.vmem %s0, 23
    %v133 = vld [vmem:[%s132] sm:$0x1]
    %134 = vrot.lane.b32.xlu0 %v133, 10
    %v135 = vpop.permute.xlu0 %134
    %vm136 = vcmask 130128
    %s137 = scalar_lea.vmem [#allocation0], 8
    %138 = vst.msk [vmem:[%s137] sm:$0x1] %vm136, %v135
    %s139 = scalar_lea.vmem %s0, 1
    %v140 = vld [vmem:[%s139] sm:$0x1]
    %141 = vrot.lane.b32.xlu0 %v140, 6
    %v142 = vpop.permute.xlu0 %141
    %vm143 = vcmask 97328
    %144 = vst.msk [vmem:[#allocation0] sm:$0x1] %vm143, %v142
    %s145 = scalar_lea.vmem %s0, 22
    %v146 = vld [vmem:[%s145] sm:$0x1]
    %147 = vrot.lane.b32.xlu0 %v146, 4
    %v148 = vpop.permute.xlu0 %147
    %vm149 = vcmask 80928
    %s150 = scalar_lea.vmem [#allocation0], 8
    %151 = vst.msk [vmem:[%s150] sm:$0x1] %vm149, %v148
    %s153 = ssub.s32 2, 1
    %v154 = vld [vmem:[#allocation0] sm:%s153]
    %s156 = ssub.s32 2, 1
    %157 = vst [vmem:[%s1] sm:%s156] %v154
    %s158 = scalar_lea.vmem [#allocation0], 8
    %v159 = vld [vmem:[%s158] sm:%s153]
    %s161 = ssub.s32 2, 1
    %s162 = scalar_lea.vmem %s1, 1
    %163 = vst [vmem:[%s162] sm:%s161] %v159

// kernel: tile.18
$region0: #{tile.18}
  #allocation0 [shape = 's32[1]{0}', space=sflag, size = 0x4, scoped, tag = 'scoped memory for tile.18']
  %s0 = inlined_call_operand.vmem [shape: f32[16], index: 0, kind: input, shape index: {}]
  %s1 = inlined_call_operand.vmem [shape: f32[8,16], index: 1, kind: output, shape index: {}]
  // Predicated region
  $region2: #{tile.18} parent=0 // pred_check
    _
  $region3: #{tile.18} parent=0 // pred_check_branch
    %3 = sbr.rel (0) target = $region5
  $region4: #{tile.18} parent=0 // pred_region
    _
  $region5: #{tile.18} parent=0 // pred_fallthru
    _
  %v4 = vld [vmem:[%s0] ss:$0 sm:$0xff]
  %5 = vst [vmem:[%s1] sm:$0xff] %v4

// kernel: tile.19
$region0: #{tile.19}
  %s0 = inlined_call_operand.vmem [shape: f32[8,16], index: 0, kind: input, shape index: {}]
  %s1 = inlined_call_operand.vmem [shape: f32[1,128], index: 1, kind: output, shape index: {}]
  $region1: #{tile.19} parent=0
    #allocation0 [shape = 'u8[4096]{0}', space=vmem, size = 0x1000, scoped, tag = 'scoped mem for output reshape']
    %v2 = vld [vmem:[%s0] sm:$0x1]
    %vm3 = vcmask 130048
    %4 = vst.msk [vmem:[#allocation0] sm:$0x1] %vm3, %v2
    %s5 = scalar_lea.vmem %s0, 7
    %v6 = vld [vmem:[%s5] sm:$0x1]
    %7 = vrot.lane.b32.xlu0 %v6, 112
    %v8 = vpop.permute.xlu0 %7
    %vm9 = vcmask 1048448
    %10 = vst.msk [vmem:[#allocation0] sm:$0x1] %vm9, %v8
    %s11 = scalar_lea.vmem %s0, 6
    %v12 = vld [vmem:[%s11] sm:$0x1]
    %13 = vrot.lane.b32.xlu0 %v12, 96
    %v14 = vpop.permute.xlu0 %13
    %vm15 = vcmask 917248
    %16 = vst.msk [vmem:[#allocation0] sm:$0x1] %vm15, %v14
    %s17 = scalar_lea.vmem %s0, 5
    %v18 = vld [vmem:[%s17] sm:$0x1]
    %19 = vrot.lane.b32.xlu0 %v18, 80
    %v20 = vpop.permute.xlu0 %19
    %vm21 = vcmask 786048
    %22 = vst.msk [vmem:[#allocation0] sm:$0x1] %vm21, %v20
    %s23 = scalar_lea.vmem %s0, 4
    %v24 = vld [vmem:[%s23] sm:$0x1]
    %25 = vrot.lane.b32.xlu0 %v24, 64
    %v26 = vpop.permute.xlu0 %25
    %vm27 = vcmask 654848
    %28 = vst.msk [vmem:[#allocation0] sm:$0x1] %vm27, %v26
    %s29 = scalar_lea.vmem %s0, 3
    %v30 = vld [vmem:[%s29] sm:$0x1]
    %31 = vrot.lane.b32.xlu0 %v30, 48
    %v32 = vpop.permute.xlu0 %31
    %vm33 = vcmask 523648
    %34 = vst.msk [vmem:[#allocation0] sm:$0x1] %vm33, %v32
    %s35 = scalar_lea.vmem %s0, 2
    %v36 = vld [vmem:[%s35] sm:$0x1]
    %37 = vrot.lane.b32.xlu0 %v36, 32
    %v38 = vpop.permute.xlu0 %37
    %vm39 = vcmask 392448
    %40 = vst.msk [vmem:[#allocation0] sm:$0x1] %vm39, %v38
    %s41 = scalar_lea.vmem %s0, 1
    %v42 = vld [vmem:[%s41] sm:$0x1]
    %43 = vrot.lane.b32.xlu0 %v42, 16
    %v44 = vpop.permute.xlu0 %43
    %vm45 = vcmask 261248
    %46 = vst.msk [vmem:[#allocation0] sm:$0x1] %vm45, %v44
    %s48 = ssub.s32 2, 1
    %v49 = vld [vmem:[#allocation0] sm:%s48]
    %s51 = ssub.s32 2, 1
    %52 = vst [vmem:[%s1] sm:%s51] %v49

// kernel: net_forward.1
$region0: #{net_forward.1}
  #allocation0 [shape = 'u32[]', space=smem, size = 0x4, offset = 0x4, fixed_abs, tag = 'smem constant byte address 0x4 - core index']
  #allocation1 [shape = 'u32[72,128]{1,0:T(1,128)}', space=vmem, size = 0x9000, scoped, tag = 'internal scratch']
  #allocation2 [shape = 'f32[192,144]{1,0:T(8,128)}', space=vmem, size = 0x30000, scoped, tag = 'scratch operand']
  %s0 = inlined_call_operand.vmem [shape: f32[28,16,28], index: 0, kind: input, shape index: {}]
  %s1 = inlined_call_operand.vmem [shape: f32[5,28,144], index: 1, kind: input, shape index: {}]
  %s2 = inlined_call_operand.vmem [shape: f32[1,144], index: 2, kind: input, shape index: {}]
  %s3 = inlined_call_operand.vmem [shape: f32[144,72], index: 3, kind: input, shape index: {}]
  %s4 = inlined_call_operand.vmem [shape: f32[144,72], index: 4, kind: input, shape index: {}]
  %s5 = inlined_call_operand.vmem [shape: f32[5,72,128], index: 5, kind: input, shape index: {}]
  %s6 = inlined_call_operand.vmem [shape: f32[1,128], index: 6, kind: input, shape index: {}]
  %s7 = inlined_call_operand.vmem [shape: f32[128,64], index: 7, kind: input, shape index: {}]
  %s8 = inlined_call_operand.vmem [shape: f32[128,64], index: 8, kind: input, shape index: {}]
  %s9 = inlined_call_operand.vmem [shape: f32[4,64,32], index: 9, kind: input, shape index: {}]
  %s10 = inlined_call_operand.vmem [shape: f32[1,32], index: 10, kind: input, shape index: {}]
  %s11 = inlined_call_operand.vmem [shape: f32[32,64], index: 11, kind: input, shape index: {}]
  %s12 = inlined_call_operand.vmem [shape: f32[1,64], index: 12, kind: input, shape index: {}]
  %s13 = inlined_call_operand.vmem [shape: f32[64,32], index: 13, kind: input, shape index: {}]
  %s14 = inlined_call_operand.vmem [shape: f32[1,32], index: 14, kind: input, shape index: {}]
  %s15 = inlined_call_operand.vmem [shape: f32[32,10], index: 15, kind: input, shape index: {}]
  %s16 = inlined_call_operand.vmem [shape: f32[1,10], index: 16, kind: input, shape index: {}]
  %s17 = inlined_call_operand.hbm [shape: f32[16,10], index: 17, kind: output, shape index: {}]
  %s18 = sld [smem:[#allocation0]]
  $region139: #{net_forward.1} parent=0
    _
  %s20 = ssub.s32 1, %s18
  %s21 = scalar_select 0, %s20, %s18
  $region1: #{net_forward.1} parent=0
    #allocation3 [shape = 'u8[229376]{0}', space=vmem, size = 0x38000, scoped, tag = 'input window, operand 0']
    #allocation4 [shape = 'u8[8192]{0}', space=vmem, size = 0x2000, scoped, tag = 'output window, operand 0']
    #allocation5 [shape = 's32[2]{0}', space=sflag, size = 0x8, scoped, tag = 'scoped memory for net_forward.1']
    %22 = vsyncpa [#allocation5], 0
    %s23 = scalar_lea.sflag [#allocation5], 1
    %24 = vsyncpa %s23, 0
    loop: start=0, step=1, limit=4
    $region2: #{net_forward.1} parent=1 // loop_pre_header
      _
    $region3: #{net_forward.1} parent=1 // loop_header
      %s26 = sphi 0, %s30
      %p27 = scmp.ge.s32.totalorder %s26, 4
      %s36 = sphi 0, %s38
      %s39 = sphi 0, %s36
      %s40 = sphi 0, %s39
      %s56 = sphi 0, %s40
      %s60 = sphi 0, %s60
      %s62 = sphi 0, %s60
      %s63 = sphi 0, %s62
      %s77 = sphi 0, %s63
      %s81 = sphi 0, %s81
      %s83 = sphi 0, %s81
      %s84 = sphi 0, %s83
      %s98 = sphi 0, %s84
      %s102 = sphi 0, %s102
      %s104 = sphi 0, %s102
      %s105 = sphi 0, %s104
      %s119 = sphi 0, %s105
      %s123 = sphi 0, %s123
      %s125 = sphi 0, %s123
      %s126 = sphi 0, %s125
      %s140 = sphi 0, %s126
      %s144 = sphi 0, %s144
      %s146 = sphi 0, %s144
      %s147 = sphi 0, %s146
      %s161 = sphi 0, %s147
      %s165 = sphi 0, %s165
      %s167 = sphi 0, %s165
      %s168 = sphi 0, %s167
      %s182 = sphi 0, %s168
      %s186 = sphi 0, %s186
      %s188 = sphi 0, %s186
      %s189 = sphi 0, %s188
      %s203 = sphi 0, %s189
      %s207 = sphi 0, %s207
      %s209 = sphi 0, %s207
      %s210 = sphi 0, %s209
      %s224 = sphi 0, %s210
      %s228 = sphi 0, %s228
      %s230 = sphi 0, %s228
      %s231 = sphi 0, %s230
      %s245 = sphi 0, %s231
      %s249 = sphi 0, %s249
      %s251 = sphi 0, %s249
      %s252 = sphi 0, %s251
      %s266 = sphi 0, %s252
      %s270 = sphi 0, %s270
      %s272 = sphi 0, %s270
      %s273 = sphi 0, %s272
      %s287 = sphi 0, %s273
      %s291 = sphi 0, %s291
      %s293 = sphi 0, %s291
      %s294 = sphi 0, %s293
      %s308 = sphi 0, %s294
      %s312 = sphi 0, %s312
      %s314 = sphi 0, %s312
      %s315 = sphi 0, %s314
      %s329 = sphi 0, %s315
      %s333 = sphi 0, %s333
      %s335 = sphi 0, %s333
      %s336 = sphi 0, %s335
      %s350 = sphi 0, %s336
      %s354 = sphi 0, %s354
      %s356 = sphi 0, %s354
      %s357 = sphi 0, %s356
      %s371 = sphi 0, %s357
      %s375 = sphi 0, %s375
      %s377 = sphi 0, %s375
      %s378 = sphi 0, %s377
      %s392 = sphi 0, %s378
      %s398 = sphi 0, %s400
      %s401 = sphi 0, %s398
      %s402 = sphi 0, %s401
      %s418 = sphi 0, %s402
    $region4: #{net_forward.1} parent=1 // loop_header_branch
      %29 = sbr.rel (%p27) target = $region8
    $region5: #{net_forward.1} parent=1 // loop_body
      %s31 = ssub.s32 %s26, 1
      %s32 = ssub.s32 %s26, 2
      %s33 = sadd.s32 %s26, 1
      %s34 = ssub.s32 %s26, %s33
      %p35 = scmp.eq.s32.totalorder %s34, 0
      %s37 = sadd.s32 %s36, 1
      %s38 = scalar_select %p35, %s36, %s37
      %p41 = pneg %p35
      %p42 = scmp.eq.s32.totalorder %s26, 1
      %p43 = por %p41, %p42
      %p44 = scmp.ne.s32.totalorder %s36, %s39
      %p45 = scmp.eq.s32.totalorder %s26, 0
      %p46 = por %p44, %p45
      %p47 = scmp.ne.s32.totalorder %s36, %s39
      %p48 = scmp.eq.s32.totalorder %s31, 1
      %p49 = por %p47, %p48
      %p50 = scmp.ne.s32.totalorder %s39, %s40
      %p51 = scmp.eq.s32.totalorder %s31, 0
      %p52 = por %p50, %p51
      %p53 = scmp.ne.s32.totalorder %s39, %s40
      %p54 = scmp.eq.s32.totalorder %s32, 1
      %p55 = por %p53, %p54
      %p57 = scmp.ne.s32.totalorder %s40, %s56
      %p58 = scmp.eq.s32.totalorder %s32, 0
      %p59 = por %p57, %p58
      %s61 = sadd.s32 %s60, 1
      %p64 = scmp.eq.s32.totalorder %s26, 1
      %p65 = scmp.ne.s32.totalorder %s60, %s62
      %p66 = scmp.eq.s32.totalorder %s26, 0
      %p67 = por %p65, %p66
      %p68 = scmp.ne.s32.totalorder %s60, %s62
      %p69 = scmp.eq.s32.totalorder %s31, 1
      %p70 = por %p68, %p69
      %p71 = scmp.ne.s32.totalorder %s62, %s63
      %p72 = scmp.eq.s32.totalorder %s31, 0
      %p73 = por %p71, %p72
      %p74 = scmp.ne.s32.totalorder %s62, %s63
      %p75 = scmp.eq.s32.totalorder %s32, 1
      %p76 = por %p74, %p75
      %p78 = scmp.ne.s32.totalorder %s63, %s77
      %p79 = scmp.eq.s32.totalorder %s32, 0
      %p80 = por %p78, %p79
      %s82 = sadd.s32 %s81, 1
      %p85 = scmp.eq.s32.totalorder %s26, 1
      %p86 = scmp.ne.s32.totalorder %s81, %s83
      %p87 = scmp.eq.s32.totalorder %s26, 0
      %p88 = por %p86, %p87
      %p89 = scmp.ne.s32.totalorder %s81, %s83
      %p90 = scmp.eq.s32.totalorder %s31, 1
      %p91 = por %p89, %p90
      %p92 = scmp.ne.s32.totalorder %s83, %s84
      %p93 = scmp.eq.s32.totalorder %s31, 0
      %p94 = por %p92, %p93
      %p95 = scmp.ne.s32.totalorder %s83, %s84
      %p96 = scmp.eq.s32.totalorder %s32, 1
      %p97 = por %p95, %p96
      %p99 = scmp.ne.s32.totalorder %s84, %s98
      %p100 = scmp.eq.s32.totalorder %s32, 0
      %p101 = por %p99, %p100
      %s103 = sadd.s32 %s102, 1
      %p106 = scmp.eq.s32.totalorder %s26, 1
      %p107 = scmp.ne.s32.totalorder %s102, %s104
      %p108 = scmp.eq.s32.totalorder %s26, 0
      %p109 = por %p107, %p108
      %p110 = scmp.ne.s32.totalorder %s102, %s104
      %p111 = scmp.eq.s32.totalorder %s31, 1
      %p112 = por %p110, %p111
      %p113 = scmp.ne.s32.totalorder %s104, %s105
      %p114 = scmp.eq.s32.totalorder %s31, 0
      %p115 = por %p113, %p114
      %p116 = scmp.ne.s32.totalorder %s104, %s105
      %p117 = scmp.eq.s32.totalorder %s32, 1
      %p118 = por %p116, %p117
      %p120 = scmp.ne.s32.totalorder %s105, %s119
      %p121 = scmp.eq.s32.totalorder %s32, 0
      %p122 = por %p120, %p121
      %s124 = sadd.s32 %s123, 1
      %p127 = scmp.eq.s32.totalorder %s26, 1
      %p128 = scmp.ne.s32.totalorder %s123, %s125
      %p129 = scmp.eq.s32.totalorder %s26, 0
      %p130 = por %p128, %p129
      %p131 = scmp.ne.s32.totalorder %s123, %s125
      %p132 = scmp.eq.s32.totalorder %s31, 1
      %p133 = por %p131, %p132
      %p134 = scmp.ne.s32.totalorder %s125, %s126
      %p135 = scmp.eq.s32.totalorder %s31, 0
      %p136 = por %p134, %p135
      %p137 = scmp.ne.s32.totalorder %s125, %s126
      %p138 = scmp.eq.s32.totalorder %s32, 1
      %p139 = por %p137, %p138
      %p141 = scmp.ne.s32.totalorder %s126, %s140
      %p142 = scmp.eq.s32.totalorder %s32, 0
      %p143 = por %p141, %p142
      %s145 = sadd.s32 %s144, 1
      %p148 = scmp.eq.s32.totalorder %s26, 1
      %p149 = scmp.ne.s32.totalorder %s144, %s146
      %p150 = scmp.eq.s32.totalorder %s26, 0
      %p151 = por %p149, %p150
      %p152 = scmp.ne.s32.totalorder %s144, %s146
      %p153 = scmp.eq.s32.totalorder %s31, 1
      %p154 = por %p152, %p153
      %p155 = scmp.ne.s32.totalorder %s146, %s147
      %p156 = scmp.eq.s32.totalorder %s31, 0
      %p157 = por %p155, %p156
      %p158 = scmp.ne.s32.totalorder %s146, %s147
      %p159 = scmp.eq.s32.totalorder %s32, 1
      %p160 = por %p158, %p159
      %p162 = scmp.ne.s32.totalorder %s147, %s161
      %p163 = scmp.eq.s32.totalorder %s32, 0
      %p164 = por %p162, %p163
      %s166 = sadd.s32 %s165, 1
      %p169 = scmp.eq.s32.totalorder %s26, 1
      %p170 = scmp.ne.s32.totalorder %s165, %s167
      %p171 = scmp.eq.s32.totalorder %s26, 0
      %p172 = por %p170, %p171
      %p173 = scmp.ne.s32.totalorder %s165, %s167
      %p174 = scmp.eq.s32.totalorder %s31, 1
      %p175 = por %p173, %p174
      %p176 = scmp.ne.s32.totalorder %s167, %s168
      %p177 = scmp.eq.s32.totalorder %s31, 0
      %p178 = por %p176, %p177
      %p179 = scmp.ne.s32.totalorder %s167, %s168
      %p180 = scmp.eq.s32.totalorder %s32, 1
      %p181 = por %p179, %p180
      %p183 = scmp.ne.s32.totalorder %s168, %s182
      %p184 = scmp.eq.s32.totalorder %s32, 0
      %p185 = por %p183, %p184
      %s187 = sadd.s32 %s186, 1
      %p190 = scmp.eq.s32.totalorder %s26, 1
      %p191 = scmp.ne.s32.totalorder %s186, %s188
      %p192 = scmp.eq.s32.totalorder %s26, 0
      %p193 = por %p191, %p192
      %p194 = scmp.ne.s32.totalorder %s186, %s188
      %p195 = scmp.eq.s32.totalorder %s31, 1
      %p196 = por %p194, %p195
      %p197 = scmp.ne.s32.totalorder %s188, %s189
      %p198 = scmp.eq.s32.totalorder %s31, 0
      %p199 = por %p197, %p198
      %p200 = scmp.ne.s32.totalorder %s188, %s189
      %p201 = scmp.eq.s32.totalorder %s32, 1
      %p202 = por %p200, %p201
      %p204 = scmp.ne.s32.totalorder %s189, %s203
      %p205 = scmp.eq.s32.totalorder %s32, 0
      %p206 = por %p204, %p205
      %s208 = sadd.s32 %s207, 1
      %p211 = scmp.eq.s32.totalorder %s26, 1
      %p212 = scmp.ne.s32.totalorder %s207, %s209
      %p213 = scmp.eq.s32.totalorder %s26, 0
      %p214 = por %p212, %p213
      %p215 = scmp.ne.s32.totalorder %s207, %s209
      %p216 = scmp.eq.s32.totalorder %s31, 1
      %p217 = por %p215, %p216
      %p218 = scmp.ne.s32.totalorder %s209, %s210
      %p219 = scmp.eq.s32.totalorder %s31, 0
      %p220 = por %p218, %p219
      %p221 = scmp.ne.s32.totalorder %s209, %s210
      %p222 = scmp.eq.s32.totalorder %s32, 1
      %p223 = por %p221, %p222
      %p225 = scmp.ne.s32.totalorder %s210, %s224
      %p226 = scmp.eq.s32.totalorder %s32, 0
      %p227 = por %p225, %p226
      %s229 = sadd.s32 %s228, 1
      %p232 = scmp.eq.s32.totalorder %s26, 1
      %p233 = scmp.ne.s32.totalorder %s228, %s230
      %p234 = scmp.eq.s32.totalorder %s26, 0
      %p235 = por %p233, %p234
      %p236 = scmp.ne.s32.totalorder %s228, %s230
      %p237 = scmp.eq.s32.totalorder %s31, 1
      %p238 = por %p236, %p237
      %p239 = scmp.ne.s32.totalorder %s230, %s231
      %p240 = scmp.eq.s32.totalorder %s31, 0
      %p241 = por %p239, %p240
      %p242 = scmp.ne.s32.totalorder %s230, %s231
      %p243 = scmp.eq.s32.totalorder %s32, 1
      %p244 = por %p242, %p243
      %p246 = scmp.ne.s32.totalorder %s231, %s245
      %p247 = scmp.eq.s32.totalorder %s32, 0
      %p248 = por %p246, %p247
      %s250 = sadd.s32 %s249, 1
      %p253 = scmp.eq.s32.totalorder %s26, 1
      %p254 = scmp.ne.s32.totalorder %s249, %s251
      %p255 = scmp.eq.s32.totalorder %s26, 0
      %p256 = por %p254, %p255
      %p257 = scmp.ne.s32.totalorder %s249, %s251
      %p258 = scmp.eq.s32.totalorder %s31, 1
      %p259 = por %p257, %p258
      %p260 = scmp.ne.s32.totalorder %s251, %s252
      %p261 = scmp.eq.s32.totalorder %s31, 0
      %p262 = por %p260, %p261
      %p263 = scmp.ne.s32.totalorder %s251, %s252
      %p264 = scmp.eq.s32.totalorder %s32, 1
      %p265 = por %p263, %p264
      %p267 = scmp.ne.s32.totalorder %s252, %s266
      %p268 = scmp.eq.s32.totalorder %s32, 0
      %p269 = por %p267, %p268
      %s271 = sadd.s32 %s270, 1
      %p274 = scmp.eq.s32.totalorder %s26, 1
      %p275 = scmp.ne.s32.totalorder %s270, %s272
      %p276 = scmp.eq.s32.totalorder %s26, 0
      %p277 = por %p275, %p276
      %p278 = scmp.ne.s32.totalorder %s270, %s272
      %p279 = scmp.eq.s32.totalorder %s31, 1
      %p280 = por %p278, %p279
      %p281 = scmp.ne.s32.totalorder %s272, %s273
      %p282 = scmp.eq.s32.totalorder %s31, 0
      %p283 = por %p281, %p282
      %p284 = scmp.ne.s32.totalorder %s272, %s273
      %p285 = scmp.eq.s32.totalorder %s32, 1
      %p286 = por %p284, %p285
      %p288 = scmp.ne.s32.totalorder %s273, %s287
      %p289 = scmp.eq.s32.totalorder %s32, 0
      %p290 = por %p288, %p289
      %s292 = sadd.s32 %s291, 1
      %p295 = scmp.eq.s32.totalorder %s26, 1
      %p296 = scmp.ne.s32.totalorder %s291, %s293
      %p297 = scmp.eq.s32.totalorder %s26, 0
      %p298 = por %p296, %p297
      %p299 = scmp.ne.s32.totalorder %s291, %s293
      %p300 = scmp.eq.s32.totalorder %s31, 1
      %p301 = por %p299, %p300
      %p302 = scmp.ne.s32.totalorder %s293, %s294
      %p303 = scmp.eq.s32.totalorder %s31, 0
      %p304 = por %p302, %p303
      %p305 = scmp.ne.s32.totalorder %s293, %s294
      %p306 = scmp.eq.s32.totalorder %s32, 1
      %p307 = por %p305, %p306
      %p309 = scmp.ne.s32.totalorder %s294, %s308
      %p310 = scmp.eq.s32.totalorder %s32, 0
      %p311 = por %p309, %p310
      %s313 = sadd.s32 %s312, 1
      %p316 = scmp.eq.s32.totalorder %s26, 1
      %p317 = scmp.ne.s32.totalorder %s312, %s314
      %p318 = scmp.eq.s32.totalorder %s26, 0
      %p319 = por %p317, %p318
      %p320 = scmp.ne.s32.totalorder %s312, %s314
      %p321 = scmp.eq.s32.totalorder %s31, 1
      %p322 = por %p320, %p321
      %p323 = scmp.ne.s32.totalorder %s314, %s315
      %p324 = scmp.eq.s32.totalorder %s31, 0
      %p325 = por %p323, %p324
      %p326 = scmp.ne.s32.totalorder %s314, %s315
      %p327 = scmp.eq.s32.totalorder %s32, 1
      %p328 = por %p326, %p327
      %p330 = scmp.ne.s32.totalorder %s315, %s329
      %p331 = scmp.eq.s32.totalorder %s32, 0
      %p332 = por %p330, %p331
      %s334 = sadd.s32 %s333, 1
      %p337 = scmp.eq.s32.totalorder %s26, 1
      %p338 = scmp.ne.s32.totalorder %s333, %s335
      %p339 = scmp.eq.s32.totalorder %s26, 0
      %p340 = por %p338, %p339
      %p341 = scmp.ne.s32.totalorder %s333, %s335
      %p342 = scmp.eq.s32.totalorder %s31, 1
      %p343 = por %p341, %p342
      %p344 = scmp.ne.s32.totalorder %s335, %s336
      %p345 = scmp.eq.s32.totalorder %s31, 0
      %p346 = por %p344, %p345
      %p347 = scmp.ne.s32.totalorder %s335, %s336
      %p348 = scmp.eq.s32.totalorder %s32, 1
      %p349 = por %p347, %p348
      %p351 = scmp.ne.s32.totalorder %s336, %s350
      %p352 = scmp.eq.s32.totalorder %s32, 0
      %p353 = por %p351, %p352
      %s355 = sadd.s32 %s354, 1
      %p358 = scmp.eq.s32.totalorder %s26, 1
      %p359 = scmp.ne.s32.totalorder %s354, %s356
      %p360 = scmp.eq.s32.totalorder %s26, 0
      %p361 = por %p359, %p360
      %p362 = scmp.ne.s32.totalorder %s354, %s356
      %p363 = scmp.eq.s32.totalorder %s31, 1
      %p364 = por %p362, %p363
      %p365 = scmp.ne.s32.totalorder %s356, %s357
      %p366 = scmp.eq.s32.totalorder %s31, 0
      %p367 = por %p365, %p366
      %p368 = scmp.ne.s32.totalorder %s356, %s357
      %p369 = scmp.eq.s32.totalorder %s32, 1
      %p370 = por %p368, %p369
      %p372 = scmp.ne.s32.totalorder %s357, %s371
      %p373 = scmp.eq.s32.totalorder %s32, 0
      %p374 = por %p372, %p373
      %s376 = sadd.s32 %s375, 1
      %p379 = scmp.eq.s32.totalorder %s26, 1
      %p380 = scmp.ne.s32.totalorder %s375, %s377
      %p381 = scmp.eq.s32.totalorder %s26, 0
      %p382 = por %p380, %p381
      %p383 = scmp.ne.s32.totalorder %s375, %s377
      %p384 = scmp.eq.s32.totalorder %s31, 1
      %p385 = por %p383, %p384
      %p386 = scmp.ne.s32.totalorder %s377, %s378
      %p387 = scmp.eq.s32.totalorder %s31, 0
      %p388 = por %p386, %p387
      %p389 = scmp.ne.s32.totalorder %s377, %s378
      %p390 = scmp.eq.s32.totalorder %s32, 1
      %p391 = por %p389, %p390
      %p393 = scmp.ne.s32.totalorder %s378, %s392
      %p394 = scmp.eq.s32.totalorder %s32, 0
      %p395 = por %p393, %p394
      %s396 = ssub.s32 %s26, %s33
      %p397 = scmp.eq.s32.totalorder %s396, 0
      %s399 = sadd.s32 %s398, 1
      %s400 = scalar_select %p397, %s398, %s399
      %p403 = pneg %p397
      %p404 = scmp.eq.s32.totalorder %s26, 1
      %p405 = por %p403, %p404
      %p406 = scmp.ne.s32.totalorder %s398, %s401
      %p407 = scmp.eq.s32.totalorder %s26, 0
      %p408 = por %p406, %p407
      %p409 = scmp.ne.s32.totalorder %s398, %s401
      %p410 = scmp.eq.s32.totalorder %s31, 1
      %p411 = por %p409, %p410
      %p412 = scmp.ne.s32.totalorder %s401, %s402
      %p413 = scmp.eq.s32.totalorder %s31, 0
      %p414 = por %p412, %p413
      %p415 = scmp.ne.s32.totalorder %s401, %s402
      %p416 = scmp.eq.s32.totalorder %s32, 1
      %p417 = por %p415, %p416
      %p419 = scmp.ne.s32.totalorder %s402, %s418
      %p420 = scmp.eq.s32.totalorder %s32, 0
      %p421 = por %p419, %p420
      %p422 = scmp.le.s32.totalorder 1, %s26
      %p423 = scmp.lt.s32.totalorder %s26, 3
      %p424 = pnand %p422, %p423
      %p425 = pneg %p424
      // Predicated region
      $region9: #{net_forward.1} parent=5 // pred_check
        _
      $region10: #{net_forward.1} parent=5 // pred_check_branch
        %427 = sbr.rel (%p424) target = $region12
      $region11: #{net_forward.1} parent=5 // pred_region
        %s428 = ssub.s32 %s26, 1
        // Predicated region
        $region13: #{net_forward.1} parent=11 // pred_check
          %p429 = pneg %p73
        $region14: #{net_forward.1} parent=11 // pred_check_branch
          %431 = sbr.rel (%p429) target = $region16
        $region15: #{net_forward.1} parent=11 // pred_region
          _
        $region16: #{net_forward.1} parent=11 // pred_fallthru
          _
        // Predicated region
        $region17: #{net_forward.1} parent=11 // pred_check
          %p432 = pneg %p94
        $region18: #{net_forward.1} parent=11 // pred_check_branch
          %434 = sbr.rel (%p432) target = $region20
        $region19: #{net_forward.1} parent=11 // pred_region
          _
        $region20: #{net_forward.1} parent=11 // pred_fallthru
          _
        // Predicated region
        $region21: #{net_forward.1} parent=11 // pred_check
          %p435 = pneg %p115
        $region22: #{net_forward.1} parent=11 // pred_check_branch
          %437 = sbr.rel (%p435) target = $region24
        $region23: #{net_forward.1} parent=11 // pred_region
          _
        $region24: #{net_forward.1} parent=11 // pred_fallthru
          _
        // Predicated region
        $region25: #{net_forward.1} parent=11 // pred_check
          %p438 = pneg %p136
        $region26: #{net_forward.1} parent=11 // pred_check_branch
          %440 = sbr.rel (%p438) target = $region28
        $region27: #{net_forward.1} parent=11 // pred_region
          _
        $region28: #{net_forward.1} parent=11 // pred_fallthru
          _
        // Predicated region
        $region29: #{net_forward.1} parent=11 // pred_check
          %p441 = pneg %p157
        $region30: #{net_forward.1} parent=11 // pred_check_branch
          %443 = sbr.rel (%p441) target = $region32
        $region31: #{net_forward.1} parent=11 // pred_region
          _
        $region32: #{net_forward.1} parent=11 // pred_fallthru
          _
        // Predicated region
        $region33: #{net_forward.1} parent=11 // pred_check
          %p444 = pneg %p178
        $region34: #{net_forward.1} parent=11 // pred_check_branch
          %446 = sbr.rel (%p444) target = $region36
        $region35: #{net_forward.1} parent=11 // pred_region
          _
        $region36: #{net_forward.1} parent=11 // pred_fallthru
          _
        // Predicated region
        $region37: #{net_forward.1} parent=11 // pred_check
          %p447 = pneg %p199
        $region38: #{net_forward.1} parent=11 // pred_check_branch
          %449 = sbr.rel (%p447) target = $region40
        $region39: #{net_forward.1} parent=11 // pred_region
          _
        $region40: #{net_forward.1} parent=11 // pred_fallthru
          _
        // Predicated region
        $region41: #{net_forward.1} parent=11 // pred_check
          %p450 = pneg %p220
        $region42: #{net_forward.1} parent=11 // pred_check_branch
          %452 = sbr.rel (%p450) target = $region44
        $region43: #{net_forward.1} parent=11 // pred_region
          _
        $region44: #{net_forward.1} parent=11 // pred_fallthru
          _
        // Predicated region
        $region45: #{net_forward.1} parent=11 // pred_check
          %p453 = pneg %p241
        $region46: #{net_forward.1} parent=11 // pred_check_branch
          %455 = sbr.rel (%p453) target = $region48
        $region47: #{net_forward.1} parent=11 // pred_region
          _
        $region48: #{net_forward.1} parent=11 // pred_fallthru
          _
        // Predicated region
        $region49: #{net_forward.1} parent=11 // pred_check
          %p456 = pneg %p262
        $region50: #{net_forward.1} parent=11 // pred_check_branch
          %458 = sbr.rel (%p456) target = $region52
        $region51: #{net_forward.1} parent=11 // pred_region
          _
        $region52: #{net_forward.1} parent=11 // pred_fallthru
          _
        // Predicated region
        $region53: #{net_forward.1} parent=11 // pred_check
          %p459 = pneg %p283
        $region54: #{net_forward.1} parent=11 // pred_check_branch
          %461 = sbr.rel (%p459) target = $region56
        $region55: #{net_forward.1} parent=11 // pred_region
          _
        $region56: #{net_forward.1} parent=11 // pred_fallthru
          _
        // Predicated region
        $region57: #{net_forward.1} parent=11 // pred_check
          %p462 = pneg %p304
        $region58: #{net_forward.1} parent=11 // pred_check_branch
          %464 = sbr.rel (%p462) target = $region60
        $region59: #{net_forward.1} parent=11 // pred_region
          _
        $region60: #{net_forward.1} parent=11 // pred_fallthru
          _
        // Predicated region
        $region61: #{net_forward.1} parent=11 // pred_check
          %p465 = pneg %p325
        $region62: #{net_forward.1} parent=11 // pred_check_branch
          %467 = sbr.rel (%p465) target = $region64
        $region63: #{net_forward.1} parent=11 // pred_region
          _
        $region64: #{net_forward.1} parent=11 // pred_fallthru
          _
        // Predicated region
        $region65: #{net_forward.1} parent=11 // pred_check
          %p468 = pneg %p346
        $region66: #{net_forward.1} parent=11 // pred_check_branch
          %470 = sbr.rel (%p468) target = $region68
        $region67: #{net_forward.1} parent=11 // pred_region
          _
        $region68: #{net_forward.1} parent=11 // pred_fallthru
          _
        // Predicated region
        $region69: #{net_forward.1} parent=11 // pred_check
          %p471 = pneg %p367
        $region70: #{net_forward.1} parent=11 // pred_check_branch
          %473 = sbr.rel (%p471) target = $region72
        $region71: #{net_forward.1} parent=11 // pred_region
          _
        $region72: #{net_forward.1} parent=11 // pred_fallthru
          _
        // Predicated region
        $region73: #{net_forward.1} parent=11 // pred_check
          %p474 = pneg %p388
        $region74: #{net_forward.1} parent=11 // pred_check_branch
          %476 = sbr.rel (%p474) target = $region76
        $region75: #{net_forward.1} parent=11 // pred_region
          _
        $region76: #{net_forward.1} parent=11 // pred_fallthru
          _
      $region12: #{net_forward.1} parent=5 // pred_fallthru
        _
      %p477 = scmp.lt.s32.totalorder %s26, 2
      // Predicated region
      $region77: #{net_forward.1} parent=5 // pred_check
        %p478 = pneg %p477
      $region78: #{net_forward.1} parent=5 // pred_check_branch
        %480 = sbr.rel (%p478) target = $region80
      $region79: #{net_forward.1} parent=5 // pred_region
        // Predicated region
        $region81: #{net_forward.1} parent=79 // pred_check
          %p481 = pneg %p46
        $region82: #{net_forward.1} parent=79 // pred_check_branch
          %483 = sbr.rel (%p481) target = $region84
        $region83: #{net_forward.1} parent=79 // pred_region
          %s484 = sand.u32 %s36, 1
          %s485 = sand.u32 %s36, 1
          %s486 = smul.addr %s485, 224
          %s487 = scalar_lea.vmem [#allocation3], %s486
          %s488 = smul.addr %s26, 8
          %s489 = scalar_lea.vmem %s0, %s488
          // Predicated region
          $region85: #{net_forward.1} parent=83 // pred_check
            _
          $region86: #{net_forward.1} parent=83 // pred_check_branch
            %491 = sbr.rel (0) target = $region88
          $region87: #{net_forward.1} parent=83 // pred_region
            // Predicated region
            $region89: #{net_forward.1} parent=87 // pred_check
              _
            $region90: #{net_forward.1} parent=87 // pred_check_branch
              %493 = sbr.rel (0) target = $region92
            $region91: #{net_forward.1} parent=87 // pred_region
              // Predicated region
              $region104: #{net_forward.1} parent=91 // pred_check
                _
              $region105: #{net_forward.1} parent=91 // pred_check_branch
                %563 = sbr.rel (0) target = $region107
              $region106: #{net_forward.1} parent=91 // pred_region
                loop: start=0, step=1, limit=1
                $region108: #{net_forward.1} parent=106 // loop_pre_header
                  _
                $region109: #{net_forward.1} parent=106 // loop_header
                  %s565 = sphi 0, %s569
                  %p566 = scmp.ge.s32.totalorder %s565, 1
                  %s570 = sphi %s489, %s489
                  %s571 = sphi %s487, %s487
                $region110: #{net_forward.1} parent=106 // loop_header_branch
                  %568 = sbr.rel (%p566) target = $region114
                $region111: #{net_forward.1} parent=106 // loop_body
                  %v572 = vld [vmem:[%s570] sm:$0xff]
                  %573 = vst [vmem:[%s571] sm:$0xff] %v572
                  %v574 = vld [vmem:[%s570 + $0x10] sm:$0xff]
                  %575 = vst [vmem:[%s571 + $0x8] sm:$0xff] %v574
                  %v576 = vld [vmem:[%s570 + $0x20] sm:$0xff]
                  %577 = vst [vmem:[%s571 + $0x10] sm:$0xff] %v576
                  %v578 = vld [vmem:[%s570 + $0x30] sm:$0xff]
                  %579 = vst [vmem:[%s571 + $0x18] sm:$0xff] %v578
                  %v580 = vld [vmem:[%s570 + $0x40] sm:$0xff]
                  %581 = vst [vmem:[%s571 + $0x20] sm:$0xff] %v580
                  %v582 = vld [vmem:[%s570 + $0x50] sm:$0xff]
                  %583 = vst [vmem:[%s571 + $0x28] sm:$0xff] %v582
                  %v584 = vld [vmem:[%s570 + $0x60] sm:$0xff]
                  %585 = vst [vmem:[%s571 + $0x30] sm:$0xff] %v584
                  %v586 = vld [vmem:[%s570 + $0x70] sm:$0xff]
                  %587 = vst [vmem:[%s571 + $0x38] sm:$0xff] %v586
                  %v588 = vld [vmem:[%s570 + $0x80] sm:$0xff]
                  %589 = vst [vmem:[%s571 + $0x40] sm:$0xff] %v588
                  %v590 = vld [vmem:[%s570 + $0x90] sm:$0xff]
                  %591 = vst [vmem:[%s571 + $0x48] sm:$0xff] %v590
                  %v592 = vld [vmem:[%s570 + $0xa0] sm:$0xff]
                  %593 = vst [vmem:[%s571 + $0x50] sm:$0xff] %v592
                  %v594 = vld [vmem:[%s570 + $0xb0] sm:$0xff]
                  %595 = vst [vmem:[%s571 + $0x58] sm:$0xff] %v594
                  %v596 = vld [vmem:[%s570 + $0xc0] sm:$0xff]
                  %597 = vst [vmem:[%s571 + $0x60] sm:$0xff] %v596
                  %v598 = vld [vmem:[%s570 + $0xd0] sm:$0xff]
                  %599 = vst [vmem:[%s571 + $0x68] sm:$0xff] %v598
                  %v600 = vld [vmem:[%s570 + $0xe0] sm:$0xff]
                  %601 = vst [vmem:[%s571 + $0x70] sm:$0xff] %v600
                  %v602 = vld [vmem:[%s570 + $0xf0] sm:$0xff]
                  %603 = vst [vmem:[%s571 + $0x78] sm:$0xff] %v602
                  %v604 = vld [vmem:[%s570 + $0x100] sm:$0xff]
                  %605 = vst [vmem:[%s571 + $0x80] sm:$0xff] %v604
                  %v606 = vld [vmem:[%s570 + $0x110] sm:$0xff]
                  %607 = vst [vmem:[%s571 + $0x88] sm:$0xff] %v606
                  %v608 = vld [vmem:[%s570 + $0x120] sm:$0xff]
                  %609 = vst [vmem:[%s571 + $0x90] sm:$0xff] %v608
                  %v610 = vld [vmem:[%s570 + $0x130] sm:$0xff]
                  %611 = vst [vmem:[%s571 + $0x98] sm:$0xff] %v610
                  %v612 = vld [vmem:[%s570 + $0x140] sm:$0xff]
                  %613 = vst [vmem:[%s571 + $0xa0] sm:$0xff] %v612
                  %v614 = vld [vmem:[%s570 + $0x150] sm:$0xff]
                  %615 = vst [vmem:[%s571 + $0xa8] sm:$0xff] %v614
                  %v616 = vld [vmem:[%s570 + $0x160] sm:$0xff]
                  %617 = vst [vmem:[%s571 + $0xb0] sm:$0xff] %v616
                  %v618 = vld [vmem:[%s570 + $0x170] sm:$0xff]
                  %619 = vst [vmem:[%s571 + $0xb8] sm:$0xff] %v618
                  %v620 = vld [vmem:[%s570 + $0x180] sm:$0xff]
                  %621 = vst [vmem:[%s571 + $0xc0] sm:$0xff] %v620
                  %v622 = vld [vmem:[%s570 + $0x190] sm:$0xff]
                  %623 = vst [vmem:[%s571 + $0xc8] sm:$0xff] %v622
                  %v624 = vld [vmem:[%s570 + $0x1a0] sm:$0xff]
                  %625 = vst [vmem:[%s571 + $0xd0] sm:$0xff] %v624
                  %v626 = vld [vmem:[%s570 + $0x1b0] sm:$0xff]
                  %627 = vst [vmem:[%s571 + $0xd8] sm:$0xff] %v626
                $region112: #{net_forward.1} parent=106 // loop_footer
                  %s569 = sadd.s32 1, %s565
                $region113: #{net_forward.1} parent=106 // loop_footer_branch
                  %564 = sbr.rel target = $region109
                $region114: #{net_forward.1} parent=106 // loop_exit
                  _
              $region107: #{net_forward.1} parent=91 // pred_fallthru
                _
              // Predicated region
              $region115: #{net_forward.1} parent=91 // pred_check
                _
              $region116: #{net_forward.1} parent=91 // pred_check_branch
                %629 = sbr.rel target = $region118
              $region117: #{net_forward.1} parent=91 // pred_region
                _
              $region118: #{net_forward.1} parent=91 // pred_fallthru
                _
            $region92: #{net_forward.1} parent=87 // pred_fallthru
              _
            // Predicated region
            $region93: #{net_forward.1} parent=87 // pred_check
              _
            $region94: #{net_forward.1} parent=87 // pred_check_branch
              %495 = sbr.rel target = $region96
            $region95: #{net_forward.1} parent=87 // pred_region
              %s497 = ssub.s32 256, 1
              loop: start=0, step=1, limit=1
              $region97: #{net_forward.1} parent=95 // loop_pre_header
                _
              $region98: #{net_forward.1} parent=95 // loop_header
                %s499 = sphi 0, %s503
                %p500 = scmp.ge.s32.totalorder %s499, 1
                %s504 = sphi %s489, %s489
                %s505 = sphi %s487, %s487
              $region99: #{net_forward.1} parent=95 // loop_header_branch
                %502 = sbr.rel (%p500) target = $region103
              $region100: #{net_forward.1} parent=95 // loop_body
                %v506 = vld [vmem:[%s504] sm:%s497]
                %507 = vst [vmem:[%s505] sm:%s497] %v506
                %v508 = vld [vmem:[%s504 + $0x10] sm:%s497]
                %509 = vst [vmem:[%s505 + $0x8] sm:%s497] %v508
                %v510 = vld [vmem:[%s504 + $0x20] sm:%s497]
                %511 = vst [vmem:[%s505 + $0x10] sm:%s497] %v510
                %v512 = vld [vmem:[%s504 + $0x30] sm:%s497]
                %513 = vst [vmem:[%s505 + $0x18] sm:%s497] %v512
                %v514 = vld [vmem:[%s504 + $0x40] sm:%s497]
                %515 = vst [vmem:[%s505 + $0x20] sm:%s497] %v514
                %v516 = vld [vmem:[%s504 + $0x50] sm:%s497]
                %517 = vst [vmem:[%s505 + $0x28] sm:%s497] %v516
                %v518 = vld [vmem:[%s504 + $0x60] sm:%s497]
                %519 = vst [vmem:[%s505 + $0x30] sm:%s497] %v518
                %v520 = vld [vmem:[%s504 + $0x70] sm:%s497]
                %521 = vst [vmem:[%s505 + $0x38] sm:%s497] %v520
                %v522 = vld [vmem:[%s504 + $0x80] sm:%s497]
                %523 = vst [vmem:[%s505 + $0x40] sm:%s497] %v522
                %v524 = vld [vmem:[%s504 + $0x90] sm:%s497]
                %525 = vst [vmem:[%s505 + $0x48] sm:%s497] %v524
                %v526 = vld [vmem:[%s504 + $0xa0] sm:%s497]
                %527 = vst [vmem:[%s505 + $0x50] sm:%s497] %v526
                %v528 = vld [vmem:[%s504 + $0xb0] sm:%s497]
                %529 = vst [vmem:[%s505 + $0x58] sm:%s497] %v528
                %v530 = vld [vmem:[%s504 + $0xc0] sm:%s497]
                %531 = vst [vmem:[%s505 + $0x60] sm:%s497] %v530
                %v532 = vld [vmem:[%s504 + $0xd0] sm:%s497]
                %533 = vst [vmem:[%s505 + $0x68] sm:%s497] %v532
                %v534 = vld [vmem:[%s504 + $0xe0] sm:%s497]
                %535 = vst [vmem:[%s505 + $0x70] sm:%s497] %v534
                %v536 = vld [vmem:[%s504 + $0xf0] sm:%s497]
                %537 = vst [vmem:[%s505 + $0x78] sm:%s497] %v536
                %v538 = vld [vmem:[%s504 + $0x100] sm:%s497]
                %539 = vst [vmem:[%s505 + $0x80] sm:%s497] %v538
                %v540 = vld [vmem:[%s504 + $0x110] sm:%s497]
                %541 = vst [vmem:[%s505 + $0x88] sm:%s497] %v540
                %v542 = vld [vmem:[%s504 + $0x120] sm:%s497]
                %543 = vst [vmem:[%s505 + $0x90] sm:%s497] %v542
                %v544 = vld [vmem:[%s504 + $0x130] sm:%s497]
                %545 = vst [vmem:[%s505 + $0x98] sm:%s497] %v544
                %v546 = vld [vmem:[%s504 + $0x140] sm:%s497]
                %547 = vst [vmem:[%s505 + $0xa0] sm:%s497] %v546
                %v548 = vld [vmem:[%s504 + $0x150] sm:%s497]
                %549 = vst [vmem:[%s505 + $0xa8] sm:%s497] %v548
                %v550 = vld [vmem:[%s504 + $0x160] sm:%s497]
                %551 = vst [vmem:[%s505 + $0xb0] sm:%s497] %v550
                %v552 = vld [vmem:[%s504 + $0x170] sm:%s497]
                %553 = vst [vmem:[%s505 + $0xb8] sm:%s497] %v552
                %v554 = vld [vmem:[%s504 + $0x180] sm:%s497]
                %555 = vst [vmem:[%s505 + $0xc0] sm:%s497] %v554
                %v556 = vld [vmem:[%s504 + $0x190] sm:%s497]
                %557 = vst [vmem:[%s505 + $0xc8] sm:%s497] %v556
                %v558 = vld [vmem:[%s504 + $0x1a0] sm:%s497]
                %559 = vst [vmem:[%s505 + $0xd0] sm:%s497] %v558
                %v560 = vld [vmem:[%s504 + $0x1b0] sm:%s497]
                %561 = vst [vmem:[%s505 + $0xd8] sm:%s497] %v560
              $region101: #{net_forward.1} parent=95 // loop_footer
                %s503 = sadd.s32 1, %s499
              $region102: #{net_forward.1} parent=95 // loop_footer_branch
                %498 = sbr.rel target = $region98
              $region103: #{net_forward.1} parent=95 // loop_exit
                _
            $region96: #{net_forward.1} parent=87 // pred_fallthru
              _
          $region88: #{net_forward.1} parent=83 // pred_fallthru
            _
          %630 = vnop
        $region84: #{net_forward.1} parent=79 // pred_fallthru
          _
      $region80: #{net_forward.1} parent=5 // pred_fallthru
        _
      %p631 = scmp.le.s32.totalorder 1, %s26
      %p632 = scmp.lt.s32.totalorder %s26, 3
      %p633 = pnand %p631, %p632
      %p634 = pneg %p633
      // Predicated region
      $region119: #{net_forward.1} parent=5 // pred_check
        _
      $region120: #{net_forward.1} parent=5 // pred_check_branch
        %636 = sbr.rel (%p633) target = $region122
      $region121: #{net_forward.1} parent=5 // pred_region
        %s637 = ssub.s32 %s26, 1
        %s638 = sand.u32 %s39, 1
        %s639 = sand.u32 %s39, 1
        %s640 = smul.addr %s639, 224
        %s641 = scalar_lea.vmem [#allocation3], %s640
        // Predicated region
        $region123: #{net_forward.1} parent=121 // pred_check
          %p642 = pneg %p52
        $region124: #{net_forward.1} parent=121 // pred_check_branch
          %644 = sbr.rel (%p642) target = $region126
        $region125: #{net_forward.1} parent=121 // pred_region
          _
        $region126: #{net_forward.1} parent=121 // pred_fallthru
          _
        %s645 = sand.u32 %s39, 1
        %s646 = sand.u32 %s39, 1
        %s647 = smul.addr %s646, 224
        %s648 = scalar_lea.vmem [#allocation3], %s647
        %p649 = pneg %p52
        %p650 = pneg %p49
        %p651 = pneg %p73
        %p652 = pneg %p70
        %p653 = pneg %p94
        %p654 = pneg %p91
        %p655 = pneg %p115
        %p656 = pneg %p112
        %p657 = pneg %p136
        %p658 = pneg %p133
        %p659 = pneg %p157
        %p660 = pneg %p154
        %p661 = pneg %p178
        %p662 = pneg %p175
        %p663 = pneg %p199
        %p664 = pneg %p196
        %p665 = pneg %p220
        %p666 = pneg %p217
        %p667 = pneg %p241
        %p668 = pneg %p238
        %p669 = pneg %p262
        %p670 = pneg %p259
        %p671 = pneg %p283
        %p672 = pneg %p280
        %p673 = pneg %p304
        %p674 = pneg %p301
        %p675 = pneg %p325
        %p676 = pneg %p322
        %p677 = pneg %p346
        %p678 = pneg %p343
        %p679 = pneg %p367
        %p680 = pneg %p364
        %p681 = pneg %p388
        %p682 = pneg %p385
        %p683 = pneg %p414
        %p684 = pneg %p411
        %s685 = sand.u32 %s401, 1
        %s686 = scalar_lea.sflag [#allocation5], %s685
        %s687 = sand.u32 %s401, 1
        %s688 = smul.addr %s687, 8
        %s689 = scalar_lea.vmem [#allocation4], %s688
        %v690 = vld [vmem:[%s641] sm:$0xff]
        %v691 = vld [vmem:[%s641 + $0x8] sm:$0xff]
        %v692 = vld [vmem:[%s641 + $0x10] sm:$0xff]
        %v693 = vld [vmem:[%s641 + $0x18] sm:$0xff]
        %v694 = vld [vmem:[%s641 + $0x20] sm:$0xff]
        %v695 = vld [vmem:[%s641 + $0x28] sm:$0xff]
        %v696 = vld [vmem:[%s641 + $0x30] sm:$0xff]
        %v697 = vld [vmem:[%s641 + $0x38] sm:$0xff]
        %v698 = vld [vmem:[%s641 + $0x40] sm:$0xff]
        %v699 = vld [vmem:[%s641 + $0x48] sm:$0xff]
        %v700 = vld [vmem:[%s641 + $0x50] sm:$0xff]
        %v701 = vld [vmem:[%s641 + $0x58] sm:$0xff]
        %v702 = vld [vmem:[%s641 + $0x60] sm:$0xff]
        %v703 = vld [vmem:[%s641 + $0x68] sm:$0xff]
        %v704 = vld [vmem:[%s641 + $0x70] sm:$0xff]
        %v705 = vld [vmem:[%s641 + $0x78] sm:$0xff]
        %v706 = vld [vmem:[%s641 + $0x80] sm:$0xff]
        %v707 = vld [vmem:[%s641 + $0x88] sm:$0xff]
        %v708 = vld [vmem:[%s641 + $0x90] sm:$0xff]
        %v709 = vld [vmem:[%s641 + $0x98] sm:$0xff]
        %v710 = vld [vmem:[%s641 + $0xa0] sm:$0xff]
        %v711 = vld [vmem:[%s641 + $0xa8] sm:$0xff]
        %v712 = vld [vmem:[%s641 + $0xb0] sm:$0xff]
        %v713 = vld [vmem:[%s641 + $0xb8] sm:$0xff]
        %v714 = vld [vmem:[%s1] sm:$0xff]
        %v715 = vld [vmem:[%s1 + $0x8] sm:$0xff]
        %v716 = vld [vmem:[%s1 + $0x10] sm:$0xff]
        %v717 = vld [vmem:[%s1 + $0x18] sm:$0xff]
        %v718 = vld [vmem:[%s1 + $0x20] sm:$0xff]
        %v719 = vld [vmem:[%s1 + $0x28] sm:$0xff]
        %v720 = vld [vmem:[%s1 + $0x30] sm:$0xf]
        %v721 = vld [vmem:[%s1 + $0x38] sm:$0xf]
        %v722 = vld [vmem:[%s2] sm:$0x3]
        %v724 = vperm.slane %v722, 0
        %v725 = vperm.slane %v722, 1
        %vm728 = vcmask 228352
        %v730 = vsel %vm728, %v690, 0
        %v733 = vsel %vm728, %v691, 0
        %v736 = vsel %vm728, %v692, 0
        %v739 = vsel %vm728, %v693, 0
        %v742 = vsel %vm728, %v694, 0
        %v745 = vsel %vm728, %v695, 0
        %v748 = vsel %vm728, %v696, 0
        %v751 = vsel %vm728, %v697, 0
        %v754 = vsel %vm728, %v698, 0
        %v757 = vsel %vm728, %v699, 0
        %v760 = vsel %vm728, %v700, 0
        %v763 = vsel %vm728, %v701, 0
        %v766 = vsel %vm728, %v702, 0
        %v769 = vsel %vm728, %v703, 0
        %v772 = vsel %vm728, %v704, 0
        %v775 = vsel %vm728, %v705, 0
        %v778 = vsel %vm728, %v706, 0
        %v781 = vsel %vm728, %v707, 0
        %v784 = vsel %vm728, %v708, 0
        %v787 = vsel %vm728, %v709, 0
        %v790 = vsel %vm728, %v710, 0
        %v793 = vsel %vm728, %v711, 0
        %v796 = vsel %vm728, %v712, 0
        %v799 = vsel %vm728, %v713, 0
        %vm801 = vcmask 1043456
        %v803 = vsel %vm801, %v720, 0
        %v806 = vsel %vm801, %v721, 0
        %808 = vmatpush.msra.mxu0 0.0
        %809 = vmatpush.msra.mxu0 0.0
        %810 = vmatpush.msra.mxu0 0.0
        %811 = vmatpush.msra.mxu0 0.0
        %812 = vmatpush.msra.mxu0 0.0
        %813 = vmatpush.msra.mxu0 0.0
        %814 = vmatpush.msra.mxu0 0.0
        %815 = vmatpush.msra.mxu0 0.0
        %816 = vmatpush.msra.mxu0 0.0
        %817 = vmatpush.msra.mxu0 0.0
        %818 = vmatpush.msra.mxu0 0.0
        %819 = vmatpush.msra.mxu0 0.0
        %820 = vmatpush.msra.mxu0 %v803
        %821 = vmatpush.msra.mxu0 %v718
        %822 = vmatpush.msra.mxu0 %v716
        %823 = vmatpush.msra.mxu0 %v714
        %824 = vmatmul.f32.gmra.mxu0 %v730
        %v825 = vpop.f32.mrf.mxu0
        %v826 = vadd.f32 %v724, %v825
        %827 = vmatmul.f32.gmra.mxu0 %v733
        %v828 = vpop.f32.mrf.mxu0
        %v829 = vadd.f32 %v724, %v828
        %830 = vmatmul.f32.gmra.mxu0 %v736
        %v831 = vpop.f32.mrf.mxu0
        %v832 = vadd.f32 %v724, %v831
        %833 = vmatmul.f32.gmra.mxu0 %v739
        %v834 = vpop.f32.mrf.mxu0
        %v835 = vadd.f32 %v724, %v834
        %836 = vmatmul.f32.gmra.mxu0 %v742
        %v837 = vpop.f32.mrf.mxu0
        %v838 = vadd.f32 %v724, %v837
        %839 = vmatmul.f32.gmra.mxu0 %v745
        %v840 = vpop.f32.mrf.mxu0
        %v841 = vadd.f32 %v724, %v840
        %842 = vmatmul.f32.gmra.mxu0 %v748
        %v843 = vpop.f32.mrf.mxu0
        %v844 = vadd.f32 %v724, %v843
        %845 = vmatmul.f32.gmra.mxu0 %v751
        %v846 = vpop.f32.mrf.mxu0
        %v847 = vadd.f32 %v724, %v846
        %848 = vmatmul.f32.gmra.mxu0 %v754
        %v849 = vpop.f32.mrf.mxu0
        %v850 = vadd.f32 %v724, %v849
        %851 = vmatmul.f32.gmra.mxu0 %v757
        %v852 = vpop.f32.mrf.mxu0
        %v853 = vadd.f32 %v724, %v852
        %854 = vmatmul.f32.gmra.mxu0 %v760
        %v855 = vpop.f32.mrf.mxu0
        %v856 = vadd.f32 %v724, %v855
        %857 = vmatmul.f32.gmra.mxu0 %v763
        %v858 = vpop.f32.mrf.mxu0
        %v859 = vadd.f32 %v724, %v858
        %860 = vmatmul.f32.gmra.mxu0 %v766
        %v861 = vpop.f32.mrf.mxu0
        %v862 = vadd.f32 %v724, %v861
        %863 = vmatmul.f32.gmra.mxu0 %v769
        %v864 = vpop.f32.mrf.mxu0
        %v865 = vadd.f32 %v724, %v864
        %866 = vmatmul.f32.gmra.mxu0 %v772
        %v867 = vpop.f32.mrf.mxu0
        %v868 = vadd.f32 %v724, %v867
        %869 = vmatmul.f32.gmra.mxu0 %v775
        %v870 = vpop.f32.mrf.mxu0
        %v871 = vadd.f32 %v724, %v870
        %872 = vmatmul.f32.gmra.mxu0 %v778
        %v873 = vpop.f32.mrf.mxu0
        %v874 = vadd.f32 %v724, %v873
        %875 = vmatmul.f32.gmra.mxu0 %v781
        %v876 = vpop.f32.mrf.mxu0
        %v877 = vadd.f32 %v724, %v876
        %878 = vmatmul.f32.gmra.mxu0 %v784
        %v879 = vpop.f32.mrf.mxu0
        %v880 = vadd.f32 %v724, %v879
        %881 = vmatmul.f32.gmra.mxu0 %v787
        %v882 = vpop.f32.mrf.mxu0
        %v883 = vadd.f32 %v724, %v882
        %884 = vmatmul.f32.gmra.mxu0 %v790
        %v885 = vpop.f32.mrf.mxu0
        %v886 = vadd.f32 %v724, %v885
        %887 = vmatmul.f32.gmra.mxu0 %v793
        %v888 = vpop.f32.mrf.mxu0
        %v889 = vadd.f32 %v724, %v888
        %890 = vmatmul.f32.gmra.mxu0 %v796
        %v891 = vpop.f32.mrf.mxu0
        %v892 = vadd.f32 %v724, %v891
        %893 = vmatmul.f32.gmra.mxu0 %v799
        %v894 = vpop.f32.mrf.mxu0
        %v895 = vadd.f32 %v724, %v894
        %896 = vdwg.mxu0
        %897 = vmatpush.msra.mxu0 0.0
        %898 = vmatpush.msra.mxu0 0.0
        %899 = vmatpush.msra.mxu0 0.0
        %900 = vmatpush.msra.mxu0 0.0
        %901 = vmatpush.msra.mxu0 0.0
        %902 = vmatpush.msra.mxu0 0.0
        %903 = vmatpush.msra.mxu0 0.0
        %904 = vmatpush.msra.mxu0 0.0
        %905 = vmatpush.msra.mxu0 0.0
        %906 = vmatpush.msra.mxu0 0.0
        %907 = vmatpush.msra.mxu0 0.0
        %908 = vmatpush.msra.mxu0 0.0
        %909 = vmatpush.msra.mxu0 %v806
        %910 = vmatpush.msra.mxu0 %v719
        %911 = vmatpush.msra.mxu0 %v717
        %912 = vmatpush.msra.mxu0 %v715
        %913 = vmatmul.f32.gmra.mxu0 %v730
        %v914 = vpop.f32.mrf.mxu0
        %v915 = vadd.f32 %v725, %v914
        %916 = vmatmul.f32.gmra.mxu0 %v733
        %v917 = vpop.f32.mrf.mxu0
        %v918 = vadd.f32 %v725, %v917
        %919 = vmatmul.f32.gmra.mxu0 %v736
        %v920 = vpop.f32.mrf.mxu0
        %v921 = vadd.f32 %v725, %v920
        %922 = vmatmul.f32.gmra.mxu0 %v739
        %v923 = vpop.f32.mrf.mxu0
        %v924 = vadd.f32 %v725, %v923
        %925 = vmatmul.f32.gmra.mxu0 %v742
        %v926 = vpop.f32.mrf.mxu0
        %v927 = vadd.f32 %v725, %v926
        %928 = vmatmul.f32.gmra.mxu0 %v745
        %v929 = vpop.f32.mrf.mxu0
        %v930 = vadd.f32 %v725, %v929
        %931 = vmatmul.f32.gmra.mxu0 %v748
        %v932 = vpop.f32.mrf.mxu0
        %v933 = vadd.f32 %v725, %v932
        %934 = vmatmul.f32.gmra.mxu0 %v751
        %v935 = vpop.f32.mrf.mxu0
        %v936 = vadd.f32 %v725, %v935
        %937 = vmatmul.f32.gmra.mxu0 %v754
        %v938 = vpop.f32.mrf.mxu0
        %v939 = vadd.f32 %v725, %v938
        %940 = vmatmul.f32.gmra.mxu0 %v757
        %v941 = vpop.f32.mrf.mxu0
        %v942 = vadd.f32 %v725, %v941
        %943 = vmatmul.f32.gmra.mxu0 %v760
        %v944 = vpop.f32.mrf.mxu0
        %v945 = vadd.f32 %v725, %v944
        %946 = vmatmul.f32.gmra.mxu0 %v763
        %v947 = vpop.f32.mrf.mxu0
        %v948 = vadd.f32 %v725, %v947
        %949 = vmatmul.f32.gmra.mxu0 %v766
        %v950 = vpop.f32.mrf.mxu0
        %v951 = vadd.f32 %v725, %v950
        %952 = vmatmul.f32.gmra.mxu0 %v769
        %v953 = vpop.f32.mrf.mxu0
        %v954 = vadd.f32 %v725, %v953
        %955 = vmatmul.f32.gmra.mxu0 %v772
        %v956 = vpop.f32.mrf.mxu0
        %v957 = vadd.f32 %v725, %v956
        %958 = vmatmul.f32.gmra.mxu0 %v775
        %v959 = vpop.f32.mrf.mxu0
        %v960 = vadd.f32 %v725, %v959
        %961 = vmatmul.f32.gmra.mxu0 %v778
        %v962 = vpop.f32.mrf.mxu0
        %v963 = vadd.f32 %v725, %v962
        %964 = vmatmul.f32.gmra.mxu0 %v781
        %v965 = vpop.f32.mrf.mxu0
        %v966 = vadd.f32 %v725, %v965
        %967 = vmatmul.f32.gmra.mxu0 %v784
        %v968 = vpop.f32.mrf.mxu0
        %v969 = vadd.f32 %v725, %v968
        %970 = vmatmul.f32.gmra.mxu0 %v787
        %v971 = vpop.f32.mrf.mxu0
        %v972 = vadd.f32 %v725, %v971
        %973 = vmatmul.f32.gmra.mxu0 %v790
        %v974 = vpop.f32.mrf.mxu0
        %v975 = vadd.f32 %v725, %v974
        %976 = vmatmul.f32.gmra.mxu0 %v793
        %v977 = vpop.f32.mrf.mxu0
        %v978 = vadd.f32 %v725, %v977
        %979 = vmatmul.f32.gmra.mxu0 %v796
        %v980 = vpop.f32.mrf.mxu0
        %v981 = vadd.f32 %v725, %v980
        %982 = vmatmul.f32.gmra.mxu0 %v799
        %v983 = vpop.f32.mrf.mxu0
        %v984 = vadd.f32 %v725, %v983
        %985 = vdwg.mxu0
        %986 = vst [vmem:[#allocation2] sm:$0xff] %v826
        %vm987 = vcmask 130048
        %988 = vst.msk [vmem:[#allocation2 + $0x8] sm:$0xff] %vm987, %v915
        %989 = vst [vmem:[#allocation2 + $0x10] sm:$0xff] %v829
        %990 = vst.msk [vmem:[#allocation2 + $0x18] sm:$0xff] %vm987, %v918
        %991 = vst [vmem:[#allocation2 + $0x20] sm:$0xff] %v832
        %992 = vst.msk [vmem:[#allocation2 + $0x28] sm:$0xff] %vm987, %v921
        %993 = vst [vmem:[#allocation2 + $0x30] sm:$0xff] %v835
        %994 = vst.msk [vmem:[#allocation2 + $0x38] sm:$0xff] %vm987, %v924
        %995 = vst [vmem:[#allocation2 + $0x40] sm:$0xff] %v838
        %996 = vst.msk [vmem:[#allocation2 + $0x48] sm:$0xff] %vm987, %v927
        %997 = vst [vmem:[#allocation2 + $0x50] sm:$0xff] %v841
        %998 = vst.msk [vmem:[#allocation2 + $0x58] sm:$0xff] %vm987, %v930
        %999 = vst [vmem:[#allocation2 + $0x60] sm:$0xff] %v844
        %1000 = vst.msk [vmem:[#allocation2 + $0x68] sm:$0xff] %vm987, %v933
        %1001 = vst [vmem:[#allocation2 + $0x70] sm:$0xff] %v847
        %1002 = vst.msk [vmem:[#allocation2 + $0x78] sm:$0xff] %vm987, %v936
        %1003 = vst [vmem:[#allocation2 + $0x80] sm:$0xff] %v850
        %1004 = vst.msk [vmem:[#allocation2 + $0x88] sm:$0xff] %vm987, %v939
        %1005 = vst [vmem:[#allocation2 + $0x90] sm:$0xff] %v853
        %1006 = vst.msk [vmem:[#allocation2 + $0x98] sm:$0xff] %vm987, %v942
        %1007 = vst [vmem:[#allocation2 + $0xa0] sm:$0xff] %v856
        %1008 = vst.msk [vmem:[#allocation2 + $0xa8] sm:$0xff] %vm987, %v945
        %1009 = vst [vmem:[#allocation2 + $0xb0] sm:$0xff] %v859
        %1010 = vst.msk [vmem:[#allocation2 + $0xb8] sm:$0xff] %vm987, %v948
        %1011 = vst [vmem:[#allocation2 + $0xc0] sm:$0xff] %v862
        %1012 = vst.msk [vmem:[#allocation2 + $0xc8] sm:$0xff] %vm987, %v951
        %1013 = vst [vmem:[#allocation2 + $0xd0] sm:$0xff] %v865
        %1014 = vst.msk [vmem:[#allocation2 + $0xd8] sm:$0xff] %vm987, %v954
        %1015 = vst [vmem:[#allocation2 + $0xe0] sm:$0xff] %v868
        %1016 = vst.msk [vmem:[#allocation2 + $0xe8] sm:$0xff] %vm987, %v957
        %1017 = vst [vmem:[#allocation2 + $0xf0] sm:$0xff] %v871
        %1018 = vst.msk [vmem:[#allocation2 + $0xf8] sm:$0xff] %vm987, %v960
        %1019 = vst [vmem:[#allocation2 + $0x100] sm:$0xff] %v874
        %1020 = vst.msk [vmem:[#allocation2 + $0x108] sm:$0xff] %vm987, %v963
        %1021 = vst [vmem:[#allocation2 + $0x110] sm:$0xff] %v877
        %1022 = vst.msk [vmem:[#allocation2 + $0x118] sm:$0xff] %vm987, %v966
        %1023 = vst [vmem:[#allocation2 + $0x120] sm:$0xff] %v880
        %1024 = vst.msk [vmem:[#allocation2 + $0x128] sm:$0xff] %vm987, %v969
        %1025 = vst [vmem:[#allocation2 + $0x130] sm:$0xff] %v883
        %1026 = vst.msk [vmem:[#allocation2 + $0x138] sm:$0xff] %vm987, %v972
        %1027 = vst [vmem:[#allocation2 + $0x140] sm:$0xff] %v886
        %1028 = vst.msk [vmem:[#allocation2 + $0x148] sm:$0xff] %vm987, %v975
        %1029 = vst [vmem:[#allocation2 + $0x150] sm:$0xff] %v889
        %1030 = vst.msk [vmem:[#allocation2 + $0x158] sm:$0xff] %vm987, %v978
        %1031 = vst [vmem:[#allocation2 + $0x160] sm:$0xff] %v892
        %1032 = vst.msk [vmem:[#allocation2 + $0x168] sm:$0xff] %vm987, %v981
        %1033 = vst [vmem:[#allocation2 + $0x170] sm:$0xff] %v895
        %1034 = vst.msk [vmem:[#allocation2 + $0x178] sm:$0xff] %vm987, %v984
        %s1035 = scalar_lea.vmem %s641, 8 [#allocation3]
        %v1036 = vld [vmem:[%s1035] sm:$0xff]
        %v1037 = vld [vmem:[%s1035 + $0x8] sm:$0xff]
        %v1038 = vld [vmem:[%s1035 + $0x10] sm:$0xff]
        %v1039 = vld [vmem:[%s1035 + $0x18] sm:$0xff]
        %v1040 = vld [vmem:[%s1035 + $0x20] sm:$0xff]
        %v1041 = vld [vmem:[%s1035 + $0x28] sm:$0xff]
        %v1042 = vld [vmem:[%s1035 + $0x30] sm:$0xff]
        %v1043 = vld [vmem:[%s1035 + $0x38] sm:$0xff]
        %v1044 = vld [vmem:[%s1035 + $0x40] sm:$0xff]
        %v1045 = vld [vmem:[%s1035 + $0x48] sm:$0xff]
        %v1046 = vld [vmem:[%s1035 + $0x50] sm:$0xff]
        %v1047 = vld [vmem:[%s1035 + $0x58] sm:$0xff]
        %v1048 = vld [vmem:[%s1035 + $0x60] sm:$0xff]
        %v1049 = vld [vmem:[%s1035 + $0x68] sm:$0xff]
        %v1050 = vld [vmem:[%s1035 + $0x70] sm:$0xff]
        %v1051 = vld [vmem:[%s1035 + $0x78] sm:$0xff]
        %v1052 = vld [vmem:[%s1035 + $0x80] sm:$0xff]
        %v1053 = vld [vmem:[%s1035 + $0x88] sm:$0xff]
        %v1054 = vld [vmem:[%s1035 + $0x90] sm:$0xff]
        %v1055 = vld [vmem:[%s1035 + $0x98] sm:$0xff]
        %v1056 = vld [vmem:[%s1035 + $0xa0] sm:$0xff]
        %v1057 = vld [vmem:[%s1035 + $0xa8] sm:$0xff]
        %v1058 = vld [vmem:[%s1035 + $0xb0] sm:$0xff]
        %v1059 = vld [vmem:[%s1035 + $0xb8] sm:$0xff]
        %s1060 = scalar_lea.vmem %s1, 64
        %v1061 = vld [vmem:[%s1060] sm:$0xff]
        %v1062 = vld [vmem:[%s1060 + $0x8] sm:$0xff]
        %v1063 = vld [vmem:[%s1060 + $0x10] sm:$0xff]
        %v1064 = vld [vmem:[%s1060 + $0x18] sm:$0xff]
        %v1065 = vld [vmem:[%s1060 + $0x20] sm:$0xff]
        %v1066 = vld [vmem:[%s1060 + $0x28] sm:$0xff]
        %v1067 = vld [vmem:[%s1060 + $0x30] sm:$0xf]
        %v1068 = vld [vmem:[%s1060 + $0x38] sm:$0xf]
        %v1070 = vsel %vm728, %v1036, 0
        %v1073 = vsel %vm728, %v1037, 0
        %v1076 = vsel %vm728, %v1038, 0
        %v1079 = vsel %vm728, %v1039, 0
        %v1082 = vsel %vm728, %v1040, 0
        %v1085 = vsel %vm728, %v1041, 0
        %v1088 = vsel %vm728, %v1042, 0
        %v1091 = vsel %vm728, %v1043, 0
        %v1094 = vsel %vm728, %v1044, 0
        %v1097 = vsel %vm728, %v1045, 0
        %v1100 = vsel %vm728, %v1046, 0
        %v1103 = vsel %vm728, %v1047, 0
        %v1106 = vsel %vm728, %v1048, 0
        %v1109 = vsel %vm728, %v1049, 0
        %v1112 = vsel %vm728, %v1050, 0
        %v1115 = vsel %vm728, %v1051, 0
        %v1118 = vsel %vm728, %v1052, 0
        %v1121 = vsel %vm728, %v1053, 0
        %v1124 = vsel %vm728, %v1054, 0
        %v1127 = vsel %vm728, %v1055, 0
        %v1130 = vsel %vm728, %v1056, 0
        %v1133 = vsel %vm728, %v1057, 0
        %v1136 = vsel %vm728, %v1058, 0
        %v1139 = vsel %vm728, %v1059, 0
        %v1142 = vsel %vm801, %v1067, 0
        %v1145 = vsel %vm801, %v1068, 0
        %1147 = vmatpush.msra.mxu0 0.0
        %1148 = vmatpush.msra.mxu0 0.0
        %1149 = vmatpush.msra.mxu0 0.0
        %1150 = vmatpush.msra.mxu0 0.0
        %1151 = vmatpush.msra.mxu0 0.0
        %1152 = vmatpush.msra.mxu0 0.0
        %1153 = vmatpush.msra.mxu0 0.0
        %1154 = vmatpush.msra.mxu0 0.0
        %1155 = vmatpush.msra.mxu0 0.0
        %1156 = vmatpush.msra.mxu0 0.0
        %1157 = vmatpush.msra.mxu0 0.0
        %1158 = vmatpush.msra.mxu0 0.0
        %1159 = vmatpush.msra.mxu0 %v1142
        %1160 = vmatpush.msra.mxu0 %v1065
        %1161 = vmatpush.msra.mxu0 %v1063
        %1162 = vmatpush.msra.mxu0 %v1061
        %1163 = vmatmul.f32.gmra.mxu0 %v1070
        %v1164 = vpop.f32.mrf.mxu0
        %v1165 = vadd.f32 0.0, %v1164
        %1166 = vmatmul.f32.gmra.mxu0 %v1073
        %v1167 = vpop.f32.mrf.mxu0
        %v1168 = vadd.f32 0.0, %v1167
        %1169 = vmatmul.f32.gmra.mxu0 %v1076
        %v1170 = vpop.f32.mrf.mxu0
        %v1171 = vadd.f32 0.0, %v1170
        %1172 = vmatmul.f32.gmra.mxu0 %v1079
        %v1173 = vpop.f32.mrf.mxu0
        %v1174 = vadd.f32 0.0, %v1173
        %1175 = vmatmul.f32.gmra.mxu0 %v1082
        %v1176 = vpop.f32.mrf.mxu0
        %v1177 = vadd.f32 0.0, %v1176
        %1178 = vmatmul.f32.gmra.mxu0 %v1085
        %v1179 = vpop.f32.mrf.mxu0
        %v1180 = vadd.f32 0.0, %v1179
        %1181 = vmatmul.f32.gmra.mxu0 %v1088
        %v1182 = vpop.f32.mrf.mxu0
        %v1183 = vadd.f32 0.0, %v1182
        %1184 = vmatmul.f32.gmra.mxu0 %v1091
        %v1185 = vpop.f32.mrf.mxu0
        %v1186 = vadd.f32 0.0, %v1185
        %1187 = vmatmul.f32.gmra.mxu0 %v1094
        %v1188 = vpop.f32.mrf.mxu0
        %v1189 = vadd.f32 0.0, %v1188
        %1190 = vmatmul.f32.gmra.mxu0 %v1097
        %v1191 = vpop.f32.mrf.mxu0
        %v1192 = vadd.f32 0.0, %v1191
        %1193 = vmatmul.f32.gmra.mxu0 %v1100
        %v1194 = vpop.f32.mrf.mxu0
        %v1195 = vadd.f32 0.0, %v1194
        %1196 = vmatmul.f32.gmra.mxu0 %v1103
        %v1197 = vpop.f32.mrf.mxu0
        %v1198 = vadd.f32 0.0, %v1197
        %1199 = vmatmul.f32.gmra.mxu0 %v1106
        %v1200 = vpop.f32.mrf.mxu0
        %v1201 = vadd.f32 0.0, %v1200
        %1202 = vmatmul.f32.gmra.mxu0 %v1109
        %v1203 = vpop.f32.mrf.mxu0
        %v1204 = vadd.f32 0.0, %v1203
        %1205 = vmatmul.f32.gmra.mxu0 %v1112
        %v1206 = vpop.f32.mrf.mxu0
        %v1207 = vadd.f32 0.0, %v1206
        %1208 = vmatmul.f32.gmra.mxu0 %v1115
        %v1209 = vpop.f32.mrf.mxu0
        %v1210 = vadd.f32 0.0, %v1209
        %1211 = vmatmul.f32.gmra.mxu0 %v1118
        %v1212 = vpop.f32.mrf.mxu0
        %v1213 = vadd.f32 0.0, %v1212
        %1214 = vmatmul.f32.gmra.mxu0 %v1121
        %v1215 = vpop.f32.mrf.mxu0
        %v1216 = vadd.f32 0.0, %v1215
        %1217 = vmatmul.f32.gmra.mxu0 %v1124
        %v1218 = vpop.f32.mrf.mxu0
        %v1219 = vadd.f32 0.0, %v1218
        %1220 = vmatmul.f32.gmra.mxu0 %v1127
        %v1221 = vpop.f32.mrf.mxu0
        %v1222 = vadd.f32 0.0, %v1221
        %1223 = vmatmul.f32.gmra.mxu0 %v1130
        %v1224 = vpop.f32.mrf.mxu0
        %v1225 = vadd.f32 0.0, %v1224
        %1226 = vmatmul.f32.gmra.mxu0 %v1133
        %v1227 = vpop.f32.mrf.mxu0
        %v1228 = vadd.f32 0.0, %v1227
        %1229 = vmatmul.f32.gmra.mxu0 %v1136
        %v1230 = vpop.f32.mrf.mxu0
        %v1231 = vadd.f32 0.0, %v1230
        %1232 = vmatmul.f32.gmra.mxu0 %v1139
        %v1233 = vpop.f32.mrf.mxu0
        %v1234 = vadd.f32 0.0, %v1233
        %1235 = vdwg.mxu0
        %1236 = vmatpush.msra.mxu0 0.0
        %1237 = vmatpush.msra.mxu0 0.0
        %1238 = vmatpush.msra.mxu0 0.0
        %1239 = vmatpush.msra.mxu0 0.0
        %1240 = vmatpush.msra.mxu0 0.0
        %1241 = vmatpush.msra.mxu0 0.0
        %1242 = vmatpush.msra.mxu0 0.0
        %1243 = vmatpush.msra.mxu0 0.0
        %1244 = vmatpush.msra.mxu0 0.0
        %1245 = vmatpush.msra.mxu0 0.0
        %1246 = vmatpush.msra.mxu0 0.0
        %1247 = vmatpush.msra.mxu0 0.0
        %1248 = vmatpush.msra.mxu0 %v1145
        %1249 = vmatpush.msra.mxu0 %v1066
        %1250 = vmatpush.msra.mxu0 %v1064
        %1251 = vmatpush.msra.mxu0 %v1062
        %1252 = vmatmul.f32.gmra.mxu0 %v1070
        %v1253 = vpop.f32.mrf.mxu0
        %v1254 = vadd.f32 0.0, %v1253
        %1255 = vmatmul.f32.gmra.mxu0 %v1073
        %v1256 = vpop.f32.mrf.mxu0
        %v1257 = vadd.f32 0.0, %v1256
        %1258 = vmatmul.f32.gmra.mxu0 %v1076
        %v1259 = vpop.f32.mrf.mxu0
        %v1260 = vadd.f32 0.0, %v1259
        %1261 = vmatmul.f32.gmra.mxu0 %v1079
        %v1262 = vpop.f32.mrf.mxu0
        %v1263 = vadd.f32 0.0, %v1262
        %1264 = vmatmul.f32.gmra.mxu0 %v1082
        %v1265 = vpop.f32.mrf.mxu0
        %v1266 = vadd.f32 0.0, %v1265
        %1267 = vmatmul.f32.gmra.mxu0 %v1085
        %v1268 = vpop.f32.mrf.mxu0
        %v1269 = vadd.f32 0.0, %v1268
        %1270 = vmatmul.f32.gmra.mxu0 %v1088
        %v1271 = vpop.f32.mrf.mxu0
        %v1272 = vadd.f32 0.0, %v1271
        %1273 = vmatmul.f32.gmra.mxu0 %v1091
        %v1274 = vpop.f32.mrf.mxu0
        %v1275 = vadd.f32 0.0, %v1274
        %1276 = vmatmul.f32.gmra.mxu0 %v1094
        %v1277 = vpop.f32.mrf.mxu0
        %v1278 = vadd.f32 0.0, %v1277
        %1279 = vmatmul.f32.gmra.mxu0 %v1097
        %v1280 = vpop.f32.mrf.mxu0
        %v1281 = vadd.f32 0.0, %v1280
        %1282 = vmatmul.f32.gmra.mxu0 %v1100
        %v1283 = vpop.f32.mrf.mxu0
        %v1284 = vadd.f32 0.0, %v1283
        %1285 = vmatmul.f32.gmra.mxu0 %v1103
        %v1286 = vpop.f32.mrf.mxu0
        %v1287 = vadd.f32 0.0, %v1286
        %1288 = vmatmul.f32.gmra.mxu0 %v1106
        %v1289 = vpop.f32.mrf.mxu0
        %v1290 = vadd.f32 0.0, %v1289
        %1291 = vmatmul.f32.gmra.mxu0 %v1109
        %v1292 = vpop.f32.mrf.mxu0
        %v1293 = vadd.f32 0.0, %v1292
        %1294 = vmatmul.f32.gmra.mxu0 %v1112
        %v1295 = vpop.f32.mrf.mxu0
        %v1296 = vadd.f32 0.0, %v1295
        %1297 = vmatmul.f32.gmra.mxu0 %v1115
        %v1298 = vpop.f32.mrf.mxu0
        %v1299 = vadd.f32 0.0, %v1298
        %1300 = vmatmul.f32.gmra.mxu0 %v1118
        %v1301 = vpop.f32.mrf.mxu0
        %v1302 = vadd.f32 0.0, %v1301
        %1303 = vmatmul.f32.gmra.mxu0 %v1121
        %v1304 = vpop.f32.mrf.mxu0
        %v1305 = vadd.f32 0.0, %v1304
        %1306 = vmatmul.f32.gmra.mxu0 %v1124
        %v1307 = vpop.f32.mrf.mxu0
        %v1308 = vadd.f32 0.0, %v1307
        %1309 = vmatmul.f32.gmra.mxu0 %v1127
        %v1310 = vpop.f32.mrf.mxu0
        %v1311 = vadd.f32 0.0, %v1310
        %1312 = vmatmul.f32.gmra.mxu0 %v1130
        %v1313 = vpop.f32.mrf.mxu0
        %v1314 = vadd.f32 0.0, %v1313
        %1315 = vmatmul.f32.gmra.mxu0 %v1133
        %v1316 = vpop.f32.mrf.mxu0
        %v1317 = vadd.f32 0.0, %v1316
        %1318 = vmatmul.f32.gmra.mxu0 %v1136
        %v1319 = vpop.f32.mrf.mxu0
        %v1320 = vadd.f32 0.0, %v1319
        %1321 = vmatmul.f32.gmra.mxu0 %v1139
        %v1322 = vpop.f32.mrf.mxu0
        %v1323 = vadd.f32 0.0, %v1322
        %1324 = vdwg.mxu0
        %v1325 = vld [vmem:[#allocation2] sm:$0xff]
        %v1326 = vld [vmem:[#allocation2 + $0x8] sm:$0xff]
        %v1327 = vld [vmem:[#allocation2 + $0x10] sm:$0xff]
        %v1328 = vld [vmem:[#allocation2 + $0x18] sm:$0xff]
        %v1329 = vld [vmem:[#allocation2 + $0x20] sm:$0xff]
        %v1330 = vld [vmem:[#allocation2 + $0x28] sm:$0xff]
        %v1331 = vld [vmem:[#allocation2 + $0x30] sm:$0xff]
        %v1332 = vld [vmem:[#allocation2 + $0x38] sm:$0xff]
        %v1333 = vld [vmem:[#allocation2 + $0x40] sm:$0xff]
        %v1334 = vld [vmem:[#allocation2 + $0x48] sm:$0xff]
        %v1335 = vld [vmem:[#allocation2 + $0x50] sm:$0xff]
        %v1336 = vld [vmem:[#allocation2 + $0x58] sm:$0xff]
        %v1337 = vld [vmem:[#allocation2 + $0x60] sm:$0xff]
        %v1338 = vld [vmem:[#allocation2 + $0x68] sm:$0xff]
        %v1339 = vld [vmem:[#allocation2 + $0x70] sm:$0xff]
        %v1340 = vld [vmem:[#allocation2 + $0x78] sm:$0xff]
        %v1341 = vld [vmem:[#allocation2 + $0x80] sm:$0xff]
        %v1342 = vld [vmem:[#allocation2 + $0x88] sm:$0xff]
        %v1343 = vld [vmem:[#allocation2 + $0x90] sm:$0xff]
        %v1344 = vld [vmem:[#allocation2 + $0x98] sm:$0xff]
        %v1345 = vld [vmem:[#allocation2 + $0xa0] sm:$0xff]
        %v1346 = vld [vmem:[#allocation2 + $0xa8] sm:$0xff]
        %v1347 = vld [vmem:[#allocation2 + $0xb0] sm:$0xff]
        %v1348 = vld [vmem:[#allocation2 + $0xb8] sm:$0xff]
        %v1349 = vld [vmem:[#allocation2 + $0xc0] sm:$0xff]
        %v1350 = vld [vmem:[#allocation2 + $0xc8] sm:$0xff]
        %v1351 = vld [vmem:[#allocation2 + $0xd0] sm:$0xff]
        %v1352 = vld [vmem:[#allocation2 + $0xd8] sm:$0xff]
        %v1353 = vld [vmem:[#allocation2 + $0xe0] sm:$0xff]
        %v1354 = vld [vmem:[#allocation2 + $0xe8] sm:$0xff]
        %v1355 = vld [vmem:[#allocation2 + $0xf0] sm:$0xff]
        %v1356 = vld [vmem:[#allocation2 + $0xf8] sm:$0xff]
        %v1357 = vld [vmem:[#allocation2 + $0x100] sm:$0xff]
        %v1358 = vld [vmem:[#allocation2 + $0x108] sm:$0xff]
        %v1359 = vld [vmem:[#allocation2 + $0x110] sm:$0xff]
        %v1360 = vld [vmem:[#allocation2 + $0x118] sm:$0xff]
        %v1361 = vld [vmem:[#allocation2 + $0x120] sm:$0xff]
        %v1362 = vld [vmem:[#allocation2 + $0x128] sm:$0xff]
        %v1363 = vld [vmem:[#allocation2 + $0x130] sm:$0xff]
        %v1364 = vld [vmem:[#allocation2 + $0x138] sm:$0xff]
        %v1365 = vld [vmem:[#allocation2 + $0x140] sm:$0xff]
        %v1366 = vld [vmem:[#allocation2 + $0x148] sm:$0xff]
        %v1367 = vld [vmem:[#allocation2 + $0x150] sm:$0xff]
        %v1368 = vld [vmem:[#allocation2 + $0x158] sm:$0xff]
        %v1369 = vld [vmem:[#allocation2 + $0x160] sm:$0xff]
        %v1370 = vld [vmem:[#allocation2 + $0x168] sm:$0xff]
        %v1371 = vld [vmem:[#allocation2 + $0x170] sm:$0xff]
        %v1372 = vld [vmem:[#allocation2 + $0x178] sm:$0xff]
        %v1373 = vadd.f32 %v1325, %v1165
        %v1374 = vadd.f32 %v1326, %v1254
        %v1375 = vadd.f32 %v1327, %v1168
        %v1376 = vadd.f32 %v1328, %v1257
        %v1377 = vadd.f32 %v1329, %v1171
        %v1378 = vadd.f32 %v1330, %v1260
        %v1379 = vadd.f32 %v1331, %v1174
        %v1380 = vadd.f32 %v1332, %v1263
        %v1381 = vadd.f32 %v1333, %v1177
        %v1382 = vadd.f32 %v1334, %v1266
        %v1383 = vadd.f32 %v1335, %v1180
        %v1384 = vadd.f32 %v1336, %v1269
        %v1385 = vadd.f32 %v1337, %v1183
        %v1386 = vadd.f32 %v1338, %v1272
        %v1387 = vadd.f32 %v1339, %v1186
        %v1388 = vadd.f32 %v1340, %v1275
        %v1389 = vadd.f32 %v1341, %v1189
        %v1390 = vadd.f32 %v1342, %v1278
        %v1391 = vadd.f32 %v1343, %v1192
        %v1392 = vadd.f32 %v1344, %v1281
        %v1393 = vadd.f32 %v1345, %v1195
        %v1394 = vadd.f32 %v1346, %v1284
        %v1395 = vadd.f32 %v1347, %v1198
        %v1396 = vadd.f32 %v1348, %v1287
        %v1397 = vadd.f32 %v1349, %v1201
        %v1398 = vadd.f32 %v1350, %v1290
        %v1399 = vadd.f32 %v1351, %v1204
        %v1400 = vadd.f32 %v1352, %v1293
        %v1401 = vadd.f32 %v1353, %v1207
        %v1402 = vadd.f32 %v1354, %v1296
        %v1403 = vadd.f32 %v1355, %v1210
        %v1404 = vadd.f32 %v1356, %v1299
        %v1405 = vadd.f32 %v1357, %v1213
        %v1406 = vadd.f32 %v1358, %v1302
        %v1407 = vadd.f32 %v1359, %v1216
        %v1408 = vadd.f32 %v1360, %v1305
        %v1409 = vadd.f32 %v1361, %v1219
        %v1410 = vadd.f32 %v1362, %v1308
        %v1411 = vadd.f32 %v1363, %v1222
        %v1412 = vadd.f32 %v1364, %v1311
        %v1413 = vadd.f32 %v1365, %v1225
        %v1414 = vadd.f32 %v1366, %v1314
        %v1415 = vadd.f32 %v1367, %v1228
        %v1416 = vadd.f32 %v1368, %v1317
        %v1417 = vadd.f32 %v1369, %v1231
        %v1418 = vadd.f32 %v1370, %v1320
        %v1419 = vadd.f32 %v1371, %v1234
        %v1420 = vadd.f32 %v1372, %v1323
        %1421 = vst [vmem:[#allocation2] sm:$0xff] %v1373
        %1422 = vst.msk [vmem:[#allocation2 + $0x8] sm:$0xff] %vm987, %v1374
        %1423 = vst [vmem:[#allocation2 + $0x10] sm:$0xff] %v1375
        %1424 = vst.msk [vmem:[#allocation2 + $0x18] sm:$0xff] %vm987, %v1376
        %1425 = vst [vmem:[#allocation2 + $0x20] sm:$0xff] %v1377
        %1426 = vst.msk [vmem:[#allocation2 + $0x28] sm:$0xff] %vm987, %v1378
        %1427 = vst [vmem:[#allocation2 + $0x30] sm:$0xff] %v1379
        %1428 = vst.msk [vmem:[#allocation2 + $0x38] sm:$0xff] %vm987, %v1380
        %1429 = vst [vmem:[#allocation2 + $0x40] sm:$0xff] %v1381
        %1430 = vst.msk [vmem:[#allocation2 + $0x48] sm:$0xff] %vm987, %v1382
        %1431 = vst [vmem:[#allocation2 + $0x50] sm:$0xff] %v1383
        %1432 = vst.msk [vmem:[#allocation2 + $0x58] sm:$0xff] %vm987, %v1384
        %1433 = vst [vmem:[#allocation2 + $0x60] sm:$0xff] %v1385
        %1434 = vst.msk [vmem:[#allocation2 + $0x68] sm:$0xff] %vm987, %v1386
        %1435 = vst [vmem:[#allocation2 + $0x70] sm:$0xff] %v1387
        %1436 = vst.msk [vmem:[#allocation2 + $0x78] sm:$0xff] %vm987, %v1388
        %1437 = vst [vmem:[#allocation2 + $0x80] sm:$0xff] %v1389
        %1438 = vst.msk [vmem:[#allocation2 + $0x88] sm:$0xff] %vm987, %v1390
        %1439 = vst [vmem:[#allocation2 + $0x90] sm:$0xff] %v1391
        %1440 = vst.msk [vmem:[#allocation2 + $0x98] sm:$0xff] %vm987, %v1392
        %1441 = vst [vmem:[#allocation2 + $0xa0] sm:$0xff] %v1393
        %1442 = vst.msk [vmem:[#allocation2 + $0xa8] sm:$0xff] %vm987, %v1394
        %1443 = vst [vmem:[#allocation2 + $0xb0] sm:$0xff] %v1395
        %1444 = vst.msk [vmem:[#allocation2 + $0xb8] sm:$0xff] %vm987, %v1396
        %1445 = vst [vmem:[#allocation2 + $0xc0] sm:$0xff] %v1397
        %1446 = vst.msk [vmem:[#allocation2 + $0xc8] sm:$0xff] %vm987, %v1398
        %1447 = vst [vmem:[#allocation2 + $0xd0] sm:$0xff] %v1399
        %1448 = vst.msk [vmem:[#allocation2 + $0xd8] sm:$0xff] %vm987, %v1400
        %1449 = vst [vmem:[#allocation2 + $0xe0] sm:$0xff] %v1401
        %1450 = vst.msk [vmem:[#allocation2 + $0xe8] sm:$0xff] %vm987, %v1402
        %1451 = vst [vmem:[#allocation2 + $0xf0] sm:$0xff] %v1403
        %1452 = vst.msk [vmem:[#allocation2 + $0xf8] sm:$0xff] %vm987, %v1404
        %1453 = vst [vmem:[#allocation2 + $0x100] sm:$0xff] %v1405
        %1454 = vst.msk [vmem:[#allocation2 + $0x108] sm:$0xff] %vm987, %v1406
        %1455 = vst [vmem:[#allocation2 + $0x110] sm:$0xff] %v1407
        %1456 = vst.msk [vmem:[#allocation2 + $0x118] sm:$0xff] %vm987, %v1408
        %1457 = vst [vmem:[#allocation2 + $0x120] sm:$0xff] %v1409
        %1458 = vst.msk [vmem:[#allocation2 + $0x128] sm:$0xff] %vm987, %v1410
        %1459 = vst [vmem:[#allocation2 + $0x130] sm:$0xff] %v1411
        %1460 = vst.msk [vmem:[#allocation2 + $0x138] sm:$0xff] %vm987, %v1412
        %1461 = vst [vmem:[#allocation2 + $0x140] sm:$0xff] %v1413
        %1462 = vst.msk [vmem:[#allocation2 + $0x148] sm:$0xff] %vm987, %v1414
        %1463 = vst [vmem:[#allocation2 + $0x150] sm:$0xff] %v1415
        %1464 = vst.msk [vmem:[#allocation2 + $0x158] sm:$0xff] %vm987, %v1416
        %1465 = vst [vmem:[#allocation2 + $0x160] sm:$0xff] %v1417
        %1466 = vst.msk [vmem:[#allocation2 + $0x168] sm:$0xff] %vm987, %v1418
        %1467 = vst [vmem:[#allocation2 + $0x170] sm:$0xff] %v1419
        %1468 = vst.msk [vmem:[#allocation2 + $0x178] sm:$0xff] %vm987, %v1420
        %s1469 = scalar_lea.vmem %s641, 16 [#allocation3]
        %v1470 = vld [vmem:[%s1469] sm:$0xff]
        %v1471 = vld [vmem:[%s1469 + $0x8] sm:$0xff]
        %v1472 = vld [vmem:[%s1469 + $0x10] sm:$0xff]
        %v1473 = vld [vmem:[%s1469 + $0x18] sm:$0xff]
        %v1474 = vld [vmem:[%s1469 + $0x20] sm:$0xff]
        %v1475 = vld [vmem:[%s1469 + $0x28] sm:$0xff]
        %v1476 = vld [vmem:[%s1469 + $0x30] sm:$0xff]
        %v1477 = vld [vmem:[%s1469 + $0x38] sm:$0xff]
        %v1478 = vld [vmem:[%s1469 + $0x40] sm:$0xff]
        %v1479 = vld [vmem:[%s1469 + $0x48] sm:$0xff]
        %v1480 = vld [vmem:[%s1469 + $0x50] sm:$0xff]
        %v1481 = vld [vmem:[%s1469 + $0x58] sm:$0xff]
        %v1482 = vld [vmem:[%s1469 + $0x60] sm:$0xff]
        %v1483 = vld [vmem:[%s1469 + $0x68] sm:$0xff]
        %v1484 = vld [vmem:[%s1469 + $0x70] sm:$0xff]
        %v1485 = vld [vmem:[%s1469 + $0x78] sm:$0xff]
        %v1486 = vld [vmem:[%s1469 + $0x80] sm:$0xff]
        %v1487 = vld [vmem:[%s1469 + $0x88] sm:$0xff]
        %v1488 = vld [vmem:[%s1469 + $0x90] sm:$0xff]
        %v1489 = vld [vmem:[%s1469 + $0x98] sm:$0xff]
        %v1490 = vld [vmem:[%s1469 + $0xa0] sm:$0xff]
        %v1491 = vld [vmem:[%s1469 + $0xa8] sm:$0xff]
        %v1492 = vld [vmem:[%s1469 + $0xb0] sm:$0xff]
        %v1493 = vld [vmem:[%s1469 + $0xb8] sm:$0xff]
        %s1494 = scalar_lea.vmem %s1, 128
        %v1495 = vld [vmem:[%s1494] sm:$0xff]
        %v1496 = vld [vmem:[%s1494 + $0x8] sm:$0xff]
        %v1497 = vld [vmem:[%s1494 + $0x10] sm:$0xff]
        %v1498 = vld [vmem:[%s1494 + $0x18] sm:$0xff]
        %v1499 = vld [vmem:[%s1494 + $0x20] sm:$0xff]
        %v1500 = vld [vmem:[%s1494 + $0x28] sm:$0xff]
        %v1501 = vld [vmem:[%s1494 + $0x30] sm:$0xf]
        %v1502 = vld [vmem:[%s1494 + $0x38] sm:$0xf]
        %v1504 = vsel %vm728, %v1470, 0
        %v1507 = vsel %vm728, %v1471, 0
        %v1510 = vsel %vm728, %v1472, 0
        %v1513 = vsel %vm728, %v1473, 0
        %v1516 = vsel %vm728, %v1474, 0
        %v1519 = vsel %vm728, %v1475, 0
        %v1522 = vsel %vm728, %v1476, 0
        %v1525 = vsel %vm728, %v1477, 0
        %v1528 = vsel %vm728, %v1478, 0
        %v1531 = vsel %vm728, %v1479, 0
        %v1534 = vsel %vm728, %v1480, 0
        %v1537 = vsel %vm728, %v1481, 0
        %v1540 = vsel %vm728, %v1482, 0
        %v1543 = vsel %vm728, %v1483, 0
        %v1546 = vsel %vm728, %v1484, 0
        %v1549 = vsel %vm728, %v1485, 0
        %v1552 = vsel %vm728, %v1486, 0
        %v1555 = vsel %vm728, %v1487, 0
        %v1558 = vsel %vm728, %v1488, 0
        %v1561 = vsel %vm728, %v1489, 0
        %v1564 = vsel %vm728, %v1490, 0
        %v1567 = vsel %vm728, %v1491, 0
        %v1570 = vsel %vm728, %v1492, 0
        %v1573 = vsel %vm728, %v1493, 0
        %v1576 = vsel %vm801, %v1501, 0
        %v1579 = vsel %vm801, %v1502, 0
        %1581 = vmatpush.msra.mxu0 0.0
        %1582 = vmatpush.msra.mxu0 0.0
        %1583 = vmatpush.msra.mxu0 0.0
        %1584 = vmatpush.msra.mxu0 0.0
        %1585 = vmatpush.msra.mxu0 0.0
        %1586 = vmatpush.msra.mxu0 0.0
        %1587 = vmatpush.msra.mxu0 0.0
        %1588 = vmatpush.msra.mxu0 0.0
        %1589 = vmatpush.msra.mxu0 0.0
        %1590 = vmatpush.msra.mxu0 0.0
        %1591 = vmatpush.msra.mxu0 0.0
        %1592 = vmatpush.msra.mxu0 0.0
        %1593 = vmatpush.msra.mxu0 %v1576
        %1594 = vmatpush.msra.mxu0 %v1499
        %1595 = vmatpush.msra.mxu0 %v1497
        %1596 = vmatpush.msra.mxu0 %v1495
        %1597 = vmatmul.f32.gmra.mxu0 %v1504
        %v1598 = vpop.f32.mrf.mxu0
        %v1599 = vadd.f32 0.0, %v1598
        %1600 = vmatmul.f32.gmra.mxu0 %v1507
        %v1601 = vpop.f32.mrf.mxu0
        %v1602 = vadd.f32 0.0, %v1601
        %1603 = vmatmul.f32.gmra.mxu0 %v1510
        %v1604 = vpop.f32.mrf.mxu0
        %v1605 = vadd.f32 0.0, %v1604
        %1606 = vmatmul.f32.gmra.mxu0 %v1513
        %v1607 = vpop.f32.mrf.mxu0
        %v1608 = vadd.f32 0.0, %v1607
        %1609 = vmatmul.f32.gmra.mxu0 %v1516
        %v1610 = vpop.f32.mrf.mxu0
        %v1611 = vadd.f32 0.0, %v1610
        %1612 = vmatmul.f32.gmra.mxu0 %v1519
        %v1613 = vpop.f32.mrf.mxu0
        %v1614 = vadd.f32 0.0, %v1613
        %1615 = vmatmul.f32.gmra.mxu0 %v1522
        %v1616 = vpop.f32.mrf.mxu0
        %v1617 = vadd.f32 0.0, %v1616
        %1618 = vmatmul.f32.gmra.mxu0 %v1525
        %v1619 = vpop.f32.mrf.mxu0
        %v1620 = vadd.f32 0.0, %v1619
        %1621 = vmatmul.f32.gmra.mxu0 %v1528
        %v1622 = vpop.f32.mrf.mxu0
        %v1623 = vadd.f32 0.0, %v1622
        %1624 = vmatmul.f32.gmra.mxu0 %v1531
        %v1625 = vpop.f32.mrf.mxu0
        %v1626 = vadd.f32 0.0, %v1625
        %1627 = vmatmul.f32.gmra.mxu0 %v1534
        %v1628 = vpop.f32.mrf.mxu0
        %v1629 = vadd.f32 0.0, %v1628
        %1630 = vmatmul.f32.gmra.mxu0 %v1537
        %v1631 = vpop.f32.mrf.mxu0
        %v1632 = vadd.f32 0.0, %v1631
        %1633 = vmatmul.f32.gmra.mxu0 %v1540
        %v1634 = vpop.f32.mrf.mxu0
        %v1635 = vadd.f32 0.0, %v1634
        %1636 = vmatmul.f32.gmra.mxu0 %v1543
        %v1637 = vpop.f32.mrf.mxu0
        %v1638 = vadd.f32 0.0, %v1637
        %1639 = vmatmul.f32.gmra.mxu0 %v1546
        %v1640 = vpop.f32.mrf.mxu0
        %v1641 = vadd.f32 0.0, %v1640
        %1642 = vmatmul.f32.gmra.mxu0 %v1549
        %v1643 = vpop.f32.mrf.mxu0
        %v1644 = vadd.f32 0.0, %v1643
        %1645 = vmatmul.f32.gmra.mxu0 %v1552
        %v1646 = vpop.f32.mrf.mxu0
        %v1647 = vadd.f32 0.0, %v1646
        %1648 = vmatmul.f32.gmra.mxu0 %v1555
        %v1649 = vpop.f32.mrf.mxu0
        %v1650 = vadd.f32 0.0, %v1649
        %1651 = vmatmul.f32.gmra.mxu0 %v1558
        %v1652 = vpop.f32.mrf.mxu0
        %v1653 = vadd.f32 0.0, %v1652
        %1654 = vmatmul.f32.gmra.mxu0 %v1561
        %v1655 = vpop.f32.mrf.mxu0
        %v1656 = vadd.f32 0.0, %v1655
        %1657 = vmatmul.f32.gmra.mxu0 %v1564
        %v1658 = vpop.f32.mrf.mxu0
        %v1659 = vadd.f32 0.0, %v1658
        %1660 = vmatmul.f32.gmra.mxu0 %v1567
        %v1661 = vpop.f32.mrf.mxu0
        %v1662 = vadd.f32 0.0, %v1661
        %1663 = vmatmul.f32.gmra.mxu0 %v1570
        %v1664 = vpop.f32.mrf.mxu0
        %v1665 = vadd.f32 0.0, %v1664
        %1666 = vmatmul.f32.gmra.mxu0 %v1573
        %v1667 = vpop.f32.mrf.mxu0
        %v1668 = vadd.f32 0.0, %v1667
        %1669 = vdwg.mxu0
        %1670 = vmatpush.msra.mxu0 0.0
        %1671 = vmatpush.msra.mxu0 0.0
        %1672 = vmatpush.msra.mxu0 0.0
        %1673 = vmatpush.msra.mxu0 0.0
        %1674 = vmatpush.msra.mxu0 0.0
        %1675 = vmatpush.msra.mxu0 0.0
        %1676 = vmatpush.msra.mxu0 0.0
        %1677 = vmatpush.msra.mxu0 0.0
        %1678 = vmatpush.msra.mxu0 0.0
        %1679 = vmatpush.msra.mxu0 0.0
        %1680 = vmatpush.msra.mxu0 0.0
        %1681 = vmatpush.msra.mxu0 0.0
        %1682 = vmatpush.msra.mxu0 %v1579
        %1683 = vmatpush.msra.mxu0 %v1500
        %1684 = vmatpush.msra.mxu0 %v1498
        %1685 = vmatpush.msra.mxu0 %v1496
        %1686 = vmatmul.f32.gmra.mxu0 %v1504
        %v1687 = vpop.f32.mrf.mxu0
        %v1688 = vadd.f32 0.0, %v1687
        %1689 = vmatmul.f32.gmra.mxu0 %v1507
        %v1690 = vpop.f32.mrf.mxu0
        %v1691 = vadd.f32 0.0, %v1690
        %1692 = vmatmul.f32.gmra.mxu0 %v1510
        %v1693 = vpop.f32.mrf.mxu0
        %v1694 = vadd.f32 0.0, %v1693
        %1695 = vmatmul.f32.gmra.mxu0 %v1513
        %v1696 = vpop.f32.mrf.mxu0
        %v1697 = vadd.f32 0.0, %v1696
        %1698 = vmatmul.f32.gmra.mxu0 %v1516
        %v1699 = vpop.f32.mrf.mxu0
        %v1700 = vadd.f32 0.0, %v1699
        %1701 = vmatmul.f32.gmra.mxu0 %v1519
        %v1702 = vpop.f32.mrf.mxu0
        %v1703 = vadd.f32 0.0, %v1702
        %1704 = vmatmul.f32.gmra.mxu0 %v1522
        %v1705 = vpop.f32.mrf.mxu0
        %v1706 = vadd.f32 0.0, %v1705
        %1707 = vmatmul.f32.gmra.mxu0 %v1525
        %v1708 = vpop.f32.mrf.mxu0
        %v1709 = vadd.f32 0.0, %v1708
        %1710 = vmatmul.f32.gmra.mxu0 %v1528
        %v1711 = vpop.f32.mrf.mxu0
        %v1712 = vadd.f32 0.0, %v1711
        %1713 = vmatmul.f32.gmra.mxu0 %v1531
        %v1714 = vpop.f32.mrf.mxu0
        %v1715 = vadd.f32 0.0, %v1714
        %1716 = vmatmul.f32.gmra.mxu0 %v1534
        %v1717 = vpop.f32.mrf.mxu0
        %v1718 = vadd.f32 0.0, %v1717
        %1719 = vmatmul.f32.gmra.mxu0 %v1537
        %v1720 = vpop.f32.mrf.mxu0
        %v1721 = vadd.f32 0.0, %v1720
        %1722 = vmatmul.f32.gmra.mxu0 %v1540
        %v1723 = vpop.f32.mrf.mxu0
        %v1724 = vadd.f32 0.0, %v1723
        %1725 = vmatmul.f32.gmra.mxu0 %v1543
        %v1726 = vpop.f32.mrf.mxu0
        %v1727 = vadd.f32 0.0, %v1726
        %1728 = vmatmul.f32.gmra.mxu0 %v1546
        %v1729 = vpop.f32.mrf.mxu0
        %v1730 = vadd.f32 0.0, %v1729
        %1731 = vmatmul.f32.gmra.mxu0 %v1549
        %v1732 = vpop.f32.mrf.mxu0
        %v1733 = vadd.f32 0.0, %v1732
        %1734 = vmatmul.f32.gmra.mxu0 %v1552
        %v1735 = vpop.f32.mrf.mxu0
        %v1736 = vadd.f32 0.0, %v1735
        %1737 = vmatmul.f32.gmra.mxu0 %v1555
        %v1738 = vpop.f32.mrf.mxu0
        %v1739 = vadd.f32 0.0, %v1738
        %1740 = vmatmul.f32.gmra.mxu0 %v1558
        %v1741 = vpop.f32.mrf.mxu0
        %v1742 = vadd.f32 0.0, %v1741
        %1743 = vmatmul.f32.gmra.mxu0 %v1561
        %v1744 = vpop.f32.mrf.mxu0
        %v1745 = vadd.f32 0.0, %v1744
        %1746 = vmatmul.f32.gmra.mxu0 %v1564
        %v1747 = vpop.f32.mrf.mxu0
        %v1748 = vadd.f32 0.0, %v1747
        %1749 = vmatmul.f32.gmra.mxu0 %v1567
        %v1750 = vpop.f32.mrf.mxu0
        %v1751 = vadd.f32 0.0, %v1750
        %1752 = vmatmul.f32.gmra.mxu0 %v1570
        %v1753 = vpop.f32.mrf.mxu0
        %v1754 = vadd.f32 0.0, %v1753
        %1755 = vmatmul.f32.gmra.mxu0 %v1573
        %v1756 = vpop.f32.mrf.mxu0
        %v1757 = vadd.f32 0.0, %v1756
        %1758 = vdwg.mxu0
        %v1759 = vld [vmem:[#allocation2] sm:$0xff]
        %v1760 = vld [vmem:[#allocation2 + $0x8] sm:$0xff]
        %v1761 = vld [vmem:[#allocation2 + $0x10] sm:$0xff]
        %v1762 = vld [vmem:[#allocation2 + $0x18] sm:$0xff]
        %v1763 = vld [vmem:[#allocation2 + $0x20] sm:$0xff]
        %v1764 = vld [vmem:[#allocation2 + $0x28] sm:$0xff]
        %v1765 = vld [vmem:[#allocation2 + $0x30] sm:$0xff]
        %v1766 = vld [vmem:[#allocation2 + $0x38] sm:$0xff]
        %v1767 = vld [vmem:[#allocation2 + $0x40] sm:$0xff]
        %v1768 = vld [vmem:[#allocation2 + $0x48] sm:$0xff]
        %v1769 = vld [vmem:[#allocation2 + $0x50] sm:$0xff]
        %v1770 = vld [vmem:[#allocation2 + $0x58] sm:$0xff]
        %v1771 = vld [vmem:[#allocation2 + $0x60] sm:$0xff]
        %v1772 = vld [vmem:[#allocation2 + $0x68] sm:$0xff]
        %v1773 = vld [vmem:[#allocation2 + $0x70] sm:$0xff]
        %v1774 = vld [vmem:[#allocation2 + $0x78] sm:$0xff]
        %v1775 = vld [vmem:[#allocation2 + $0x80] sm:$0xff]
        %v1776 = vld [vmem:[#allocation2 + $0x88] sm:$0xff]
        %v1777 = vld [vmem:[#allocation2 + $0x90] sm:$0xff]
        %v1778 = vld [vmem:[#allocation2 + $0x98] sm:$0xff]
        %v1779 = vld [vmem:[#allocation2 + $0xa0] sm:$0xff]
        %v1780 = vld [vmem:[#allocation2 + $0xa8] sm:$0xff]
        %v1781 = vld [vmem:[#allocation2 + $0xb0] sm:$0xff]
        %v1782 = vld [vmem:[#allocation2 + $0xb8] sm:$0xff]
        %v1783 = vld [vmem:[#allocation2 + $0xc0] sm:$0xff]
        %v1784 = vld [vmem:[#allocation2 + $0xc8] sm:$0xff]
        %v1785 = vld [vmem:[#allocation2 + $0xd0] sm:$0xff]
        %v1786 = vld [vmem:[#allocation2 + $0xd8] sm:$0xff]
        %v1787 = vld [vmem:[#allocation2 + $0xe0] sm:$0xff]
        %v1788 = vld [vmem:[#allocation2 + $0xe8] sm:$0xff]
        %v1789 = vld [vmem:[#allocation2 + $0xf0] sm:$0xff]
        %v1790 = vld [vmem:[#allocation2 + $0xf8] sm:$0xff]
        %v1791 = vld [vmem:[#allocation2 + $0x100] sm:$0xff]
        %v1792 = vld [vmem:[#allocation2 + $0x108] sm:$0xff]
        %v1793 = vld [vmem:[#allocation2 + $0x110] sm:$0xff]
        %v1794 = vld [vmem:[#allocation2 + $0x118] sm:$0xff]
        %v1795 = vld [vmem:[#allocation2 + $0x120] sm:$0xff]
        %v1796 = vld [vmem:[#allocation2 + $0x128] sm:$0xff]
        %v1797 = vld [vmem:[#allocation2 + $0x130] sm:$0xff]
        %v1798 = vld [vmem:[#allocation2 + $0x138] sm:$0xff]
        %v1799 = vld [vmem:[#allocation2 + $0x140] sm:$0xff]
        %v1800 = vld [vmem:[#allocation2 + $0x148] sm:$0xff]
        %v1801 = vld [vmem:[#allocation2 + $0x150] sm:$0xff]
        %v1802 = vld [vmem:[#allocation2 + $0x158] sm:$0xff]
        %v1803 = vld [vmem:[#allocation2 + $0x160] sm:$0xff]
        %v1804 = vld [vmem:[#allocation2 + $0x168] sm:$0xff]
        %v1805 = vld [vmem:[#allocation2 + $0x170] sm:$0xff]
        %v1806 = vld [vmem:[#allocation2 + $0x178] sm:$0xff]
        %v1807 = vadd.f32 %v1759, %v1599
        %v1808 = vadd.f32 %v1760, %v1688
        %v1809 = vadd.f32 %v1761, %v1602
        %v1810 = vadd.f32 %v1762, %v1691
        %v1811 = vadd.f32 %v1763, %v1605
        %v1812 = vadd.f32 %v1764, %v1694
        %v1813 = vadd.f32 %v1765, %v1608
        %v1814 = vadd.f32 %v1766, %v1697
        %v1815 = vadd.f32 %v1767, %v1611
        %v1816 = vadd.f32 %v1768, %v1700
        %v1817 = vadd.f32 %v1769, %v1614
        %v1818 = vadd.f32 %v1770, %v1703
        %v1819 = vadd.f32 %v1771, %v1617
        %v1820 = vadd.f32 %v1772, %v1706
        %v1821 = vadd.f32 %v1773, %v1620
        %v1822 = vadd.f32 %v1774, %v1709
        %v1823 = vadd.f32 %v1775, %v1623
        %v1824 = vadd.f32 %v1776, %v1712
        %v1825 = vadd.f32 %v1777, %v1626
        %v1826 = vadd.f32 %v1778, %v1715
        %v1827 = vadd.f32 %v1779, %v1629
        %v1828 = vadd.f32 %v1780, %v1718
        %v1829 = vadd.f32 %v1781, %v1632
        %v1830 = vadd.f32 %v1782, %v1721
        %v1831 = vadd.f32 %v1783, %v1635
        %v1832 = vadd.f32 %v1784, %v1724
        %v1833 = vadd.f32 %v1785, %v1638
        %v1834 = vadd.f32 %v1786, %v1727
        %v1835 = vadd.f32 %v1787, %v1641
        %v1836 = vadd.f32 %v1788, %v1730
        %v1837 = vadd.f32 %v1789, %v1644
        %v1838 = vadd.f32 %v1790, %v1733
        %v1839 = vadd.f32 %v1791, %v1647
        %v1840 = vadd.f32 %v1792, %v1736
        %v1841 = vadd.f32 %v1793, %v1650
        %v1842 = vadd.f32 %v1794, %v1739
        %v1843 = vadd.f32 %v1795, %v1653
        %v1844 = vadd.f32 %v1796, %v1742
        %v1845 = vadd.f32 %v1797, %v1656
        %v1846 = vadd.f32 %v1798, %v1745
        %v1847 = vadd.f32 %v1799, %v1659
        %v1848 = vadd.f32 %v1800, %v1748
        %v1849 = vadd.f32 %v1801, %v1662
        %v1850 = vadd.f32 %v1802, %v1751
        %v1851 = vadd.f32 %v1803, %v1665
        %v1852 = vadd.f32 %v1804, %v1754
        %v1853 = vadd.f32 %v1805, %v1668
        %v1854 = vadd.f32 %v1806, %v1757
        %1855 = vst [vmem:[#allocation2] sm:$0xff] %v1807
        %1856 = vst.msk [vmem:[#allocation2 + $0x8] sm:$0xff] %vm987, %v1808
        %1857 = vst [vmem:[#allocation2 + $0x10] sm:$0xff] %v1809
        %1858 = vst.msk [vmem:[#allocation2 + $0x18] sm:$0xff] %vm987, %v1810
        %1859 = vst [vmem:[#allocation2 + $0x20] sm:$0xff] %v1811
        %1860 = vst.msk [vmem:[#allocation2 + $0x28] sm:$0xff] %vm987, %v1812
        %1861 = vst [vmem:[#allocation2 + $0x30] sm:$0xff] %v1813
        %1862 = vst.msk [vmem:[#allocation2 + $0x38] sm:$0xff] %vm987, %v1814
        %1863 = vst [vmem:[#allocation2 + $0x40] sm:$0xff] %v1815
        %1864 = vst.msk [vmem:[#allocation2 + $0x48] sm:$0xff] %vm987, %v1816
        %1865 = vst [vmem:[#allocation2 + $0x50] sm:$0xff] %v1817
        %1866 = vst.msk [vmem:[#allocation2 + $0x58] sm:$0xff] %vm987, %v1818
        %1867 = vst [vmem:[#allocation2 + $0x60] sm:$0xff] %v1819
        %1868 = vst.msk [vmem:[#allocation2 + $0x68] sm:$0xff] %vm987, %v1820
        %1869 = vst [vmem:[#allocation2 + $0x70] sm:$0xff] %v1821
        %1870 = vst.msk [vmem:[#allocation2 + $0x78] sm:$0xff] %vm987, %v1822
        %1871 = vst [vmem:[#allocation2 + $0x80] sm:$0xff] %v1823
        %1872 = vst.msk [vmem:[#allocation2 + $0x88] sm:$0xff] %vm987, %v1824
        %1873 = vst [vmem:[#allocation2 + $0x90] sm:$0xff] %v1825
        %1874 = vst.msk [vmem:[#allocation2 + $0x98] sm:$0xff] %vm987, %v1826
        %1875 = vst [vmem:[#allocation2 + $0xa0] sm:$0xff] %v1827
        %1876 = vst.msk [vmem:[#allocation2 + $0xa8] sm:$0xff] %vm987, %v1828
        %1877 = vst [vmem:[#allocation2 + $0xb0] sm:$0xff] %v1829
        %1878 = vst.msk [vmem:[#allocation2 + $0xb8] sm:$0xff] %vm987, %v1830
        %1879 = vst [vmem:[#allocation2 + $0xc0] sm:$0xff] %v1831
        %1880 = vst.msk [vmem:[#allocation2 + $0xc8] sm:$0xff] %vm987, %v1832
        %1881 = vst [vmem:[#allocation2 + $0xd0] sm:$0xff] %v1833
        %1882 = vst.msk [vmem:[#allocation2 + $0xd8] sm:$0xff] %vm987, %v1834
        %1883 = vst [vmem:[#allocation2 + $0xe0] sm:$0xff] %v1835
        %1884 = vst.msk [vmem:[#allocation2 + $0xe8] sm:$0xff] %vm987, %v1836
        %1885 = vst [vmem:[#allocation2 + $0xf0] sm:$0xff] %v1837
        %1886 = vst.msk [vmem:[#allocation2 + $0xf8] sm:$0xff] %vm987, %v1838
        %1887 = vst [vmem:[#allocation2 + $0x100] sm:$0xff] %v1839
        %1888 = vst.msk [vmem:[#allocation2 + $0x108] sm:$0xff] %vm987, %v1840
        %1889 = vst [vmem:[#allocation2 + $0x110] sm:$0xff] %v1841
        %1890 = vst.msk [vmem:[#allocation2 + $0x118] sm:$0xff] %vm987, %v1842
        %1891 = vst [vmem:[#allocation2 + $0x120] sm:$0xff] %v1843
        %1892 = vst.msk [vmem:[#allocation2 + $0x128] sm:$0xff] %vm987, %v1844
        %1893 = vst [vmem:[#allocation2 + $0x130] sm:$0xff] %v1845
        %1894 = vst.msk [vmem:[#allocation2 + $0x138] sm:$0xff] %vm987, %v1846
        %1895 = vst [vmem:[#allocation2 + $0x140] sm:$0xff] %v1847
        %1896 = vst.msk [vmem:[#allocation2 + $0x148] sm:$0xff] %vm987, %v1848
        %1897 = vst [vmem:[#allocation2 + $0x150] sm:$0xff] %v1849
        %1898 = vst.msk [vmem:[#allocation2 + $0x158] sm:$0xff] %vm987, %v1850
        %1899 = vst [vmem:[#allocation2 + $0x160] sm:$0xff] %v1851
        %1900 = vst.msk [vmem:[#allocation2 + $0x168] sm:$0xff] %vm987, %v1852
        %1901 = vst [vmem:[#allocation2 + $0x170] sm:$0xff] %v1853
        %1902 = vst.msk [vmem:[#allocation2 + $0x178] sm:$0xff] %vm987, %v1854
        %s1903 = scalar_lea.vmem %s641, 24 [#allocation3]
        %v1904 = vld [vmem:[%s1903] sm:$0xff]
        %v1905 = vld [vmem:[%s1903 + $0x8] sm:$0xff]
        %v1906 = vld [vmem:[%s1903 + $0x10] sm:$0xff]
        %v1907 = vld [vmem:[%s1903 + $0x18] sm:$0xff]
        %v1908 = vld [vmem:[%s1903 + $0x20] sm:$0xff]
        %v1909 = vld [vmem:[%s1903 + $0x28] sm:$0xff]
        %v1910 = vld [vmem:[%s1903 + $0x30] sm:$0xff]
        %v1911 = vld [vmem:[%s1903 + $0x38] sm:$0xff]
        %v1912 = vld [vmem:[%s1903 + $0x40] sm:$0xff]
        %v1913 = vld [vmem:[%s1903 + $0x48] sm:$0xff]
        %v1914 = vld [vmem:[%s1903 + $0x50] sm:$0xff]
        %v1915 = vld [vmem:[%s1903 + $0x58] sm:$0xff]
        %v1916 = vld [vmem:[%s1903 + $0x60] sm:$0xff]
        %v1917 = vld [vmem:[%s1903 + $0x68] sm:$0xff]
        %v1918 = vld [vmem:[%s1903 + $0x70] sm:$0xff]
        %v1919 = vld [vmem:[%s1903 + $0x78] sm:$0xff]
        %v1920 = vld [vmem:[%s1903 + $0x80] sm:$0xff]
        %v1921 = vld [vmem:[%s1903 + $0x88] sm:$0xff]
        %v1922 = vld [vmem:[%s1903 + $0x90] sm:$0xff]
        %v1923 = vld [vmem:[%s1903 + $0x98] sm:$0xff]
        %v1924 = vld [vmem:[%s1903 + $0xa0] sm:$0xff]
        %v1925 = vld [vmem:[%s1903 + $0xa8] sm:$0xff]
        %v1926 = vld [vmem:[%s1903 + $0xb0] sm:$0xff]
        %v1927 = vld [vmem:[%s1903 + $0xb8] sm:$0xff]
        %s1928 = scalar_lea.vmem %s1, 192
        %v1929 = vld [vmem:[%s1928] sm:$0xff]
        %v1930 = vld [vmem:[%s1928 + $0x8] sm:$0xff]
        %v1931 = vld [vmem:[%s1928 + $0x10] sm:$0xff]
        %v1932 = vld [vmem:[%s1928 + $0x18] sm:$0xff]
        %v1933 = vld [vmem:[%s1928 + $0x20] sm:$0xff]
        %v1934 = vld [vmem:[%s1928 + $0x28] sm:$0xff]
        %v1935 = vld [vmem:[%s1928 + $0x30] sm:$0xf]
        %v1936 = vld [vmem:[%s1928 + $0x38] sm:$0xf]
        %v1938 = vsel %vm728, %v1904, 0
        %v1941 = vsel %vm728, %v1905, 0
        %v1944 = vsel %vm728, %v1906, 0
        %v1947 = vsel %vm728, %v1907, 0
        %v1950 = vsel %vm728, %v1908, 0
        %v1953 = vsel %vm728, %v1909, 0
        %v1956 = vsel %vm728, %v1910, 0
        %v1959 = vsel %vm728, %v1911, 0
        %v1962 = vsel %vm728, %v1912, 0
        %v1965 = vsel %vm728, %v1913, 0
        %v1968 = vsel %vm728, %v1914, 0
        %v1971 = vsel %vm728, %v1915, 0
        %v1974 = vsel %vm728, %v1916, 0
        %v1977 = vsel %vm728, %v1917, 0
        %v1980 = vsel %vm728, %v1918, 0
        %v1983 = vsel %vm728, %v1919, 0
        %v1986 = vsel %vm728, %v1920, 0
        %v1989 = vsel %vm728, %v1921, 0
        %v1992 = vsel %vm728, %v1922, 0
        %v1995 = vsel %vm728, %v1923, 0
        %v1998 = vsel %vm728, %v1924, 0
        %v2001 = vsel %vm728, %v1925, 0
        %v2004 = vsel %vm728, %v1926, 0
        %v2007 = vsel %vm728, %v1927, 0
        %v2010 = vsel %vm801, %v1935, 0
        %v2013 = vsel %vm801, %v1936, 0
        %2015 = vmatpush.msra.mxu0 0.0
        %2016 = vmatpush.msra.mxu0 0.0
        %2017 = vmatpush.msra.mxu0 0.0
        %2018 = vmatpush.msra.mxu0 0.0
        %2019 = vmatpush.msra.mxu0 0.0
        %2020 = vmatpush.msra.mxu0 0.0
        %2021 = vmatpush.msra.mxu0 0.0
        %2022 = vmatpush.msra.mxu0 0.0
        %2023 = vmatpush.msra.mxu0 0.0
        %2024 = vmatpush.msra.mxu0 0.0
        %2025 = vmatpush.msra.mxu0 0.0
        %2026 = vmatpush.msra.mxu0 0.0
        %2027 = vmatpush.msra.mxu0 %v2010
        %2028 = vmatpush.msra.mxu0 %v1933
        %2029 = vmatpush.msra.mxu0 %v1931
        %2030 = vmatpush.msra.mxu0 %v1929
        %2031 = vmatmul.f32.gmra.mxu0 %v1938
        %v2032 = vpop.f32.mrf.mxu0
        %v2033 = vadd.f32 0.0, %v2032
        %2034 = vmatmul.f32.gmra.mxu0 %v1941
        %v2035 = vpop.f32.mrf.mxu0
        %v2036 = vadd.f32 0.0, %v2035
        %2037 = vmatmul.f32.gmra.mxu0 %v1944
        %v2038 = vpop.f32.mrf.mxu0
        %v2039 = vadd.f32 0.0, %v2038
        %2040 = vmatmul.f32.gmra.mxu0 %v1947
        %v2041 = vpop.f32.mrf.mxu0
        %v2042 = vadd.f32 0.0, %v2041
        %2043 = vmatmul.f32.gmra.mxu0 %v1950
        %v2044 = vpop.f32.mrf.mxu0
        %v2045 = vadd.f32 0.0, %v2044
        %2046 = vmatmul.f32.gmra.mxu0 %v1953
        %v2047 = vpop.f32.mrf.mxu0
        %v2048 = vadd.f32 0.0, %v2047
        %2049 = vmatmul.f32.gmra.mxu0 %v1956
        %v2050 = vpop.f32.mrf.mxu0
        %v2051 = vadd.f32 0.0, %v2050
        %2052 = vmatmul.f32.gmra.mxu0 %v1959
        %v2053 = vpop.f32.mrf.mxu0
        %v2054 = vadd.f32 0.0, %v2053
        %2055 = vmatmul.f32.gmra.mxu0 %v1962
        %v2056 = vpop.f32.mrf.mxu0
        %v2057 = vadd.f32 0.0, %v2056
        %2058 = vmatmul.f32.gmra.mxu0 %v1965
        %v2059 = vpop.f32.mrf.mxu0
        %v2060 = vadd.f32 0.0, %v2059
        %2061 = vmatmul.f32.gmra.mxu0 %v1968
        %v2062 = vpop.f32.mrf.mxu0
        %v2063 = vadd.f32 0.0, %v2062
        %2064 = vmatmul.f32.gmra.mxu0 %v1971
        %v2065 = vpop.f32.mrf.mxu0
        %v2066 = vadd.f32 0.0, %v2065
        %2067 = vmatmul.f32.gmra.mxu0 %v1974
        %v2068 = vpop.f32.mrf.mxu0
        %v2069 = vadd.f32 0.0, %v2068
        %2070 = vmatmul.f32.gmra.mxu0 %v1977
        %v2071 = vpop.f32.mrf.mxu0
        %v2072 = vadd.f32 0.0, %v2071
        %2073 = vmatmul.f32.gmra.mxu0 %v1980
        %v2074 = vpop.f32.mrf.mxu0
        %v2075 = vadd.f32 0.0, %v2074
        %2076 = vmatmul.f32.gmra.mxu0 %v1983
        %v2077 = vpop.f32.mrf.mxu0
        %v2078 = vadd.f32 0.0, %v2077
        %2079 = vmatmul.f32.gmra.mxu0 %v1986
        %v2080 = vpop.f32.mrf.mxu0
        %v2081 = vadd.f32 0.0, %v2080
        %2082 = vmatmul.f32.gmra.mxu0 %v1989
        %v2083 = vpop.f32.mrf.mxu0
        %v2084 = vadd.f32 0.0, %v2083
        %2085 = vmatmul.f32.gmra.mxu0 %v1992
        %v2086 = vpop.f32.mrf.mxu0
        %v2087 = vadd.f32 0.0, %v2086
        %2088 = vmatmul.f32.gmra.mxu0 %v1995
        %v2089 = vpop.f32.mrf.mxu0
        %v2090 = vadd.f32 0.0, %v2089
        %2091 = vmatmul.f32.gmra.mxu0 %v1998
        %v2092 = vpop.f32.mrf.mxu0
        %v2093 = vadd.f32 0.0, %v2092
        %2094 = vmatmul.f32.gmra.mxu0 %v2001
        %v2095 = vpop.f32.mrf.mxu0
        %v2096 = vadd.f32 0.0, %v2095
        %2097 = vmatmul.f32.gmra.mxu0 %v2004
        %v2098 = vpop.f32.mrf.mxu0
        %v2099 = vadd.f32 0.0, %v2098
        %2100 = vmatmul.f32.gmra.mxu0 %v2007
        %v2101 = vpop.f32.mrf.mxu0
        %v2102 = vadd.f32 0.0, %v2101
        %2103 = vdwg.mxu0
        %2104 = vmatpush.msra.mxu0 0.0
        %2105 = vmatpush.msra.mxu0 0.0
        %2106 = vmatpush.msra.mxu0 0.0
        %2107 = vmatpush.msra.mxu0 0.0
        %2108 = vmatpush.msra.mxu0 0.0
        %2109 = vmatpush.msra.mxu0 0.0
        %2110 = vmatpush.msra.mxu0 0.0
        %2111 = vmatpush.msra.mxu0 0.0
        %2112 = vmatpush.msra.mxu0 0.0
        %2113 = vmatpush.msra.mxu0 0.0
        %2114 = vmatpush.msra.mxu0 0.0
        %2115 = vmatpush.msra.mxu0 0.0
        %2116 = vmatpush.msra.mxu0 %v2013
        %2117 = vmatpush.msra.mxu0 %v1934
        %2118 = vmatpush.msra.mxu0 %v1932
        %2119 = vmatpush.msra.mxu0 %v1930
        %2120 = vmatmul.f32.gmra.mxu0 %v1938
        %v2121 = vpop.f32.mrf.mxu0
        %v2122 = vadd.f32 0.0, %v2121
        %2123 = vmatmul.f32.gmra.mxu0 %v1941
        %v2124 = vpop.f32.mrf.mxu0
        %v2125 = vadd.f32 0.0, %v2124
        %2126 = vmatmul.f32.gmra.mxu0 %v1944
        %v2127 = vpop.f32.mrf.mxu0
        %v2128 = vadd.f32 0.0, %v2127
        %2129 = vmatmul.f32.gmra.mxu0 %v1947
        %v2130 = vpop.f32.mrf.mxu0
        %v2131 = vadd.f32 0.0, %v2130
        %2132 = vmatmul.f32.gmra.mxu0 %v1950
        %v2133 = vpop.f32.mrf.mxu0
        %v2134 = vadd.f32 0.0, %v2133
        %2135 = vmatmul.f32.gmra.mxu0 %v1953
        %v2136 = vpop.f32.mrf.mxu0
        %v2137 = vadd.f32 0.0, %v2136
        %2138 = vmatmul.f32.gmra.mxu0 %v1956
        %v2139 = vpop.f32.mrf.mxu0
        %v2140 = vadd.f32 0.0, %v2139
        %2141 = vmatmul.f32.gmra.mxu0 %v1959
        %v2142 = vpop.f32.mrf.mxu0
        %v2143 = vadd.f32 0.0, %v2142
        %2144 = vmatmul.f32.gmra.mxu0 %v1962
        %v2145 = vpop.f32.mrf.mxu0
        %v2146 = vadd.f32 0.0, %v2145
        %2147 = vmatmul.f32.gmra.mxu0 %v1965
        %v2148 = vpop.f32.mrf.mxu0
        %v2149 = vadd.f32 0.0, %v2148
        %2150 = vmatmul.f32.gmra.mxu0 %v1968
        %v2151 = vpop.f32.mrf.mxu0
        %v2152 = vadd.f32 0.0, %v2151
        %2153 = vmatmul.f32.gmra.mxu0 %v1971
        %v2154 = vpop.f32.mrf.mxu0
        %v2155 = vadd.f32 0.0, %v2154
        %2156 = vmatmul.f32.gmra.mxu0 %v1974
        %v2157 = vpop.f32.mrf.mxu0
        %v2158 = vadd.f32 0.0, %v2157
        %2159 = vmatmul.f32.gmra.mxu0 %v1977
        %v2160 = vpop.f32.mrf.mxu0
        %v2161 = vadd.f32 0.0, %v2160
        %2162 = vmatmul.f32.gmra.mxu0 %v1980
        %v2163 = vpop.f32.mrf.mxu0
        %v2164 = vadd.f32 0.0, %v2163
        %2165 = vmatmul.f32.gmra.mxu0 %v1983
        %v2166 = vpop.f32.mrf.mxu0
        %v2167 = vadd.f32 0.0, %v2166
        %2168 = vmatmul.f32.gmra.mxu0 %v1986
        %v2169 = vpop.f32.mrf.mxu0
        %v2170 = vadd.f32 0.0, %v2169
        %2171 = vmatmul.f32.gmra.mxu0 %v1989
        %v2172 = vpop.f32.mrf.mxu0
        %v2173 = vadd.f32 0.0, %v2172
        %2174 = vmatmul.f32.gmra.mxu0 %v1992
        %v2175 = vpop.f32.mrf.mxu0
        %v2176 = vadd.f32 0.0, %v2175
        %2177 = vmatmul.f32.gmra.mxu0 %v1995
        %v2178 = vpop.f32.mrf.mxu0
        %v2179 = vadd.f32 0.0, %v2178
        %2180 = vmatmul.f32.gmra.mxu0 %v1998
        %v2181 = vpop.f32.mrf.mxu0
        %v2182 = vadd.f32 0.0, %v2181
        %2183 = vmatmul.f32.gmra.mxu0 %v2001
        %v2184 = vpop.f32.mrf.mxu0
        %v2185 = vadd.f32 0.0, %v2184
        %2186 = vmatmul.f32.gmra.mxu0 %v2004
        %v2187 = vpop.f32.mrf.mxu0
        %v2188 = vadd.f32 0.0, %v2187
        %2189 = vmatmul.f32.gmra.mxu0 %v2007
        %v2190 = vpop.f32.mrf.mxu0
        %v2191 = vadd.f32 0.0, %v2190
        %2192 = vdwg.mxu0
        %v2193 = vld [vmem:[#allocation2] sm:$0xff]
        %v2194 = vld [vmem:[#allocation2 + $0x8] sm:$0xff]
        %v2195 = vld [vmem:[#allocation2 + $0x10] sm:$0xff]
        %v2196 = vld [vmem:[#allocation2 + $0x18] sm:$0xff]
        %v2197 = vld [vmem:[#allocation2 + $0x20] sm:$0xff]
        %v2198 = vld [vmem:[#allocation2 + $0x28] sm:$0xff]
        %v2199 = vld [vmem:[#allocation2 + $0x30] sm:$0xff]
        %v2200 = vld [vmem:[#allocation2 + $0x38] sm:$0xff]
        %v2201 = vld [vmem:[#allocation2 + $0x40] sm:$0xff]
        %v2202 = vld [vmem:[#allocation2 + $0x48] sm:$0xff]
        %v2203 = vld [vmem:[#allocation2 + $0x50] sm:$0xff]
        %v2204 = vld [vmem:[#allocation2 + $0x58] sm:$0xff]
        %v2205 = vld [vmem:[#allocation2 + $0x60] sm:$0xff]
        %v2206 = vld [vmem:[#allocation2 + $0x68] sm:$0xff]
        %v2207 = vld [vmem:[#allocation2 + $0x70] sm:$0xff]
        %v2208 = vld [vmem:[#allocation2 + $0x78] sm:$0xff]
        %v2209 = vld [vmem:[#allocation2 + $0x80] sm:$0xff]
        %v2210 = vld [vmem:[#allocation2 + $0x88] sm:$0xff]
        %v2211 = vld [vmem:[#allocation2 + $0x90] sm:$0xff]
        %v2212 = vld [vmem:[#allocation2 + $0x98] sm:$0xff]
        %v2213 = vld [vmem:[#allocation2 + $0xa0] sm:$0xff]
        %v2214 = vld [vmem:[#allocation2 + $0xa8] sm:$0xff]
        %v2215 = vld [vmem:[#allocation2 + $0xb0] sm:$0xff]
        %v2216 = vld [vmem:[#allocation2 + $0xb8] sm:$0xff]
        %v2217 = vld [vmem:[#allocation2 + $0xc0] sm:$0xff]
        %v2218 = vld [vmem:[#allocation2 + $0xc8] sm:$0xff]
        %v2219 = vld [vmem:[#allocation2 + $0xd0] sm:$0xff]
        %v2220 = vld [vmem:[#allocation2 + $0xd8] sm:$0xff]
        %v2221 = vld [vmem:[#allocation2 + $0xe0] sm:$0xff]
        %v2222 = vld [vmem:[#allocation2 + $0xe8] sm:$0xff]
        %v2223 = vld [vmem:[#allocation2 + $0xf0] sm:$0xff]
        %v2224 = vld [vmem:[#allocation2 + $0xf8] sm:$0xff]
        %v2225 = vld [vmem:[#allocation2 + $0x100] sm:$0xff]
        %v2226 = vld [vmem:[#allocation2 + $0x108] sm:$0xff]
        %v2227 = vld [vmem:[#allocation2 + $0x110] sm:$0xff]
        %v2228 = vld [vmem:[#allocation2 + $0x118] sm:$0xff]
        %v2229 = vld [vmem:[#allocation2 + $0x120] sm:$0xff]
        %v2230 = vld [vmem:[#allocation2 + $0x128] sm:$0xff]
        %v2231 = vld [vmem:[#allocation2 + $0x130] sm:$0xff]
        %v2232 = vld [vmem:[#allocation2 + $0x138] sm:$0xff]
        %v2233 = vld [vmem:[#allocation2 + $0x140] sm:$0xff]
        %v2234 = vld [vmem:[#allocation2 + $0x148] sm:$0xff]
        %v2235 = vld [vmem:[#allocation2 + $0x150] sm:$0xff]
        %v2236 = vld [vmem:[#allocation2 + $0x158] sm:$0xff]
        %v2237 = vld [vmem:[#allocation2 + $0x160] sm:$0xff]
        %v2238 = vld [vmem:[#allocation2 + $0x168] sm:$0xff]
        %v2239 = vld [vmem:[#allocation2 + $0x170] sm:$0xff]
        %v2240 = vld [vmem:[#allocation2 + $0x178] sm:$0xff]
        %v2241 = vadd.f32 %v2193, %v2033
        %v2242 = vadd.f32 %v2194, %v2122
        %v2243 = vadd.f32 %v2195, %v2036
        %v2244 = vadd.f32 %v2196, %v2125
        %v2245 = vadd.f32 %v2197, %v2039
        %v2246 = vadd.f32 %v2198, %v2128
        %v2247 = vadd.f32 %v2199, %v2042
        %v2248 = vadd.f32 %v2200, %v2131
        %v2249 = vadd.f32 %v2201, %v2045
        %v2250 = vadd.f32 %v2202, %v2134
        %v2251 = vadd.f32 %v2203, %v2048
        %v2252 = vadd.f32 %v2204, %v2137
        %v2253 = vadd.f32 %v2205, %v2051
        %v2254 = vadd.f32 %v2206, %v2140
        %v2255 = vadd.f32 %v2207, %v2054
        %v2256 = vadd.f32 %v2208, %v2143
        %v2257 = vadd.f32 %v2209, %v2057
        %v2258 = vadd.f32 %v2210, %v2146
        %v2259 = vadd.f32 %v2211, %v2060
        %v2260 = vadd.f32 %v2212, %v2149
        %v2261 = vadd.f32 %v2213, %v2063
        %v2262 = vadd.f32 %v2214, %v2152
        %v2263 = vadd.f32 %v2215, %v2066
        %v2264 = vadd.f32 %v2216, %v2155
        %v2265 = vadd.f32 %v2217, %v2069
        %v2266 = vadd.f32 %v2218, %v2158
        %v2267 = vadd.f32 %v2219, %v2072
        %v2268 = vadd.f32 %v2220, %v2161
        %v2269 = vadd.f32 %v2221, %v2075
        %v2270 = vadd.f32 %v2222, %v2164
        %v2271 = vadd.f32 %v2223, %v2078
        %v2272 = vadd.f32 %v2224, %v2167
        %v2273 = vadd.f32 %v2225, %v2081
        %v2274 = vadd.f32 %v2226, %v2170
        %v2275 = vadd.f32 %v2227, %v2084
        %v2276 = vadd.f32 %v2228, %v2173
        %v2277 = vadd.f32 %v2229, %v2087
        %v2278 = vadd.f32 %v2230, %v2176
        %v2279 = vadd.f32 %v2231, %v2090
        %v2280 = vadd.f32 %v2232, %v2179
        %v2281 = vadd.f32 %v2233, %v2093
        %v2282 = vadd.f32 %v2234, %v2182
        %v2283 = vadd.f32 %v2235, %v2096
        %v2284 = vadd.f32 %v2236, %v2185
        %v2285 = vadd.f32 %v2237, %v2099
        %v2286 = vadd.f32 %v2238, %v2188
        %v2287 = vadd.f32 %v2239, %v2102
        %v2288 = vadd.f32 %v2240, %v2191
        %2289 = vst [vmem:[#allocation2] sm:$0xff] %v2241
        %2290 = vst.msk [vmem:[#allocation2 + $0x8] sm:$0xff] %vm987, %v2242
        %2291 = vst [vmem:[#allocation2 + $0x10] sm:$0xff] %v2243
        %2292 = vst.msk [vmem:[#allocation2 + $0x18] sm:$0xff] %vm987, %v2244
        %2293 = vst [vmem:[#allocation2 + $0x20] sm:$0xff] %v2245
        %2294 = vst.msk [vmem:[#allocation2 + $0x28] sm:$0xff] %vm987, %v2246
        %2295 = vst [vmem:[#allocation2 + $0x30] sm:$0xff] %v2247
        %2296 = vst.msk [vmem:[#allocation2 + $0x38] sm:$0xff] %vm987, %v2248
        %2297 = vst [vmem:[#allocation2 + $0x40] sm:$0xff] %v2249
        %2298 = vst.msk [vmem:[#allocation2 + $0x48] sm:$0xff] %vm987, %v2250
        %2299 = vst [vmem:[#allocation2 + $0x50] sm:$0xff] %v2251
        %2300 = vst.msk [vmem:[#allocation2 + $0x58] sm:$0xff] %vm987, %v2252
        %2301 = vst [vmem:[#allocation2 + $0x60] sm:$0xff] %v2253
        %2302 = vst.msk [vmem:[#allocation2 + $0x68] sm:$0xff] %vm987, %v2254
        %2303 = vst [vmem:[#allocation2 + $0x70] sm:$0xff] %v2255
        %2304 = vst.msk [vmem:[#allocation2 + $0x78] sm:$0xff] %vm987, %v2256
        %2305 = vst [vmem:[#allocation2 + $0x80] sm:$0xff] %v2257
        %2306 = vst.msk [vmem:[#allocation2 + $0x88] sm:$0xff] %vm987, %v2258
        %2307 = vst [vmem:[#allocation2 + $0x90] sm:$0xff] %v2259
        %2308 = vst.msk [vmem:[#allocation2 + $0x98] sm:$0xff] %vm987, %v2260
        %2309 = vst [vmem:[#allocation2 + $0xa0] sm:$0xff] %v2261
        %2310 = vst.msk [vmem:[#allocation2 + $0xa8] sm:$0xff] %vm987, %v2262
        %2311 = vst [vmem:[#allocation2 + $0xb0] sm:$0xff] %v2263
        %2312 = vst.msk [vmem:[#allocation2 + $0xb8] sm:$0xff] %vm987, %v2264
        %2313 = vst [vmem:[#allocation2 + $0xc0] sm:$0xff] %v2265
        %2314 = vst.msk [vmem:[#allocation2 + $0xc8] sm:$0xff] %vm987, %v2266
        %2315 = vst [vmem:[#allocation2 + $0xd0] sm:$0xff] %v2267
        %2316 = vst.msk [vmem:[#allocation2 + $0xd8] sm:$0xff] %vm987, %v2268
        %2317 = vst [vmem:[#allocation2 + $0xe0] sm:$0xff] %v2269
        %2318 = vst.msk [vmem:[#allocation2 + $0xe8] sm:$0xff] %vm987, %v2270
        %2319 = vst [vmem:[#allocation2 + $0xf0] sm:$0xff] %v2271
        %2320 = vst.msk [vmem:[#allocation2 + $0xf8] sm:$0xff] %vm987, %v2272
        %2321 = vst [vmem:[#allocation2 + $0x100] sm:$0xff] %v2273
        %2322 = vst.msk [vmem:[#allocation2 + $0x108] sm:$0xff] %vm987, %v2274
        %2323 = vst [vmem:[#allocation2 + $0x110] sm:$0xff] %v2275
        %2324 = vst.msk [vmem:[#allocation2 + $0x118] sm:$0xff] %vm987, %v2276
        %2325 = vst [vmem:[#allocation2 + $0x120] sm:$0xff] %v2277
        %2326 = vst.msk [vmem:[#allocation2 + $0x128] sm:$0xff] %vm987, %v2278
        %2327 = vst [vmem:[#allocation2 + $0x130] sm:$0xff] %v2279
        %2328 = vst.msk [vmem:[#allocation2 + $0x138] sm:$0xff] %vm987, %v2280
        %2329 = vst [vmem:[#allocation2 + $0x140] sm:$0xff] %v2281
        %2330 = vst.msk [vmem:[#allocation2 + $0x148] sm:$0xff] %vm987, %v2282
        %2331 = vst [vmem:[#allocation2 + $0x150] sm:$0xff] %v2283
        %2332 = vst.msk [vmem:[#allocation2 + $0x158] sm:$0xff] %vm987, %v2284
        %2333 = vst [vmem:[#allocation2 + $0x160] sm:$0xff] %v2285
        %2334 = vst.msk [vmem:[#allocation2 + $0x168] sm:$0xff] %vm987, %v2286
        %2335 = vst [vmem:[#allocation2 + $0x170] sm:$0xff] %v2287
        %2336 = vst.msk [vmem:[#allocation2 + $0x178] sm:$0xff] %vm987, %v2288
        %s2337 = scalar_lea.vmem %s641, 32 [#allocation3]
        %v2338 = vld [vmem:[%s2337] sm:$0xff]
        %v2339 = vld [vmem:[%s2337 + $0x8] sm:$0xff]
        %v2340 = vld [vmem:[%s2337 + $0x10] sm:$0xff]
        %v2341 = vld [vmem:[%s2337 + $0x18] sm:$0xff]
        %v2342 = vld [vmem:[%s2337 + $0x20] sm:$0xff]
        %v2343 = vld [vmem:[%s2337 + $0x28] sm:$0xff]
        %v2344 = vld [vmem:[%s2337 + $0x30] sm:$0xff]
        %v2345 = vld [vmem:[%s2337 + $0x38] sm:$0xff]
        %v2346 = vld [vmem:[%s2337 + $0x40] sm:$0xff]
        %v2347 = vld [vmem:[%s2337 + $0x48] sm:$0xff]
        %v2348 = vld [vmem:[%s2337 + $0x50] sm:$0xff]
        %v2349 = vld [vmem:[%s2337 + $0x58] sm:$0xff]
        %v2350 = vld [vmem:[%s2337 + $0x60] sm:$0xff]
        %v2351 = vld [vmem:[%s2337 + $0x68] sm:$0xff]
        %v2352 = vld [vmem:[%s2337 + $0x70] sm:$0xff]
        %v2353 = vld [vmem:[%s2337 + $0x78] sm:$0xff]
        %v2354 = vld [vmem:[%s2337 + $0x80] sm:$0xff]
        %v2355 = vld [vmem:[%s2337 + $0x88] sm:$0xff]
        %v2356 = vld [vmem:[%s2337 + $0x90] sm:$0xff]
        %v2357 = vld [vmem:[%s2337 + $0x98] sm:$0xff]
        %v2358 = vld [vmem:[%s2337 + $0xa0] sm:$0xff]
        %v2359 = vld [vmem:[%s2337 + $0xa8] sm:$0xff]
        %v2360 = vld [vmem:[%s2337 + $0xb0] sm:$0xff]
        %v2361 = vld [vmem:[%s2337 + $0xb8] sm:$0xff]
        %s2362 = scalar_lea.vmem %s1, 256
        %v2363 = vld [vmem:[%s2362] sm:$0xff]
        %v2364 = vld [vmem:[%s2362 + $0x8] sm:$0xff]
        %v2365 = vld [vmem:[%s2362 + $0x10] sm:$0xff]
        %v2366 = vld [vmem:[%s2362 + $0x18] sm:$0xff]
        %v2367 = vld [vmem:[%s2362 + $0x20] sm:$0xff]
        %v2368 = vld [vmem:[%s2362 + $0x28] sm:$0xff]
        %v2369 = vld [vmem:[%s2362 + $0x30] sm:$0xf]
        %v2370 = vld [vmem:[%s2362 + $0x38] sm:$0xf]
        %v2372 = vsel %vm728, %v2338, 0
        %v2375 = vsel %vm728, %v2339, 0
        %v2378 = vsel %vm728, %v2340, 0
        %v2381 = vsel %vm728, %v2341, 0
        %v2384 = vsel %vm728, %v2342, 0
        %v2387 = vsel %vm728, %v2343, 0
        %v2390 = vsel %vm728, %v2344, 0
        %v2393 = vsel %vm728, %v2345, 0
        %v2396 = vsel %vm728, %v2346, 0
        %v2399 = vsel %vm728, %v2347, 0
        %v2402 = vsel %vm728, %v2348, 0
        %v2405 = vsel %vm728, %v2349, 0
        %v2408 = vsel %vm728, %v2350, 0
        %v2411 = vsel %vm728, %v2351, 0
        %v2414 = vsel %vm728, %v2352, 0
        %v2417 = vsel %vm728, %v2353, 0
        %v2420 = vsel %vm728, %v2354, 0
        %v2423 = vsel %vm728, %v2355, 0
        %v2426 = vsel %vm728, %v2356, 0
        %v2429 = vsel %vm728, %v2357, 0
        %v2432 = vsel %vm728, %v2358, 0
        %v2435 = vsel %vm728, %v2359, 0
        %v2438 = vsel %vm728, %v2360, 0
        %v2441 = vsel %vm728, %v2361, 0
        %v2444 = vsel %vm801, %v2369, 0
        %v2447 = vsel %vm801, %v2370, 0
        %2449 = vmatpush.msra.mxu0 0.0
        %2450 = vmatpush.msra.mxu0 0.0
        %2451 = vmatpush.msra.mxu0 0.0
        %2452 = vmatpush.msra.mxu0 0.0
        %2453 = vmatpush.msra.mxu0 0.0
        %2454 = vmatpush.msra.mxu0 0.0
        %2455 = vmatpush.msra.mxu0 0.0
        %2456 = vmatpush.msra.mxu0 0.0
        %2457 = vmatpush.msra.mxu0 0.0
        %2458 = vmatpush.msra.mxu0 0.0
        %2459 = vmatpush.msra.mxu0 0.0
        %2460 = vmatpush.msra.mxu0 0.0
        %2461 = vmatpush.msra.mxu0 %v2444
        %2462 = vmatpush.msra.mxu0 %v2367
        %2463 = vmatpush.msra.mxu0 %v2365
        %2464 = vmatpush.msra.mxu0 %v2363
        %2465 = vmatmul.f32.gmra.mxu0 %v2372
        %v2466 = vpop.f32.mrf.mxu0
        %v2467 = vadd.f32 0.0, %v2466
        %2468 = vmatmul.f32.gmra.mxu0 %v2375
        %v2469 = vpop.f32.mrf.mxu0
        %v2470 = vadd.f32 0.0, %v2469
        %2471 = vmatmul.f32.gmra.mxu0 %v2378
        %v2472 = vpop.f32.mrf.mxu0
        %v2473 = vadd.f32 0.0, %v2472
        %2474 = vmatmul.f32.gmra.mxu0 %v2381
        %v2475 = vpop.f32.mrf.mxu0
        %v2476 = vadd.f32 0.0, %v2475
        %2477 = vmatmul.f32.gmra.mxu0 %v2384
        %v2478 = vpop.f32.mrf.mxu0
        %v2479 = vadd.f32 0.0, %v2478
        %2480 = vmatmul.f32.gmra.mxu0 %v2387
        %v2481 = vpop.f32.mrf.mxu0
        %v2482 = vadd.f32 0.0, %v2481
        %2483 = vmatmul.f32.gmra.mxu0 %v2390
        %v2484 = vpop.f32.mrf.mxu0
        %v2485 = vadd.f32 0.0, %v2484
        %2486 = vmatmul.f32.gmra.mxu0 %v2393
        %v2487 = vpop.f32.mrf.mxu0
        %v2488 = vadd.f32 0.0, %v2487
        %2489 = vmatmul.f32.gmra.mxu0 %v2396
        %v2490 = vpop.f32.mrf.mxu0
        %v2491 = vadd.f32 0.0, %v2490
        %2492 = vmatmul.f32.gmra.mxu0 %v2399
        %v2493 = vpop.f32.mrf.mxu0
        %v2494 = vadd.f32 0.0, %v2493
        %2495 = vmatmul.f32.gmra.mxu0 %v2402
        %v2496 = vpop.f32.mrf.mxu0
        %v2497 = vadd.f32 0.0, %v2496
        %2498 = vmatmul.f32.gmra.mxu0 %v2405
        %v2499 = vpop.f32.mrf.mxu0
        %v2500 = vadd.f32 0.0, %v2499
        %2501 = vmatmul.f32.gmra.mxu0 %v2408
        %v2502 = vpop.f32.mrf.mxu0
        %v2503 = vadd.f32 0.0, %v2502
        %2504 = vmatmul.f32.gmra.mxu0 %v2411
        %v2505 = vpop.f32.mrf.mxu0
        %v2506 = vadd.f32 0.0, %v2505
        %2507 = vmatmul.f32.gmra.mxu0 %v2414
        %v2508 = vpop.f32.mrf.mxu0
        %v2509 = vadd.f32 0.0, %v2508
        %2510 = vmatmul.f32.gmra.mxu0 %v2417
        %v2511 = vpop.f32.mrf.mxu0
        %v2512 = vadd.f32 0.0, %v2511
        %2513 = vmatmul.f32.gmra.mxu0 %v2420
        %v2514 = vpop.f32.mrf.mxu0
        %v2515 = vadd.f32 0.0, %v2514
        %2516 = vmatmul.f32.gmra.mxu0 %v2423
        %v2517 = vpop.f32.mrf.mxu0
        %v2518 = vadd.f32 0.0, %v2517
        %2519 = vmatmul.f32.gmra.mxu0 %v2426
        %v2520 = vpop.f32.mrf.mxu0
        %v2521 = vadd.f32 0.0, %v2520
        %2522 = vmatmul.f32.gmra.mxu0 %v2429
        %v2523 = vpop.f32.mrf.mxu0
        %v2524 = vadd.f32 0.0, %v2523
        %2525 = vmatmul.f32.gmra.mxu0 %v2432
        %v2526 = vpop.f32.mrf.mxu0
        %v2527 = vadd.f32 0.0, %v2526
        %2528 = vmatmul.f32.gmra.mxu0 %v2435
        %v2529 = vpop.f32.mrf.mxu0
        %v2530 = vadd.f32 0.0, %v2529
        %2531 = vmatmul.f32.gmra.mxu0 %v2438
        %v2532 = vpop.f32.mrf.mxu0
        %v2533 = vadd.f32 0.0, %v2532
        %2534 = vmatmul.f32.gmra.mxu0 %v2441
        %v2535 = vpop.f32.mrf.mxu0
        %v2536 = vadd.f32 0.0, %v2535
        %2537 = vdwg.mxu0
        %2538 = vmatpush.msra.mxu0 0.0
        %2539 = vmatpush.msra.mxu0 0.0
        %2540 = vmatpush.msra.mxu0 0.0
        %2541 = vmatpush.msra.mxu0 0.0
        %2542 = vmatpush.msra.mxu0 0.0
        %2543 = vmatpush.msra.mxu0 0.0
        %2544 = vmatpush.msra.mxu0 0.0
        %2545 = vmatpush.msra.mxu0 0.0
        %2546 = vmatpush.msra.mxu0 0.0
        %2547 = vmatpush.msra.mxu0 0.0
        %2548 = vmatpush.msra.mxu0 0.0
        %2549 = vmatpush.msra.mxu0 0.0
        %2550 = vmatpush.msra.mxu0 %v2447
        %2551 = vmatpush.msra.mxu0 %v2368
        %2552 = vmatpush.msra.mxu0 %v2366
        %2553 = vmatpush.msra.mxu0 %v2364
        %2554 = vmatmul.f32.gmra.mxu0 %v2372
        %v2555 = vpop.f32.mrf.mxu0
        %v2556 = vadd.f32 0.0, %v2555
        %2557 = vmatmul.f32.gmra.mxu0 %v2375
        %v2558 = vpop.f32.mrf.mxu0
        %v2559 = vadd.f32 0.0, %v2558
        %2560 = vmatmul.f32.gmra.mxu0 %v2378
        %v2561 = vpop.f32.mrf.mxu0
        %v2562 = vadd.f32 0.0, %v2561
        %2563 = vmatmul.f32.gmra.mxu0 %v2381
        %v2564 = vpop.f32.mrf.mxu0
        %v2565 = vadd.f32 0.0, %v2564
        %2566 = vmatmul.f32.gmra.mxu0 %v2384
        %v2567 = vpop.f32.mrf.mxu0
        %v2568 = vadd.f32 0.0, %v2567
        %2569 = vmatmul.f32.gmra.mxu0 %v2387
        %v2570 = vpop.f32.mrf.mxu0
        %v2571 = vadd.f32 0.0, %v2570
        %2572 = vmatmul.f32.gmra.mxu0 %v2390
        %v2573 = vpop.f32.mrf.mxu0
        %v2574 = vadd.f32 0.0, %v2573
        %2575 = vmatmul.f32.gmra.mxu0 %v2393
        %v2576 = vpop.f32.mrf.mxu0
        %v2577 = vadd.f32 0.0, %v2576
        %2578 = vmatmul.f32.gmra.mxu0 %v2396
        %v2579 = vpop.f32.mrf.mxu0
        %v2580 = vadd.f32 0.0, %v2579
        %2581 = vmatmul.f32.gmra.mxu0 %v2399
        %v2582 = vpop.f32.mrf.mxu0
        %v2583 = vadd.f32 0.0, %v2582
        %2584 = vmatmul.f32.gmra.mxu0 %v2402
        %v2585 = vpop.f32.mrf.mxu0
        %v2586 = vadd.f32 0.0, %v2585
        %2587 = vmatmul.f32.gmra.mxu0 %v2405
        %v2588 = vpop.f32.mrf.mxu0
        %v2589 = vadd.f32 0.0, %v2588
        %2590 = vmatmul.f32.gmra.mxu0 %v2408
        %v2591 = vpop.f32.mrf.mxu0
        %v2592 = vadd.f32 0.0, %v2591
        %2593 = vmatmul.f32.gmra.mxu0 %v2411
        %v2594 = vpop.f32.mrf.mxu0
        %v2595 = vadd.f32 0.0, %v2594
        %2596 = vmatmul.f32.gmra.mxu0 %v2414
        %v2597 = vpop.f32.mrf.mxu0
        %v2598 = vadd.f32 0.0, %v2597
        %2599 = vmatmul.f32.gmra.mxu0 %v2417
        %v2600 = vpop.f32.mrf.mxu0
        %v2601 = vadd.f32 0.0, %v2600
        %2602 = vmatmul.f32.gmra.mxu0 %v2420
        %v2603 = vpop.f32.mrf.mxu0
        %v2604 = vadd.f32 0.0, %v2603
        %2605 = vmatmul.f32.gmra.mxu0 %v2423
        %v2606 = vpop.f32.mrf.mxu0
        %v2607 = vadd.f32 0.0, %v2606
        %2608 = vmatmul.f32.gmra.mxu0 %v2426
        %v2609 = vpop.f32.mrf.mxu0
        %v2610 = vadd.f32 0.0, %v2609
        %2611 = vmatmul.f32.gmra.mxu0 %v2429
        %v2612 = vpop.f32.mrf.mxu0
        %v2613 = vadd.f32 0.0, %v2612
        %2614 = vmatmul.f32.gmra.mxu0 %v2432
        %v2615 = vpop.f32.mrf.mxu0
        %v2616 = vadd.f32 0.0, %v2615
        %2617 = vmatmul.f32.gmra.mxu0 %v2435
        %v2618 = vpop.f32.mrf.mxu0
        %v2619 = vadd.f32 0.0, %v2618
        %2620 = vmatmul.f32.gmra.mxu0 %v2438
        %v2621 = vpop.f32.mrf.mxu0
        %v2622 = vadd.f32 0.0, %v2621
        %2623 = vmatmul.f32.gmra.mxu0 %v2441
        %v2624 = vpop.f32.mrf.mxu0
        %v2625 = vadd.f32 0.0, %v2624
        %2626 = vdwg.mxu0
        %v2627 = vld [vmem:[#allocation2] sm:$0xff]
        %v2628 = vld [vmem:[#allocation2 + $0x8] sm:$0xff]
        %v2629 = vld [vmem:[#allocation2 + $0x10] sm:$0xff]
        %v2630 = vld [vmem:[#allocation2 + $0x18] sm:$0xff]
        %v2631 = vld [vmem:[#allocation2 + $0x20] sm:$0xff]
        %v2632 = vld [vmem:[#allocation2 + $0x28] sm:$0xff]
        %v2633 = vld [vmem:[#allocation2 + $0x30] sm:$0xff]
        %v2634 = vld [vmem:[#allocation2 + $0x38] sm:$0xff]
        %v2635 = vld [vmem:[#allocation2 + $0x40] sm:$0xff]
        %v2636 = vld [vmem:[#allocation2 + $0x48] sm:$0xff]
        %v2637 = vld [vmem:[#allocation2 + $0x50] sm:$0xff]
        %v2638 = vld [vmem:[#allocation2 + $0x58] sm:$0xff]
        %v2639 = vld [vmem:[#allocation2 + $0x60] sm:$0xff]
        %v2640 = vld [vmem:[#allocation2 + $0x68] sm:$0xff]
        %v2641 = vld [vmem:[#allocation2 + $0x70] sm:$0xff]
        %v2642 = vld [vmem:[#allocation2 + $0x78] sm:$0xff]
        %v2643 = vld [vmem:[#allocation2 + $0x80] sm:$0xff]
        %v2644 = vld [vmem:[#allocation2 + $0x88] sm:$0xff]
        %v2645 = vld [vmem:[#allocation2 + $0x90] sm:$0xff]
        %v2646 = vld [vmem:[#allocation2 + $0x98] sm:$0xff]
        %v2647 = vld [vmem:[#allocation2 + $0xa0] sm:$0xff]
        %v2648 = vld [vmem:[#allocation2 + $0xa8] sm:$0xff]
        %v2649 = vld [vmem:[#allocation2 + $0xb0] sm:$0xff]
        %v2650 = vld [vmem:[#allocation2 + $0xb8] sm:$0xff]
        %v2651 = vld [vmem:[#allocation2 + $0xc0] sm:$0xff]
        %v2652 = vld [vmem:[#allocation2 + $0xc8] sm:$0xff]
        %v2653 = vld [vmem:[#allocation2 + $0xd0] sm:$0xff]
        %v2654 = vld [vmem:[#allocation2 + $0xd8] sm:$0xff]
        %v2655 = vld [vmem:[#allocation2 + $0xe0] sm:$0xff]
        %v2656 = vld [vmem:[#allocation2 + $0xe8] sm:$0xff]
        %v2657 = vld [vmem:[#allocation2 + $0xf0] sm:$0xff]
        %v2658 = vld [vmem:[#allocation2 + $0xf8] sm:$0xff]
        %v2659 = vld [vmem:[#allocation2 + $0x100] sm:$0xff]
        %v2660 = vld [vmem:[#allocation2 + $0x108] sm:$0xff]
        %v2661 = vld [vmem:[#allocation2 + $0x110] sm:$0xff]
        %v2662 = vld [vmem:[#allocation2 + $0x118] sm:$0xff]
        %v2663 = vld [vmem:[#allocation2 + $0x120] sm:$0xff]
        %v2664 = vld [vmem:[#allocation2 + $0x128] sm:$0xff]
        %v2665 = vld [vmem:[#allocation2 + $0x130] sm:$0xff]
        %v2666 = vld [vmem:[#allocation2 + $0x138] sm:$0xff]
        %v2667 = vld [vmem:[#allocation2 + $0x140] sm:$0xff]
        %v2668 = vld [vmem:[#allocation2 + $0x148] sm:$0xff]
        %v2669 = vld [vmem:[#allocation2 + $0x150] sm:$0xff]
        %v2670 = vld [vmem:[#allocation2 + $0x158] sm:$0xff]
        %v2671 = vld [vmem:[#allocation2 + $0x160] sm:$0xff]
        %v2672 = vld [vmem:[#allocation2 + $0x168] sm:$0xff]
        %v2673 = vld [vmem:[#allocation2 + $0x170] sm:$0xff]
        %v2674 = vld [vmem:[#allocation2 + $0x178] sm:$0xff]
        %v2675 = vadd.f32 %v2627, %v2467
        %v2676 = vadd.f32 %v2628, %v2556
        %v2677 = vadd.f32 %v2629, %v2470
        %v2678 = vadd.f32 %v2630, %v2559
        %v2679 = vadd.f32 %v2631, %v2473
        %v2680 = vadd.f32 %v2632, %v2562
        %v2681 = vadd.f32 %v2633, %v2476
        %v2682 = vadd.f32 %v2634, %v2565
        %v2683 = vadd.f32 %v2635, %v2479
        %v2684 = vadd.f32 %v2636, %v2568
        %v2685 = vadd.f32 %v2637, %v2482
        %v2686 = vadd.f32 %v2638, %v2571
        %v2687 = vadd.f32 %v2639, %v2485
        %v2688 = vadd.f32 %v2640, %v2574
        %v2689 = vadd.f32 %v2641, %v2488
        %v2690 = vadd.f32 %v2642, %v2577
        %v2691 = vadd.f32 %v2643, %v2491
        %v2692 = vadd.f32 %v2644, %v2580
        %v2693 = vadd.f32 %v2645, %v2494
        %v2694 = vadd.f32 %v2646, %v2583
        %v2695 = vadd.f32 %v2647, %v2497
        %v2696 = vadd.f32 %v2648, %v2586
        %v2697 = vadd.f32 %v2649, %v2500
        %v2698 = vadd.f32 %v2650, %v2589
        %v2699 = vadd.f32 %v2651, %v2503
        %v2700 = vadd.f32 %v2652, %v2592
        %v2701 = vadd.f32 %v2653, %v2506
        %v2702 = vadd.f32 %v2654, %v2595
        %v2703 = vadd.f32 %v2655, %v2509
        %v2704 = vadd.f32 %v2656, %v2598
        %v2705 = vadd.f32 %v2657, %v2512
        %v2706 = vadd.f32 %v2658, %v2601
        %v2707 = vadd.f32 %v2659, %v2515
        %v2708 = vadd.f32 %v2660, %v2604
        %v2709 = vadd.f32 %v2661, %v2518
        %v2710 = vadd.f32 %v2662, %v2607
        %v2711 = vadd.f32 %v2663, %v2521
        %v2712 = vadd.f32 %v2664, %v2610
        %v2713 = vadd.f32 %v2665, %v2524
        %v2714 = vadd.f32 %v2666, %v2613
        %v2715 = vadd.f32 %v2667, %v2527
        %v2716 = vadd.f32 %v2668, %v2616
        %v2717 = vadd.f32 %v2669, %v2530
        %v2718 = vadd.f32 %v2670, %v2619
        %v2719 = vadd.f32 %v2671, %v2533
        %v2720 = vadd.f32 %v2672, %v2622
        %v2721 = vadd.f32 %v2673, %v2536
        %v2722 = vadd.f32 %v2674, %v2625
        %2723 = vst [vmem:[#allocation2] sm:$0xff] %v2675
        %2724 = vst.msk [vmem:[#allocation2 + $0x8] sm:$0xff] %vm987, %v2676
        %2725 = vst [vmem:[#allocation2 + $0x10] sm:$0xff] %v2677
        %2726 = vst.msk [vmem:[#allocation2 + $0x18] sm:$0xff] %vm987, %v2678
        %2727 = vst [vmem:[#allocation2 + $0x20] sm:$0xff] %v2679
        %2728 = vst.msk [vmem:[#allocation2 + $0x28] sm:$0xff] %vm987, %v2680
        %2729 = vst [vmem:[#allocation2 + $0x30] sm:$0xff] %v2681
        %2730 = vst.msk [vmem:[#allocation2 + $0x38] sm:$0xff] %vm987, %v2682
        %2731 = vst [vmem:[#allocation2 + $0x40] sm:$0xff] %v2683
        %2732 = vst.msk [vmem:[#allocation2 + $0x48] sm:$0xff] %vm987, %v2684
        %2733 = vst [vmem:[#allocation2 + $0x50] sm:$0xff] %v2685
        %2734 = vst.msk [vmem:[#allocation2 + $0x58] sm:$0xff] %vm987, %v2686
        %2735 = vst [vmem:[#allocation2 + $0x60] sm:$0xff] %v2687
        %2736 = vst.msk [vmem:[#allocation2 + $0x68] sm:$0xff] %vm987, %v2688
        %2737 = vst [vmem:[#allocation2 + $0x70] sm:$0xff] %v2689
        %2738 = vst.msk [vmem:[#allocation2 + $0x78] sm:$0xff] %vm987, %v2690
        %2739 = vst [vmem:[#allocation2 + $0x80] sm:$0xff] %v2691
        %2740 = vst.msk [vmem:[#allocation2 + $0x88] sm:$0xff] %vm987, %v2692
        %2741 = vst [vmem:[#allocation2 + $0x90] sm:$0xff] %v2693
        %2742 = vst.msk [vmem:[#allocation2 + $0x98] sm:$0xff] %vm987, %v2694
        %2743 = vst [vmem:[#allocation2 + $0xa0] sm:$0xff] %v2695
        %2744 = vst.msk [vmem:[#allocation2 + $0xa8] sm:$0xff] %vm987, %v2696
        %2745 = vst [vmem:[#allocation2 + $0xb0] sm:$0xff] %v2697
        %2746 = vst.msk [vmem:[#allocation2 + $0xb8] sm:$0xff] %vm987, %v2698
        %2747 = vst [vmem:[#allocation2 + $0xc0] sm:$0xff] %v2699
        %2748 = vst.msk [vmem:[#allocation2 + $0xc8] sm:$0xff] %vm987, %v2700
        %2749 = vst [vmem:[#allocation2 + $0xd0] sm:$0xff] %v2701
        %2750 = vst.msk [vmem:[#allocation2 + $0xd8] sm:$0xff] %vm987, %v2702
        %2751 = vst [vmem:[#allocation2 + $0xe0] sm:$0xff] %v2703
        %2752 = vst.msk [vmem:[#allocation2 + $0xe8] sm:$0xff] %vm987, %v2704
        %2753 = vst [vmem:[#allocation2 + $0xf0] sm:$0xff] %v2705
        %2754 = vst.msk [vmem:[#allocation2 + $0xf8] sm:$0xff] %vm987, %v2706
        %2755 = vst [vmem:[#allocation2 + $0x100] sm:$0xff] %v2707
        %2756 = vst.msk [vmem:[#allocation2 + $0x108] sm:$0xff] %vm987, %v2708
        %2757 = vst [vmem:[#allocation2 + $0x110] sm:$0xff] %v2709
        %2758 = vst.msk [vmem:[#allocation2 + $0x118] sm:$0xff] %vm987, %v2710
        %2759 = vst [vmem:[#allocation2 + $0x120] sm:$0xff] %v2711
        %2760 = vst.msk [vmem:[#allocation2 + $0x128] sm:$0xff] %vm987, %v2712
        %2761 = vst [vmem:[#allocation2 + $0x130] sm:$0xff] %v2713
        %2762 = vst.msk [vmem:[#allocation2 + $0x138] sm:$0xff] %vm987, %v2714
        %2763 = vst [vmem:[#allocation2 + $0x140] sm:$0xff] %v2715
        %2764 = vst.msk [vmem:[#allocation2 + $0x148] sm:$0xff] %vm987, %v2716
        %2765 = vst [vmem:[#allocation2 + $0x150] sm:$0xff] %v2717
        %2766 = vst.msk [vmem:[#allocation2 + $0x158] sm:$0xff] %vm987, %v2718
        %2767 = vst [vmem:[#allocation2 + $0x160] sm:$0xff] %v2719
        %2768 = vst.msk [vmem:[#allocation2 + $0x168] sm:$0xff] %vm987, %v2720
        %2769 = vst [vmem:[#allocation2 + $0x170] sm:$0xff] %v2721
        %2770 = vst.msk [vmem:[#allocation2 + $0x178] sm:$0xff] %vm987, %v2722
        %v2771 = vld [vmem:[#allocation2] sm:$0xff]
        %v2772 = vld [vmem:[#allocation2 + $0x8] sm:$0xff]
        %v2773 = vld [vmem:[#allocation2 + $0x10] sm:$0xff]
        %v2774 = vld [vmem:[#allocation2 + $0x18] sm:$0xff]
        %v2775 = vld [vmem:[#allocation2 + $0x20] sm:$0xff]
        %v2776 = vld [vmem:[#allocation2 + $0x28] sm:$0xff]
        %v2777 = vld [vmem:[#allocation2 + $0x30] sm:$0xff]
        %v2778 = vld [vmem:[#allocation2 + $0x38] sm:$0xff]
        %v2779 = vld [vmem:[#allocation2 + $0x40] sm:$0xff]
        %v2780 = vld [vmem:[#allocation2 + $0x48] sm:$0xff]
        %v2781 = vld [vmem:[#allocation2 + $0x50] sm:$0xff]
        %v2782 = vld [vmem:[#allocation2 + $0x58] sm:$0xff]
        %v2783 = vld [vmem:[#allocation2 + $0x60] sm:$0xff]
        %v2784 = vld [vmem:[#allocation2 + $0x68] sm:$0xff]
        %v2785 = vld [vmem:[#allocation2 + $0x70] sm:$0xff]
        %v2786 = vld [vmem:[#allocation2 + $0x78] sm:$0xff]
        %v2787 = vld [vmem:[#allocation2 + $0x80] sm:$0xff]
        %v2788 = vld [vmem:[#allocation2 + $0x88] sm:$0xff]
        %v2789 = vld [vmem:[#allocation2 + $0x90] sm:$0xff]
        %v2790 = vld [vmem:[#allocation2 + $0x98] sm:$0xff]
        %v2791 = vld [vmem:[#allocation2 + $0xa0] sm:$0xff]
        %v2792 = vld [vmem:[#allocation2 + $0xa8] sm:$0xff]
        %v2793 = vld [vmem:[#allocation2 + $0xb0] sm:$0xff]
        %v2794 = vld [vmem:[#allocation2 + $0xb8] sm:$0xff]
        %v2795 = vld [vmem:[#allocation2 + $0xc0] sm:$0xff]
        %v2796 = vld [vmem:[#allocation2 + $0xc8] sm:$0xff]
        %v2797 = vld [vmem:[#allocation2 + $0xd0] sm:$0xff]
        %v2798 = vld [vmem:[#allocation2 + $0xd8] sm:$0xff]
        %v2799 = vld [vmem:[#allocation2 + $0xe0] sm:$0xff]
        %v2800 = vld [vmem:[#allocation2 + $0xe8] sm:$0xff]
        %v2801 = vld [vmem:[#allocation2 + $0xf0] sm:$0xff]
        %v2802 = vld [vmem:[#allocation2 + $0xf8] sm:$0xff]
        %v2803 = vld [vmem:[#allocation2 + $0x100] sm:$0xff]
        %v2804 = vld [vmem:[#allocation2 + $0x108] sm:$0xff]
        %v2805 = vld [vmem:[#allocation2 + $0x110] sm:$0xff]
        %v2806 = vld [vmem:[#allocation2 + $0x118] sm:$0xff]
        %v2807 = vld [vmem:[#allocation2 + $0x120] sm:$0xff]
        %v2808 = vld [vmem:[#allocation2 + $0x128] sm:$0xff]
        %v2809 = vld [vmem:[#allocation2 + $0x130] sm:$0xff]
        %v2810 = vld [vmem:[#allocation2 + $0x138] sm:$0xff]
        %v2811 = vld [vmem:[#allocation2 + $0x140] sm:$0xff]
        %v2812 = vld [vmem:[#allocation2 + $0x148] sm:$0xff]
        %v2813 = vld [vmem:[#allocation2 + $0x150] sm:$0xff]
        %v2814 = vld [vmem:[#allocation2 + $0x158] sm:$0xff]
        %v2815 = vld [vmem:[#allocation2 + $0x160] sm:$0xff]
        %v2816 = vld [vmem:[#allocation2 + $0x168] sm:$0xff]
        %v2817 = vld [vmem:[#allocation2 + $0x170] sm:$0xff]
        %v2818 = vld [vmem:[#allocation2 + $0x178] sm:$0xff]
        %v2819 = vmax.f32 %v2771, %v2773
        %v2820 = vmax.f32 %v2772, %v2774
        %v2821 = vmax.f32 %v2775, %v2777
        %v2822 = vmax.f32 %v2776, %v2778
        %v2823 = vmax.f32 %v2779, %v2781
        %v2824 = vmax.f32 %v2780, %v2782
        %v2825 = vmax.f32 %v2783, %v2785
        %v2826 = vmax.f32 %v2784, %v2786
        %v2827 = vmax.f32 %v2787, %v2789
        %v2828 = vmax.f32 %v2788, %v2790
        %v2829 = vmax.f32 %v2791, %v2793
        %v2830 = vmax.f32 %v2792, %v2794
        %v2831 = vmax.f32 %v2795, %v2797
        %v2832 = vmax.f32 %v2796, %v2798
        %v2833 = vmax.f32 %v2799, %v2801
        %v2834 = vmax.f32 %v2800, %v2802
        %v2835 = vmax.f32 %v2803, %v2805
        %v2836 = vmax.f32 %v2804, %v2806
        %v2837 = vmax.f32 %v2807, %v2809
        %v2838 = vmax.f32 %v2808, %v2810
        %v2839 = vmax.f32 %v2811, %v2813
        %v2840 = vmax.f32 %v2812, %v2814
        %v2841 = vmax.f32 %v2815, %v2817
        %v2842 = vmax.f32 %v2816, %v2818
        %v2843 = vmax.f32 %v2819, 0.0
        %v2844 = vmax.f32 %v2820, 0.0
        %v2845 = vmax.f32 %v2821, 0.0
        %v2846 = vmax.f32 %v2822, 0.0
        %v2847 = vmax.f32 %v2823, 0.0
        %v2848 = vmax.f32 %v2824, 0.0
        %v2849 = vmax.f32 %v2825, 0.0
        %v2850 = vmax.f32 %v2826, 0.0
        %v2851 = vmax.f32 %v2827, 0.0
        %v2852 = vmax.f32 %v2828, 0.0
        %v2853 = vmax.f32 %v2829, 0.0
        %v2854 = vmax.f32 %v2830, 0.0
        %v2855 = vmax.f32 %v2831, 0.0
        %v2856 = vmax.f32 %v2832, 0.0
        %v2857 = vmax.f32 %v2833, 0.0
        %v2858 = vmax.f32 %v2834, 0.0
        %v2859 = vmax.f32 %v2835, 0.0
        %v2860 = vmax.f32 %v2836, 0.0
        %v2861 = vmax.f32 %v2837, 0.0
        %v2862 = vmax.f32 %v2838, 0.0
        %v2863 = vmax.f32 %v2839, 0.0
        %v2864 = vmax.f32 %v2840, 0.0
        %v2865 = vmax.f32 %v2841, 0.0
        %v2866 = vmax.f32 %v2842, 0.0
        %v2867 = vld [vmem:[%s3] sm:$0xff]
        %v2868 = vld [vmem:[%s3 + $0x8] sm:$0xff]
        %v2869 = vld [vmem:[%s3 + $0x10] sm:$0xff]
        %v2870 = vld [vmem:[%s3 + $0x18] sm:$0xff]
        %v2871 = vld [vmem:[%s3 + $0x20] sm:$0xff]
        %v2872 = vld [vmem:[%s3 + $0x28] sm:$0xff]
        %v2873 = vld [vmem:[%s3 + $0x30] sm:$0xff]
        %v2874 = vld [vmem:[%s3 + $0x38] sm:$0xff]
        %v2875 = vld [vmem:[%s3 + $0x40] sm:$0xff]
        %v2876 = vld [vmem:[%s3 + $0x48] sm:$0xff]
        %v2877 = vld [vmem:[%s3 + $0x50] sm:$0xff]
        %v2878 = vld [vmem:[%s3 + $0x58] sm:$0xff]
        %v2879 = vld [vmem:[%s3 + $0x60] sm:$0xff]
        %v2880 = vld [vmem:[%s3 + $0x68] sm:$0xff]
        %v2881 = vld [vmem:[%s3 + $0x70] sm:$0xff]
        %v2882 = vld [vmem:[%s3 + $0x78] sm:$0xff]
        %v2883 = vld [vmem:[%s3 + $0x80] sm:$0xff]
        %v2884 = vld [vmem:[%s3 + $0x88] sm:$0xff]
        %v2886 = vsel %vm987, %v2844, 0
        %v2889 = vsel %vm987, %v2846, 0
        %v2892 = vsel %vm987, %v2848, 0
        %v2895 = vsel %vm987, %v2850, 0
        %v2898 = vsel %vm987, %v2852, 0
        %v2901 = vsel %vm987, %v2854, 0
        %v2904 = vsel %vm987, %v2856, 0
        %v2907 = vsel %vm987, %v2858, 0
        %v2910 = vsel %vm987, %v2860, 0
        %v2913 = vsel %vm987, %v2862, 0
        %v2916 = vsel %vm987, %v2864, 0
        %v2919 = vsel %vm987, %v2866, 0
        %2921 = vmatpush.msra.mxu0 %v2882
        %2922 = vmatpush.msra.mxu0 %v2881
        %2923 = vmatpush.msra.mxu0 %v2880
        %2924 = vmatpush.msra.mxu0 %v2879
        %2925 = vmatpush.msra.mxu0 %v2878
        %2926 = vmatpush.msra.mxu0 %v2877
        %2927 = vmatpush.msra.mxu0 %v2876
        %2928 = vmatpush.msra.mxu0 %v2875
        %2929 = vmatpush.msra.mxu0 %v2874
        %2930 = vmatpush.msra.mxu0 %v2873
        %2931 = vmatpush.msra.mxu0 %v2872
        %2932 = vmatpush.msra.mxu0 %v2871
        %2933 = vmatpush.msra.mxu0 %v2870
        %2934 = vmatpush.msra.mxu0 %v2869
        %2935 = vmatpush.msra.mxu0 %v2868
        %2936 = vmatpush.msra.mxu0 %v2867
        %2937 = vmatmul.f32.gmra.mxu0 %v2843
        %v2938 = vpop.f32.mrf.mxu0
        %v2939 = vadd.f32 0.0, %v2938
        %2940 = vmatmul.f32.gmra.mxu0 %v2845
        %v2941 = vpop.f32.mrf.mxu0
        %v2942 = vadd.f32 0.0, %v2941
        %2943 = vmatmul.f32.gmra.mxu0 %v2847
        %v2944 = vpop.f32.mrf.mxu0
        %v2945 = vadd.f32 0.0, %v2944
        %2946 = vmatmul.f32.gmra.mxu0 %v2849
        %v2947 = vpop.f32.mrf.mxu0
        %v2948 = vadd.f32 0.0, %v2947
        %2949 = vmatmul.f32.gmra.mxu0 %v2851
        %v2950 = vpop.f32.mrf.mxu0
        %v2951 = vadd.f32 0.0, %v2950
        %2952 = vmatmul.f32.gmra.mxu0 %v2853
        %v2953 = vpop.f32.mrf.mxu0
        %v2954 = vadd.f32 0.0, %v2953
        %2955 = vmatmul.f32.gmra.mxu0 %v2855
        %v2956 = vpop.f32.mrf.mxu0
        %v2957 = vadd.f32 0.0, %v2956
        %2958 = vmatmul.f32.gmra.mxu0 %v2857
        %v2959 = vpop.f32.mrf.mxu0
        %v2960 = vadd.f32 0.0, %v2959
        %2961 = vmatmul.f32.gmra.mxu0 %v2859
        %v2962 = vpop.f32.mrf.mxu0
        %v2963 = vadd.f32 0.0, %v2962
        %2964 = vmatmul.f32.gmra.mxu0 %v2861
        %v2965 = vpop.f32.mrf.mxu0
        %v2966 = vadd.f32 0.0, %v2965
        %2967 = vmatmul.f32.gmra.mxu0 %v2863
        %v2968 = vpop.f32.mrf.mxu0
        %v2969 = vadd.f32 0.0, %v2968
        %2970 = vmatmul.f32.gmra.mxu0 %v2865
        %v2971 = vpop.f32.mrf.mxu0
        %v2972 = vadd.f32 0.0, %v2971
        %2973 = vdwg.mxu0
        %2974 = vmatpush.msra.mxu0 0.0
        %2975 = vmatpush.msra.mxu0 0.0
        %2976 = vmatpush.msra.mxu0 0.0
        %2977 = vmatpush.msra.mxu0 0.0
        %2978 = vmatpush.msra.mxu0 0.0
        %2979 = vmatpush.msra.mxu0 0.0
        %2980 = vmatpush.msra.mxu0 0.0
        %2981 = vmatpush.msra.mxu0 0.0
        %2982 = vmatpush.msra.mxu0 0.0
        %2983 = vmatpush.msra.mxu0 0.0
        %2984 = vmatpush.msra.mxu0 0.0
        %2985 = vmatpush.msra.mxu0 0.0
        %2986 = vmatpush.msra.mxu0 0.0
        %2987 = vmatpush.msra.mxu0 0.0
        %2988 = vmatpush.msra.mxu0 %v2884
        %2989 = vmatpush.msra.mxu0 %v2883
        %2990 = vmatmul.f32.gmra.mxu0 %v2886
        %v2991 = vpop.f32.mrf.mxu0
        %v2992 = vadd.f32 %v2939, %v2991
        %2993 = vmatmul.f32.gmra.mxu0 %v2889
        %v2994 = vpop.f32.mrf.mxu0
        %v2995 = vadd.f32 %v2942, %v2994
        %2996 = vmatmul.f32.gmra.mxu0 %v2892
        %v2997 = vpop.f32.mrf.mxu0
        %v2998 = vadd.f32 %v2945, %v2997
        %2999 = vmatmul.f32.gmra.mxu0 %v2895
        %v3000 = vpop.f32.mrf.mxu0
        %v3001 = vadd.f32 %v2948, %v3000
        %3002 = vmatmul.f32.gmra.mxu0 %v2898
        %v3003 = vpop.f32.mrf.mxu0
        %v3004 = vadd.f32 %v2951, %v3003
        %3005 = vmatmul.f32.gmra.mxu0 %v2901
        %v3006 = vpop.f32.mrf.mxu0
        %v3007 = vadd.f32 %v2954, %v3006
        %3008 = vmatmul.f32.gmra.mxu0 %v2904
        %v3009 = vpop.f32.mrf.mxu0
        %v3010 = vadd.f32 %v2957, %v3009
        %3011 = vmatmul.f32.gmra.mxu0 %v2907
        %v3012 = vpop.f32.mrf.mxu0
        %v3013 = vadd.f32 %v2960, %v3012
        %3014 = vmatmul.f32.gmra.mxu0 %v2910
        %v3015 = vpop.f32.mrf.mxu0
        %v3016 = vadd.f32 %v2963, %v3015
        %3017 = vmatmul.f32.gmra.mxu0 %v2913
        %v3018 = vpop.f32.mrf.mxu0
        %v3019 = vadd.f32 %v2966, %v3018
        %3020 = vmatmul.f32.gmra.mxu0 %v2916
        %v3021 = vpop.f32.mrf.mxu0
        %v3022 = vadd.f32 %v2969, %v3021
        %3023 = vmatmul.f32.gmra.mxu0 %v2919
        %v3024 = vpop.f32.mrf.mxu0
        %v3025 = vadd.f32 %v2972, %v3024
        %3026 = vdwg.mxu0
        %v3027 = vld [vmem:[%s4] sm:$0xff]
        %v3028 = vld [vmem:[%s4 + $0x8] sm:$0xff]
        %v3029 = vld [vmem:[%s4 + $0x10] sm:$0xff]
        %v3030 = vld [vmem:[%s4 + $0x18] sm:$0xff]
        %v3031 = vld [vmem:[%s4 + $0x20] sm:$0xff]
        %v3032 = vld [vmem:[%s4 + $0x28] sm:$0xff]
        %v3033 = vld [vmem:[%s4 + $0x30] sm:$0xff]
        %v3034 = vld [vmem:[%s4 + $0x38] sm:$0xff]
        %v3035 = vld [vmem:[%s4 + $0x40] sm:$0xff]
        %v3036 = vld [vmem:[%s4 + $0x48] sm:$0xff]
        %v3037 = vld [vmem:[%s4 + $0x50] sm:$0xff]
        %v3038 = vld [vmem:[%s4 + $0x58] sm:$0xff]
        %v3039 = vld [vmem:[%s4 + $0x60] sm:$0xff]
        %v3040 = vld [vmem:[%s4 + $0x68] sm:$0xff]
        %v3041 = vld [vmem:[%s4 + $0x70] sm:$0xff]
        %v3042 = vld [vmem:[%s4 + $0x78] sm:$0xff]
        %v3043 = vld [vmem:[%s4 + $0x80] sm:$0xff]
        %v3044 = vld [vmem:[%s4 + $0x88] sm:$0xff]
        %3045 = vmatpush.msra.mxu0 %v3042
        %3046 = vmatpush.msra.mxu0 %v3041
        %3047 = vmatpush.msra.mxu0 %v3040
        %3048 = vmatpush.msra.mxu0 %v3039
        %3049 = vmatpush.msra.mxu0 %v3038
        %3050 = vmatpush.msra.mxu0 %v3037
        %3051 = vmatpush.msra.mxu0 %v3036
        %3052 = vmatpush.msra.mxu0 %v3035
        %3053 = vmatpush.msra.mxu0 %v3034
        %3054 = vmatpush.msra.mxu0 %v3033
        %3055 = vmatpush.msra.mxu0 %v3032
        %3056 = vmatpush.msra.mxu0 %v3031
        %3057 = vmatpush.msra.mxu0 %v3030
        %3058 = vmatpush.msra.mxu0 %v3029
        %3059 = vmatpush.msra.mxu0 %v3028
        %3060 = vmatpush.msra.mxu0 %v3027
        %3061 = vmatmul.f32.gmra.mxu0 %v2843
        %v3062 = vpop.f32.mrf.mxu0
        %v3063 = vadd.f32 0.0, %v3062
        %3064 = vmatmul.f32.gmra.mxu0 %v2845
        %v3065 = vpop.f32.mrf.mxu0
        %v3066 = vadd.f32 0.0, %v3065
        %3067 = vmatmul.f32.gmra.mxu0 %v2847
        %v3068 = vpop.f32.mrf.mxu0
        %v3069 = vadd.f32 0.0, %v3068
        %3070 = vmatmul.f32.gmra.mxu0 %v2849
        %v3071 = vpop.f32.mrf.mxu0
        %v3072 = vadd.f32 0.0, %v3071
        %3073 = vmatmul.f32.gmra.mxu0 %v2851
        %v3074 = vpop.f32.mrf.mxu0
        %v3075 = vadd.f32 0.0, %v3074
        %3076 = vmatmul.f32.gmra.mxu0 %v2853
        %v3077 = vpop.f32.mrf.mxu0
        %v3078 = vadd.f32 0.0, %v3077
        %3079 = vmatmul.f32.gmra.mxu0 %v2855
        %v3080 = vpop.f32.mrf.mxu0
        %v3081 = vadd.f32 0.0, %v3080
        %3082 = vmatmul.f32.gmra.mxu0 %v2857
        %v3083 = vpop.f32.mrf.mxu0
        %v3084 = vadd.f32 0.0, %v3083
        %3085 = vmatmul.f32.gmra.mxu0 %v2859
        %v3086 = vpop.f32.mrf.mxu0
        %v3087 = vadd.f32 0.0, %v3086
        %3088 = vmatmul.f32.gmra.mxu0 %v2861
        %v3089 = vpop.f32.mrf.mxu0
        %v3090 = vadd.f32 0.0, %v3089
        %3091 = vmatmul.f32.gmra.mxu0 %v2863
        %v3092 = vpop.f32.mrf.mxu0
        %v3093 = vadd.f32 0.0, %v3092
        %3094 = vmatmul.f32.gmra.mxu0 %v2865
        %v3095 = vpop.f32.mrf.mxu0
        %v3096 = vadd.f32 0.0, %v3095
        %3097 = vdwg.mxu0
        %3098 = vmatpush.msra.mxu0 0.0
        %3099 = vmatpush.msra.mxu0 0.0
        %3100 = vmatpush.msra.mxu0 0.0
        %3101 = vmatpush.msra.mxu0 0.0
        %3102 = vmatpush.msra.mxu0 0.0
        %3103 = vmatpush.msra.mxu0 0.0
        %3104 = vmatpush.msra.mxu0 0.0
        %3105 = vmatpush.msra.mxu0 0.0
        %3106 = vmatpush.msra.mxu0 0.0
        %3107 = vmatpush.msra.mxu0 0.0
        %3108 = vmatpush.msra.mxu0 0.0
        %3109 = vmatpush.msra.mxu0 0.0
        %3110 = vmatpush.msra.mxu0 0.0
        %3111 = vmatpush.msra.mxu0 0.0
        %3112 = vmatpush.msra.mxu0 %v3044
        %3113 = vmatpush.msra.mxu0 %v3043
        %3114 = vmatmul.f32.gmra.mxu0 %v2886
        %v3115 = vpop.f32.mrf.mxu0
        %v3116 = vadd.f32 %v3063, %v3115
        %3117 = vmatmul.f32.gmra.mxu0 %v2889
        %v3118 = vpop.f32.mrf.mxu0
        %v3119 = vadd.f32 %v3066, %v3118
        %3120 = vmatmul.f32.gmra.mxu0 %v2892
        %v3121 = vpop.f32.mrf.mxu0
        %v3122 = vadd.f32 %v3069, %v3121
        %3123 = vmatmul.f32.gmra.mxu0 %v2895
        %v3124 = vpop.f32.mrf.mxu0
        %v3125 = vadd.f32 %v3072, %v3124
        %3126 = vmatmul.f32.gmra.mxu0 %v2898
        %v3127 = vpop.f32.mrf.mxu0
        %v3128 = vadd.f32 %v3075, %v3127
        %3129 = vmatmul.f32.gmra.mxu0 %v2901
        %v3130 = vpop.f32.mrf.mxu0
        %v3131 = vadd.f32 %v3078, %v3130
        %3132 = vmatmul.f32.gmra.mxu0 %v2904
        %v3133 = vpop.f32.mrf.mxu0
        %v3134 = vadd.f32 %v3081, %v3133
        %3135 = vmatmul.f32.gmra.mxu0 %v2907
        %v3136 = vpop.f32.mrf.mxu0
        %v3137 = vadd.f32 %v3084, %v3136
        %3138 = vmatmul.f32.gmra.mxu0 %v2910
        %v3139 = vpop.f32.mrf.mxu0
        %v3140 = vadd.f32 %v3087, %v3139
        %3141 = vmatmul.f32.gmra.mxu0 %v2913
        %v3142 = vpop.f32.mrf.mxu0
        %v3143 = vadd.f32 %v3090, %v3142
        %3144 = vmatmul.f32.gmra.mxu0 %v2916
        %v3145 = vpop.f32.mrf.mxu0
        %v3146 = vadd.f32 %v3093, %v3145
        %3147 = vmatmul.f32.gmra.mxu0 %v2919
        %v3148 = vpop.f32.mrf.mxu0
        %v3149 = vadd.f32 %v3096, %v3148
        %3150 = vdwg.mxu0
        %v3151 = vmax.f32 %v2992, %v3116
        %v3152 = vmax.f32 %v2995, %v3119
        %v3153 = vmax.f32 %v2998, %v3122
        %v3154 = vmax.f32 %v3001, %v3125
        %v3155 = vmax.f32 %v3004, %v3128
        %v3156 = vmax.f32 %v3007, %v3131
        %v3157 = vmax.f32 %v3010, %v3134
        %v3158 = vmax.f32 %v3013, %v3137
        %v3159 = vmax.f32 %v3016, %v3140
        %v3160 = vmax.f32 %v3019, %v3143
        %v3161 = vmax.f32 %v3022, %v3146
        %v3162 = vmax.f32 %v3025, %v3149
        %v3163 = vld [vmem:[%s5] sm:$0xff]
        %v3164 = vld [vmem:[%s5 + $0x8] sm:$0xff]
        %v3165 = vld [vmem:[%s5 + $0x10] sm:$0xff]
        %v3166 = vld [vmem:[%s5 + $0x18] sm:$0xff]
        %v3167 = vld [vmem:[%s5 + $0x20] sm:$0xff]
        %v3168 = vld [vmem:[%s5 + $0x28] sm:$0xff]
        %v3169 = vld [vmem:[%s5 + $0x30] sm:$0xff]
        %v3170 = vld [vmem:[%s5 + $0x38] sm:$0xff]
        %v3171 = vld [vmem:[%s5 + $0x40] sm:$0xff]
        %s3172 = scalar_lea.vmem %s5, 72
        %v3173 = vld [vmem:[%s3172] sm:$0xff]
        %v3174 = vld [vmem:[%s3172 + $0x8] sm:$0xff]
        %v3175 = vld [vmem:[%s3172 + $0x10] sm:$0xff]
        %v3176 = vld [vmem:[%s3172 + $0x18] sm:$0xff]
        %v3177 = vld [vmem:[%s3172 + $0x20] sm:$0xff]
        %v3178 = vld [vmem:[%s3172 + $0x28] sm:$0xff]
        %v3179 = vld [vmem:[%s3172 + $0x30] sm:$0xff]
        %v3180 = vld [vmem:[%s3172 + $0x38] sm:$0xff]
        %v3181 = vld [vmem:[%s3172 + $0x40] sm:$0xff]
        %vm3182 = vcmask 588800
        %v3184 = vsel %vm3182, %v3152, 0
        %v3187 = vsel %vm3182, %v3153, 0
        %v3190 = vsel %vm3182, %v3154, 0
        %v3193 = vsel %vm3182, %v3155, 0
        %v3196 = vsel %vm3182, %v3156, 0
        %v3199 = vsel %vm3182, %v3157, 0
        %v3202 = vsel %vm3182, %v3158, 0
        %v3205 = vsel %vm3182, %v3159, 0
        %3207 = vmatpush.msra.mxu0 0.0
        %3208 = vmatpush.msra.mxu0 0.0
        %3209 = vmatpush.msra.mxu0 0.0
        %3210 = vmatpush.msra.mxu0 0.0
        %3211 = vmatpush.msra.mxu0 0.0
        %3212 = vmatpush.msra.mxu0 0.0
        %3213 = vmatpush.msra.mxu0 0.0
        %3214 = vmatpush.msra.mxu0 %v3181
        %3215 = vmatpush.msra.mxu0 %v3180
        %3216 = vmatpush.msra.mxu0 %v3179
        %3217 = vmatpush.msra.mxu0 %v3178
        %3218 = vmatpush.msra.mxu0 %v3177
        %3219 = vmatpush.msra.mxu0 %v3176
        %3220 = vmatpush.msra.mxu0 %v3175
        %3221 = vmatpush.msra.mxu0 %v3174
        %3222 = vmatpush.msra.mxu0 %v3173
        %3223 = vmatmul.f32.gmra.mxu0 %v3184
        %v3224 = vpop.f32.mrf.mxu0
        %v3225 = vadd.f32 0.0, %v3224
        %3226 = vmatmul.f32.gmra.mxu0 %v3187
        %v3227 = vpop.f32.mrf.mxu0
        %v3228 = vadd.f32 0.0, %v3227
        %3229 = vmatmul.f32.gmra.mxu0 %v3190
        %v3230 = vpop.f32.mrf.mxu0
        %v3231 = vadd.f32 0.0, %v3230
        %3232 = vmatmul.f32.gmra.mxu0 %v3193
        %v3233 = vpop.f32.mrf.mxu0
        %v3234 = vadd.f32 0.0, %v3233
        %3235 = vmatmul.f32.gmra.mxu0 %v3196
        %v3236 = vpop.f32.mrf.mxu0
        %v3237 = vadd.f32 0.0, %v3236
        %3238 = vmatmul.f32.gmra.mxu0 %v3199
        %v3239 = vpop.f32.mrf.mxu0
        %v3240 = vadd.f32 0.0, %v3239
        %3241 = vmatmul.f32.gmra.mxu0 %v3202
        %v3242 = vpop.f32.mrf.mxu0
        %v3243 = vadd.f32 0.0, %v3242
        %3244 = vmatmul.f32.gmra.mxu0 %v3205
        %v3245 = vpop.f32.mrf.mxu0
        %v3246 = vadd.f32 0.0, %v3245
        %3247 = vdwg.mxu0
        %v3249 = vsel %vm3182, %v3151, 0
        %3251 = vmatpush.msra.mxu0 0.0
        %3252 = vmatpush.msra.mxu0 0.0
        %3253 = vmatpush.msra.mxu0 0.0
        %3254 = vmatpush.msra.mxu0 0.0
        %3255 = vmatpush.msra.mxu0 0.0
        %3256 = vmatpush.msra.mxu0 0.0
        %3257 = vmatpush.msra.mxu0 0.0
        %3258 = vmatpush.msra.mxu0 %v3171
        %3259 = vmatpush.msra.mxu0 %v3170
        %3260 = vmatpush.msra.mxu0 %v3169
        %3261 = vmatpush.msra.mxu0 %v3168
        %3262 = vmatpush.msra.mxu0 %v3167
        %3263 = vmatpush.msra.mxu0 %v3166
        %3264 = vmatpush.msra.mxu0 %v3165
        %3265 = vmatpush.msra.mxu0 %v3164
        %3266 = vmatpush.msra.mxu0 %v3163
        %3267 = vmatmul.f32.gmra.mxu0 %v3249
        %v3268 = vpop.f32.mrf.mxu0
        %v3269 = vadd.f32 %v3225, %v3268
        %3270 = vmatmul.f32.gmra.mxu0 %v3184
        %v3271 = vpop.f32.mrf.mxu0
        %v3272 = vadd.f32 %v3228, %v3271
        %3273 = vmatmul.f32.gmra.mxu0 %v3187
        %v3274 = vpop.f32.mrf.mxu0
        %v3275 = vadd.f32 %v3231, %v3274
        %3276 = vmatmul.f32.gmra.mxu0 %v3190
        %v3277 = vpop.f32.mrf.mxu0
        %v3278 = vadd.f32 %v3234, %v3277
        %3279 = vmatmul.f32.gmra.mxu0 %v3193
        %v3280 = vpop.f32.mrf.mxu0
        %v3281 = vadd.f32 %v3237, %v3280
        %3282 = vmatmul.f32.gmra.mxu0 %v3196
        %v3283 = vpop.f32.mrf.mxu0
        %v3284 = vadd.f32 %v3240, %v3283
        %3285 = vmatmul.f32.gmra.mxu0 %v3199
        %v3286 = vpop.f32.mrf.mxu0
        %v3287 = vadd.f32 %v3243, %v3286
        %3288 = vmatmul.f32.gmra.mxu0 %v3202
        %v3289 = vpop.f32.mrf.mxu0
        %v3290 = vadd.f32 %v3246, %v3289
        %3291 = vdwg.mxu0
        %s3292 = scalar_lea.vmem %s5, 144
        %v3293 = vld [vmem:[%s3292] sm:$0xff]
        %v3294 = vld [vmem:[%s3292 + $0x8] sm:$0xff]
        %v3295 = vld [vmem:[%s3292 + $0x10] sm:$0xff]
        %v3296 = vld [vmem:[%s3292 + $0x18] sm:$0xff]
        %v3297 = vld [vmem:[%s3292 + $0x20] sm:$0xff]
        %v3298 = vld [vmem:[%s3292 + $0x28] sm:$0xff]
        %v3299 = vld [vmem:[%s3292 + $0x30] sm:$0xff]
        %v3300 = vld [vmem:[%s3292 + $0x38] sm:$0xff]
        %v3301 = vld [vmem:[%s3292 + $0x40] sm:$0xff]
        %v3303 = vsel %vm3182, %v3160, 0
        %3305 = vmatpush.msra.mxu0 0.0
        %3306 = vmatpush.msra.mxu0 0.0
        %3307 = vmatpush.msra.mxu0 0.0
        %3308 = vmatpush.msra.mxu0 0.0
        %3309 = vmatpush.msra.mxu0 0.0
        %3310 = vmatpush.msra.mxu0 0.0
        %3311 = vmatpush.msra.mxu0 0.0
        %3312 = vmatpush.msra.mxu0 %v3301
        %3313 = vmatpush.msra.mxu0 %v3300
        %3314 = vmatpush.msra.mxu0 %v3299
        %3315 = vmatpush.msra.mxu0 %v3298
        %3316 = vmatpush.msra.mxu0 %v3297
        %3317 = vmatpush.msra.mxu0 %v3296
        %3318 = vmatpush.msra.mxu0 %v3295
        %3319 = vmatpush.msra.mxu0 %v3294
        %3320 = vmatpush.msra.mxu0 %v3293
        %3321 = vmatmul.f32.gmra.mxu0 %v3187
        %v3322 = vpop.f32.mrf.mxu0
        %v3323 = vadd.f32 0.0, %v3322
        %3324 = vmatmul.f32.gmra.mxu0 %v3190
        %v3325 = vpop.f32.mrf.mxu0
        %v3326 = vadd.f32 0.0, %v3325
        %3327 = vmatmul.f32.gmra.mxu0 %v3193
        %v3328 = vpop.f32.mrf.mxu0
        %v3329 = vadd.f32 0.0, %v3328
        %3330 = vmatmul.f32.gmra.mxu0 %v3196
        %v3331 = vpop.f32.mrf.mxu0
        %v3332 = vadd.f32 0.0, %v3331
        %3333 = vmatmul.f32.gmra.mxu0 %v3199
        %v3334 = vpop.f32.mrf.mxu0
        %v3335 = vadd.f32 0.0, %v3334
        %3336 = vmatmul.f32.gmra.mxu0 %v3202
        %v3337 = vpop.f32.mrf.mxu0
        %v3338 = vadd.f32 0.0, %v3337
        %3339 = vmatmul.f32.gmra.mxu0 %v3205
        %v3340 = vpop.f32.mrf.mxu0
        %v3341 = vadd.f32 0.0, %v3340
        %3342 = vmatmul.f32.gmra.mxu0 %v3303
        %v3343 = vpop.f32.mrf.mxu0
        %v3344 = vadd.f32 0.0, %v3343
        %3345 = vdwg.mxu0
        %v3346 = vadd.f32 %v3269, %v3323
        %v3347 = vadd.f32 %v3272, %v3326
        %v3348 = vadd.f32 %v3275, %v3329
        %v3349 = vadd.f32 %v3278, %v3332
        %v3350 = vadd.f32 %v3281, %v3335
        %v3351 = vadd.f32 %v3284, %v3338
        %v3352 = vadd.f32 %v3287, %v3341
        %v3353 = vadd.f32 %v3290, %v3344
        %s3354 = scalar_lea.vmem %s5, 216
        %v3355 = vld [vmem:[%s3354] sm:$0xff]
        %v3356 = vld [vmem:[%s3354 + $0x8] sm:$0xff]
        %v3357 = vld [vmem:[%s3354 + $0x10] sm:$0xff]
        %v3358 = vld [vmem:[%s3354 + $0x18] sm:$0xff]
        %v3359 = vld [vmem:[%s3354 + $0x20] sm:$0xff]
        %v3360 = vld [vmem:[%s3354 + $0x28] sm:$0xff]
        %v3361 = vld [vmem:[%s3354 + $0x30] sm:$0xff]
        %v3362 = vld [vmem:[%s3354 + $0x38] sm:$0xff]
        %v3363 = vld [vmem:[%s3354 + $0x40] sm:$0xff]
        %v3365 = vsel %vm3182, %v3161, 0
        %3367 = vmatpush.msra.mxu0 0.0
        %3368 = vmatpush.msra.mxu0 0.0
        %3369 = vmatpush.msra.mxu0 0.0
        %3370 = vmatpush.msra.mxu0 0.0
        %3371 = vmatpush.msra.mxu0 0.0
        %3372 = vmatpush.msra.mxu0 0.0
        %3373 = vmatpush.msra.mxu0 0.0
        %3374 = vmatpush.msra.mxu0 %v3363
        %3375 = vmatpush.msra.mxu0 %v3362
        %3376 = vmatpush.msra.mxu0 %v3361
        %3377 = vmatpush.msra.mxu0 %v3360
        %3378 = vmatpush.msra.mxu0 %v3359
        %3379 = vmatpush.msra.mxu0 %v3358
        %3380 = vmatpush.msra.mxu0 %v3357
        %3381 = vmatpush.msra.mxu0 %v3356
        %3382 = vmatpush.msra.mxu0 %v3355
        %3383 = vmatmul.f32.gmra.mxu0 %v3190
        %v3384 = vpop.f32.mrf.mxu0
        %v3385 = vadd.f32 0.0, %v3384
        %3386 = vmatmul.f32.gmra.mxu0 %v3193
        %v3387 = vpop.f32.mrf.mxu0
        %v3388 = vadd.f32 0.0, %v3387
        %3389 = vmatmul.f32.gmra.mxu0 %v3196
        %v3390 = vpop.f32.mrf.mxu0
        %v3391 = vadd.f32 0.0, %v3390
        %3392 = vmatmul.f32.gmra.mxu0 %v3199
        %v3393 = vpop.f32.mrf.mxu0
        %v3394 = vadd.f32 0.0, %v3393
        %3395 = vmatmul.f32.gmra.mxu0 %v3202
        %v3396 = vpop.f32.mrf.mxu0
        %v3397 = vadd.f32 0.0, %v3396
        %3398 = vmatmul.f32.gmra.mxu0 %v3205
        %v3399 = vpop.f32.mrf.mxu0
        %v3400 = vadd.f32 0.0, %v3399
        %3401 = vmatmul.f32.gmra.mxu0 %v3303
        %v3402 = vpop.f32.mrf.mxu0
        %v3403 = vadd.f32 0.0, %v3402
        %3404 = vmatmul.f32.gmra.mxu0 %v3365
        %v3405 = vpop.f32.mrf.mxu0
        %v3406 = vadd.f32 0.0, %v3405
        %3407 = vdwg.mxu0
        %v3408 = vadd.f32 %v3346, %v3385
        %v3409 = vadd.f32 %v3347, %v3388
        %v3410 = vadd.f32 %v3348, %v3391
        %v3411 = vadd.f32 %v3349, %v3394
        %v3412 = vadd.f32 %v3350, %v3397
        %v3413 = vadd.f32 %v3351, %v3400
        %v3414 = vadd.f32 %v3352, %v3403
        %v3415 = vadd.f32 %v3353, %v3406
        %s3416 = scalar_lea.vmem %s5, 288
        %v3417 = vld [vmem:[%s3416] sm:$0xff]
        %v3418 = vld [vmem:[%s3416 + $0x8] sm:$0xff]
        %v3419 = vld [vmem:[%s3416 + $0x10] sm:$0xff]
        %v3420 = vld [vmem:[%s3416 + $0x18] sm:$0xff]
        %v3421 = vld [vmem:[%s3416 + $0x20] sm:$0xff]
        %v3422 = vld [vmem:[%s3416 + $0x28] sm:$0xff]
        %v3423 = vld [vmem:[%s3416 + $0x30] sm:$0xff]
        %v3424 = vld [vmem:[%s3416 + $0x38] sm:$0xff]
        %v3425 = vld [vmem:[%s3416 + $0x40] sm:$0xff]
        %v3427 = vsel %vm3182, %v3162, 0
        %3429 = vmatpush.msra.mxu0 0.0
        %3430 = vmatpush.msra.mxu0 0.0
        %3431 = vmatpush.msra.mxu0 0.0
        %3432 = vmatpush.msra.mxu0 0.0
        %3433 = vmatpush.msra.mxu0 0.0
        %3434 = vmatpush.msra.mxu0 0.0
        %3435 = vmatpush.msra.mxu0 0.0
        %3436 = vmatpush.msra.mxu0 %v3425
        %3437 = vmatpush.msra.mxu0 %v3424
        %3438 = vmatpush.msra.mxu0 %v3423
        %3439 = vmatpush.msra.mxu0 %v3422
        %3440 = vmatpush.msra.mxu0 %v3421
        %3441 = vmatpush.msra.mxu0 %v3420
        %3442 = vmatpush.msra.mxu0 %v3419
        %3443 = vmatpush.msra.mxu0 %v3418
        %3444 = vmatpush.msra.mxu0 %v3417
        %3445 = vmatmul.f32.gmra.mxu0 %v3193
        %v3446 = vpop.f32.mrf.mxu0
        %v3447 = vadd.f32 0.0, %v3446
        %3448 = vmatmul.f32.gmra.mxu0 %v3196
        %v3449 = vpop.f32.mrf.mxu0
        %v3450 = vadd.f32 0.0, %v3449
        %3451 = vmatmul.f32.gmra.mxu0 %v3199
        %v3452 = vpop.f32.mrf.mxu0
        %v3453 = vadd.f32 0.0, %v3452
        %3454 = vmatmul.f32.gmra.mxu0 %v3202
        %v3455 = vpop.f32.mrf.mxu0
        %v3456 = vadd.f32 0.0, %v3455
        %3457 = vmatmul.f32.gmra.mxu0 %v3205
        %v3458 = vpop.f32.mrf.mxu0
        %v3459 = vadd.f32 0.0, %v3458
        %3460 = vmatmul.f32.gmra.mxu0 %v3303
        %v3461 = vpop.f32.mrf.mxu0
        %v3462 = vadd.f32 0.0, %v3461
        %3463 = vmatmul.f32.gmra.mxu0 %v3365
        %v3464 = vpop.f32.mrf.mxu0
        %v3465 = vadd.f32 0.0, %v3464
        %3466 = vmatmul.f32.gmra.mxu0 %v3427
        %v3467 = vpop.f32.mrf.mxu0
        %v3468 = vadd.f32 0.0, %v3467
        %3469 = vdwg.mxu0
        %v3470 = vadd.f32 %v3408, %v3447
        %v3471 = vadd.f32 %v3409, %v3450
        %v3472 = vadd.f32 %v3410, %v3453
        %v3473 = vadd.f32 %v3411, %v3456
        %v3474 = vadd.f32 %v3412, %v3459
        %v3475 = vadd.f32 %v3413, %v3462
        %v3476 = vadd.f32 %v3414, %v3465
        %v3477 = vadd.f32 %v3415, %v3468
        %v3478 = vld [vmem:[%s6] sm:$0x1]
        %v3480 = vperm.slane %v3478, 0
        %v3482 = vadd.f32 %v3470, %v3480
        %v3483 = vadd.f32 %v3471, %v3480
        %v3484 = vadd.f32 %v3472, %v3480
        %v3485 = vadd.f32 %v3473, %v3480
        %v3486 = vadd.f32 %v3474, %v3480
        %v3487 = vadd.f32 %v3475, %v3480
        %v3488 = vadd.f32 %v3476, %v3480
        %v3489 = vadd.f32 %v3477, %v3480
        %v3490 = vmax.f32 %v3482, 0.0
        %v3491 = vmax.f32 %v3483, 0.0
        %v3492 = vmax.f32 %v3484, 0.0
        %v3493 = vmax.f32 %v3485, 0.0
        %v3494 = vmax.f32 %v3486, 0.0
        %v3495 = vmax.f32 %v3487, 0.0
        %v3496 = vmax.f32 %v3488, 0.0
        %v3497 = vmax.f32 %v3489, 0.0
        %v3498 = vmax.f32 %v3490, %v3491
        %v3499 = vmax.f32 %v3492, %v3493
        %v3500 = vmax.f32 %v3494, %v3495
        %v3501 = vmax.f32 %v3496, %v3497
        %v3502 = vld [vmem:[%s7] sm:$0xff]
        %v3503 = vld [vmem:[%s7 + $0x8] sm:$0xff]
        %v3504 = vld [vmem:[%s7 + $0x10] sm:$0xff]
        %v3505 = vld [vmem:[%s7 + $0x18] sm:$0xff]
        %v3506 = vld [vmem:[%s7 + $0x20] sm:$0xff]
        %v3507 = vld [vmem:[%s7 + $0x28] sm:$0xff]
        %v3508 = vld [vmem:[%s7 + $0x30] sm:$0xff]
        %v3509 = vld [vmem:[%s7 + $0x38] sm:$0xff]
        %v3510 = vld [vmem:[%s7 + $0x40] sm:$0xff]
        %v3511 = vld [vmem:[%s7 + $0x48] sm:$0xff]
        %v3512 = vld [vmem:[%s7 + $0x50] sm:$0xff]
        %v3513 = vld [vmem:[%s7 + $0x58] sm:$0xff]
        %v3514 = vld [vmem:[%s7 + $0x60] sm:$0xff]
        %v3515 = vld [vmem:[%s7 + $0x68] sm:$0xff]
        %v3516 = vld [vmem:[%s7 + $0x70] sm:$0xff]
        %v3517 = vld [vmem:[%s7 + $0x78] sm:$0xff]
        %3518 = vmatpush.msra.mxu0 %v3517
        %3519 = vmatpush.msra.mxu0 %v3516
        %3520 = vmatpush.msra.mxu0 %v3515
        %3521 = vmatpush.msra.mxu0 %v3514
        %3522 = vmatpush.msra.mxu0 %v3513
        %3523 = vmatpush.msra.mxu0 %v3512
        %3524 = vmatpush.msra.mxu0 %v3511
        %3525 = vmatpush.msra.mxu0 %v3510
        %3526 = vmatpush.msra.mxu0 %v3509
        %3527 = vmatpush.msra.mxu0 %v3508
        %3528 = vmatpush.msra.mxu0 %v3507
        %3529 = vmatpush.msra.mxu0 %v3506
        %3530 = vmatpush.msra.mxu0 %v3505
        %3531 = vmatpush.msra.mxu0 %v3504
        %3532 = vmatpush.msra.mxu0 %v3503
        %3533 = vmatpush.msra.mxu0 %v3502
        %3534 = vmatmul.f32.gmra.mxu0 %v3498
        %v3535 = vpop.f32.mrf.mxu0
        %v3536 = vadd.f32 0.0, %v3535
        %3537 = vmatmul.f32.gmra.mxu0 %v3499
        %v3538 = vpop.f32.mrf.mxu0
        %v3539 = vadd.f32 0.0, %v3538
        %3540 = vmatmul.f32.gmra.mxu0 %v3500
        %v3541 = vpop.f32.mrf.mxu0
        %v3542 = vadd.f32 0.0, %v3541
        %3543 = vmatmul.f32.gmra.mxu0 %v3501
        %v3544 = vpop.f32.mrf.mxu0
        %v3545 = vadd.f32 0.0, %v3544
        %3546 = vdwg.mxu0
        %v3547 = vld [vmem:[%s8] sm:$0xff]
        %v3548 = vld [vmem:[%s8 + $0x8] sm:$0xff]
        %v3549 = vld [vmem:[%s8 + $0x10] sm:$0xff]
        %v3550 = vld [vmem:[%s8 + $0x18] sm:$0xff]
        %v3551 = vld [vmem:[%s8 + $0x20] sm:$0xff]
        %v3552 = vld [vmem:[%s8 + $0x28] sm:$0xff]
        %v3553 = vld [vmem:[%s8 + $0x30] sm:$0xff]
        %v3554 = vld [vmem:[%s8 + $0x38] sm:$0xff]
        %v3555 = vld [vmem:[%s8 + $0x40] sm:$0xff]
        %v3556 = vld [vmem:[%s8 + $0x48] sm:$0xff]
        %v3557 = vld [vmem:[%s8 + $0x50] sm:$0xff]
        %v3558 = vld [vmem:[%s8 + $0x58] sm:$0xff]
        %v3559 = vld [vmem:[%s8 + $0x60] sm:$0xff]
        %v3560 = vld [vmem:[%s8 + $0x68] sm:$0xff]
        %v3561 = vld [vmem:[%s8 + $0x70] sm:$0xff]
        %v3562 = vld [vmem:[%s8 + $0x78] sm:$0xff]
        %3563 = vmatpush.msra.mxu0 %v3562
        %3564 = vmatpush.msra.mxu0 %v3561
        %3565 = vmatpush.msra.mxu0 %v3560
        %3566 = vmatpush.msra.mxu0 %v3559
        %3567 = vmatpush.msra.mxu0 %v3558
        %3568 = vmatpush.msra.mxu0 %v3557
        %3569 = vmatpush.msra.mxu0 %v3556
        %3570 = vmatpush.msra.mxu0 %v3555
        %3571 = vmatpush.msra.mxu0 %v3554
        %3572 = vmatpush.msra.mxu0 %v3553
        %3573 = vmatpush.msra.mxu0 %v3552
        %3574 = vmatpush.msra.mxu0 %v3551
        %3575 = vmatpush.msra.mxu0 %v3550
        %3576 = vmatpush.msra.mxu0 %v3549
        %3577 = vmatpush.msra.mxu0 %v3548
        %3578 = vmatpush.msra.mxu0 %v3547
        %3579 = vmatmul.f32.gmra.mxu0 %v3498
        %v3580 = vpop.f32.mrf.mxu0
        %v3581 = vadd.f32 0.0, %v3580
        %3582 = vmatmul.f32.gmra.mxu0 %v3499
        %v3583 = vpop.f32.mrf.mxu0
        %v3584 = vadd.f32 0.0, %v3583
        %3585 = vmatmul.f32.gmra.mxu0 %v3500
        %v3586 = vpop.f32.mrf.mxu0
        %v3587 = vadd.f32 0.0, %v3586
        %3588 = vmatmul.f32.gmra.mxu0 %v3501
        %v3589 = vpop.f32.mrf.mxu0
        %v3590 = vadd.f32 0.0, %v3589
        %3591 = vdwg.mxu0
        %v3592 = vmax.f32 %v3536, %v3581
        %v3593 = vmax.f32 %v3539, %v3584
        %v3594 = vmax.f32 %v3542, %v3587
        %v3595 = vmax.f32 %v3545, %v3590
        %v3596 = vld [vmem:[%s9] sm:$0xff]
        %v3597 = vld [vmem:[%s9 + $0x8] sm:$0xff]
        %v3598 = vld [vmem:[%s9 + $0x10] sm:$0xff]
        %v3599 = vld [vmem:[%s9 + $0x18] sm:$0xff]
        %v3600 = vld [vmem:[%s9 + $0x20] sm:$0xff]
        %v3601 = vld [vmem:[%s9 + $0x28] sm:$0xff]
        %v3602 = vld [vmem:[%s9 + $0x30] sm:$0xff]
        %v3603 = vld [vmem:[%s9 + $0x38] sm:$0xff]
        %s3604 = scalar_lea.vmem %s9, 64
        %v3605 = vld [vmem:[%s3604] sm:$0xff]
        %v3606 = vld [vmem:[%s3604 + $0x8] sm:$0xff]
        %v3607 = vld [vmem:[%s3604 + $0x10] sm:$0xff]
        %v3608 = vld [vmem:[%s3604 + $0x18] sm:$0xff]
        %v3609 = vld [vmem:[%s3604 + $0x20] sm:$0xff]
        %v3610 = vld [vmem:[%s3604 + $0x28] sm:$0xff]
        %v3611 = vld [vmem:[%s3604 + $0x30] sm:$0xff]
        %v3612 = vld [vmem:[%s3604 + $0x38] sm:$0xff]
        %vm3613 = vcmask 523264
        %v3615 = vsel %vm3613, %v3593, 0
        %3617 = vmatpush.msra.mxu0 0.0
        %3618 = vmatpush.msra.mxu0 0.0
        %3619 = vmatpush.msra.mxu0 0.0
        %3620 = vmatpush.msra.mxu0 0.0
        %3621 = vmatpush.msra.mxu0 0.0
        %3622 = vmatpush.msra.mxu0 0.0
        %3623 = vmatpush.msra.mxu0 0.0
        %3624 = vmatpush.msra.mxu0 0.0
        %3625 = vmatpush.msra.mxu0 %v3612
        %3626 = vmatpush.msra.mxu0 %v3611
        %3627 = vmatpush.msra.mxu0 %v3610
        %3628 = vmatpush.msra.mxu0 %v3609
        %3629 = vmatpush.msra.mxu0 %v3608
        %3630 = vmatpush.msra.mxu0 %v3607
        %3631 = vmatpush.msra.mxu0 %v3606
        %3632 = vmatpush.msra.mxu0 %v3605
        %3633 = vmatmul.f32.gmra.mxu0 %v3615
        %v3634 = vpop.f32.mrf.mxu0
        %v3635 = vadd.f32 0.0, %v3634
        %3636 = vdwg.mxu0
        %v3638 = vsel %vm3613, %v3592, 0
        %3640 = vmatpush.msra.mxu0 0.0
        %3641 = vmatpush.msra.mxu0 0.0
        %3642 = vmatpush.msra.mxu0 0.0
        %3643 = vmatpush.msra.mxu0 0.0
        %3644 = vmatpush.msra.mxu0 0.0
        %3645 = vmatpush.msra.mxu0 0.0
        %3646 = vmatpush.msra.mxu0 0.0
        %3647 = vmatpush.msra.mxu0 0.0
        %3648 = vmatpush.msra.mxu0 %v3603
        %3649 = vmatpush.msra.mxu0 %v3602
        %3650 = vmatpush.msra.mxu0 %v3601
        %3651 = vmatpush.msra.mxu0 %v3600
        %3652 = vmatpush.msra.mxu0 %v3599
        %3653 = vmatpush.msra.mxu0 %v3598
        %3654 = vmatpush.msra.mxu0 %v3597
        %3655 = vmatpush.msra.mxu0 %v3596
        %3656 = vmatmul.f32.gmra.mxu0 %v3638
        %v3657 = vpop.f32.mrf.mxu0
        %v3658 = vadd.f32 %v3635, %v3657
        %3659 = vdwg.mxu0
        %s3660 = scalar_lea.vmem %s9, 128
        %v3661 = vld [vmem:[%s3660] sm:$0xff]
        %v3662 = vld [vmem:[%s3660 + $0x8] sm:$0xff]
        %v3663 = vld [vmem:[%s3660 + $0x10] sm:$0xff]
        %v3664 = vld [vmem:[%s3660 + $0x18] sm:$0xff]
        %v3665 = vld [vmem:[%s3660 + $0x20] sm:$0xff]
        %v3666 = vld [vmem:[%s3660 + $0x28] sm:$0xff]
        %v3667 = vld [vmem:[%s3660 + $0x30] sm:$0xff]
        %v3668 = vld [vmem:[%s3660 + $0x38] sm:$0xff]
        %v3670 = vsel %vm3613, %v3594, 0
        %3672 = vmatpush.msra.mxu0 0.0
        %3673 = vmatpush.msra.mxu0 0.0
        %3674 = vmatpush.msra.mxu0 0.0
        %3675 = vmatpush.msra.mxu0 0.0
        %3676 = vmatpush.msra.mxu0 0.0
        %3677 = vmatpush.msra.mxu0 0.0
        %3678 = vmatpush.msra.mxu0 0.0
        %3679 = vmatpush.msra.mxu0 0.0
        %3680 = vmatpush.msra.mxu0 %v3668
        %3681 = vmatpush.msra.mxu0 %v3667
        %3682 = vmatpush.msra.mxu0 %v3666
        %3683 = vmatpush.msra.mxu0 %v3665
        %3684 = vmatpush.msra.mxu0 %v3664
        %3685 = vmatpush.msra.mxu0 %v3663
        %3686 = vmatpush.msra.mxu0 %v3662
        %3687 = vmatpush.msra.mxu0 %v3661
        %3688 = vmatmul.f32.gmra.mxu0 %v3670
        %v3689 = vpop.f32.mrf.mxu0
        %v3690 = vadd.f32 0.0, %v3689
        %3691 = vdwg.mxu0
        %v3692 = vadd.f32 %v3658, %v3690
        %s3693 = scalar_lea.vmem %s9, 192
        %v3694 = vld [vmem:[%s3693] sm:$0xff]
        %v3695 = vld [vmem:[%s3693 + $0x8] sm:$0xff]
        %v3696 = vld [vmem:[%s3693 + $0x10] sm:$0xff]
        %v3697 = vld [vmem:[%s3693 + $0x18] sm:$0xff]
        %v3698 = vld [vmem:[%s3693 + $0x20] sm:$0xff]
        %v3699 = vld [vmem:[%s3693 + $0x28] sm:$0xff]
        %v3700 = vld [vmem:[%s3693 + $0x30] sm:$0xff]
        %v3701 = vld [vmem:[%s3693 + $0x38] sm:$0xff]
        %v3703 = vsel %vm3613, %v3595, 0
        %3705 = vmatpush.msra.mxu0 0.0
        %3706 = vmatpush.msra.mxu0 0.0
        %3707 = vmatpush.msra.mxu0 0.0
        %3708 = vmatpush.msra.mxu0 0.0
        %3709 = vmatpush.msra.mxu0 0.0
        %3710 = vmatpush.msra.mxu0 0.0
        %3711 = vmatpush.msra.mxu0 0.0
        %3712 = vmatpush.msra.mxu0 0.0
        %3713 = vmatpush.msra.mxu0 %v3701
        %3714 = vmatpush.msra.mxu0 %v3700
        %3715 = vmatpush.msra.mxu0 %v3699
        %3716 = vmatpush.msra.mxu0 %v3698
        %3717 = vmatpush.msra.mxu0 %v3697
        %3718 = vmatpush.msra.mxu0 %v3696
        %3719 = vmatpush.msra.mxu0 %v3695
        %3720 = vmatpush.msra.mxu0 %v3694
        %3721 = vmatmul.f32.gmra.mxu0 %v3703
        %v3722 = vpop.f32.mrf.mxu0
        %v3723 = vadd.f32 0.0, %v3722
        %3724 = vdwg.mxu0
        %v3725 = vadd.f32 %v3692, %v3723
        %v3726 = vld [vmem:[%s10] sm:$0x1]
        %v3728 = vperm.slane %v3726, 0
        %v3730 = vadd.f32 %v3725, %v3728
        %v3731 = vmax.f32 %v3730, 0.0
        %v3732 = vld [vmem:[%s11] sm:$0xff]
        %v3733 = vld [vmem:[%s11 + $0x8] sm:$0xff]
        %v3734 = vld [vmem:[%s11 + $0x10] sm:$0xff]
        %v3735 = vld [vmem:[%s11 + $0x18] sm:$0xff]
        %v3736 = vld [vmem:[%s12] sm:$0x1]
        %v3738 = vperm.slane %v3736, 0
        %vm3740 = vcmask 261120
        %v3742 = vsel %vm3740, %v3731, 0
        %3744 = vmatpush.msra.mxu0 0.0
        %3745 = vmatpush.msra.mxu0 0.0
        %3746 = vmatpush.msra.mxu0 0.0
        %3747 = vmatpush.msra.mxu0 0.0
        %3748 = vmatpush.msra.mxu0 0.0
        %3749 = vmatpush.msra.mxu0 0.0
        %3750 = vmatpush.msra.mxu0 0.0
        %3751 = vmatpush.msra.mxu0 0.0
        %3752 = vmatpush.msra.mxu0 0.0
        %3753 = vmatpush.msra.mxu0 0.0
        %3754 = vmatpush.msra.mxu0 0.0
        %3755 = vmatpush.msra.mxu0 0.0
        %3756 = vmatpush.msra.mxu0 %v3735
        %3757 = vmatpush.msra.mxu0 %v3734
        %3758 = vmatpush.msra.mxu0 %v3733
        %3759 = vmatpush.msra.mxu0 %v3732
        %3760 = vmatmul.f32.gmra.mxu0 %v3742
        %v3761 = vpop.f32.mrf.mxu0
        %v3762 = vadd.f32 %v3738, %v3761
        %3763 = vdwg.mxu0
        %v3764 = vmax.f32 %v3762, 0.0
        %v3765 = vld [vmem:[%s13] sm:$0xff]
        %v3766 = vld [vmem:[%s13 + $0x8] sm:$0xff]
        %v3767 = vld [vmem:[%s13 + $0x10] sm:$0xff]
        %v3768 = vld [vmem:[%s13 + $0x18] sm:$0xff]
        %v3769 = vld [vmem:[%s13 + $0x20] sm:$0xff]
        %v3770 = vld [vmem:[%s13 + $0x28] sm:$0xff]
        %v3771 = vld [vmem:[%s13 + $0x30] sm:$0xff]
        %v3772 = vld [vmem:[%s13 + $0x38] sm:$0xff]
        %v3773 = vld [vmem:[%s14] sm:$0x1]
        %v3775 = vperm.slane %v3773, 0
        %v3778 = vsel %vm3613, %v3764, 0
        %3780 = vmatpush.msra.mxu0 0.0
        %3781 = vmatpush.msra.mxu0 0.0
        %3782 = vmatpush.msra.mxu0 0.0
        %3783 = vmatpush.msra.mxu0 0.0
        %3784 = vmatpush.msra.mxu0 0.0
        %3785 = vmatpush.msra.mxu0 0.0
        %3786 = vmatpush.msra.mxu0 0.0
        %3787 = vmatpush.msra.mxu0 0.0
        %3788 = vmatpush.msra.mxu0 %v3772
        %3789 = vmatpush.msra.mxu0 %v3771
        %3790 = vmatpush.msra.mxu0 %v3770
        %3791 = vmatpush.msra.mxu0 %v3769
        %3792 = vmatpush.msra.mxu0 %v3768
        %3793 = vmatpush.msra.mxu0 %v3767
        %3794 = vmatpush.msra.mxu0 %v3766
        %3795 = vmatpush.msra.mxu0 %v3765
        %3796 = vmatmul.f32.gmra.mxu0 %v3778
        %v3797 = vpop.f32.mrf.mxu0
        %v3798 = vadd.f32 %v3775, %v3797
        %3799 = vdwg.mxu0
        %v3800 = vmax.f32 %v3798, 0.0
        %v3801 = vld [vmem:[%s15] sm:$0xff]
        %v3802 = vld [vmem:[%s15 + $0x8] sm:$0xff]
        %v3803 = vld [vmem:[%s15 + $0x10] sm:$0xff]
        %v3804 = vld [vmem:[%s15 + $0x18] sm:$0xff]
        %v3805 = vld [vmem:[%s16] sm:$0x1]
        %v3807 = vperm.slane %v3805, 0
        %v3810 = vsel %vm3740, %v3800, 0
        %3812 = vmatpush.msra.mxu0 0.0
        %3813 = vmatpush.msra.mxu0 0.0
        %3814 = vmatpush.msra.mxu0 0.0
        %3815 = vmatpush.msra.mxu0 0.0
        %3816 = vmatpush.msra.mxu0 0.0
        %3817 = vmatpush.msra.mxu0 0.0
        %3818 = vmatpush.msra.mxu0 0.0
        %3819 = vmatpush.msra.mxu0 0.0
        %3820 = vmatpush.msra.mxu0 0.0
        %3821 = vmatpush.msra.mxu0 0.0
        %3822 = vmatpush.msra.mxu0 0.0
        %3823 = vmatpush.msra.mxu0 0.0
        %3824 = vmatpush.msra.mxu0 %v3804
        %3825 = vmatpush.msra.mxu0 %v3803
        %3826 = vmatpush.msra.mxu0 %v3802
        %3827 = vmatpush.msra.mxu0 %v3801
        %3828 = vmatmul.f32.gmra.mxu0 %v3810
        %v3829 = vpop.f32.mrf.mxu0
        %v3830 = vadd.f32 %v3807, %v3829
        %3831 = vdwg.mxu0
        %v3832 = vmax.f32 %v3830, 0.0
        %vm3833 = vcmask 80896
        %3834 = vst.msk [vmem:[%s689] sm:$0xff] %vm3833, %v3832
        %s3835 = sand.u32 %s401, 1
        %s3836 = scalar_lea.sflag [#allocation5], %s3835
        %s3837 = sand.u32 %s401, 1
        %s3838 = smul.addr %s3837, 8
        %s3839 = scalar_lea.vmem [#allocation4], %s3838
        // Predicated region
        $region127: #{net_forward.1} parent=121 // pred_check
          %p3840 = pneg %p411
        $region128: #{net_forward.1} parent=121 // pred_check_branch
          %3842 = sbr.rel (%p3840) target = $region130
        $region129: #{net_forward.1} parent=121 // pred_region
          %3844 = vsyncadd %s3836, 0
          %s3845 = smul.addr %s31, 8
          %s3846 = scalar_lea.hbm %s17, %s3845
          %s3848 = sshll.u32 %s3839, 4
          %s3849 = int_to_ptr.vmem [resolvable:$true] %s3848
          %s3850 = sshll.u32 %s3846, 4
          %s3851 = int_to_ptr.hbm [resolvable:$true] %s3850
          %3853 = dma.vmem_to_hbm [thread:$0]  %s3849, 128, %s3851, %s3836
        $region130: #{net_forward.1} parent=121 // pred_fallthru
          _
      $region122: #{net_forward.1} parent=5 // pred_fallthru
        _
      %p3854 = scmp.le.s32.totalorder 2, %s26
      // Predicated region
      $region131: #{net_forward.1} parent=5 // pred_check
        %p3855 = pneg %p3854
      $region132: #{net_forward.1} parent=5 // pred_check_branch
        %3857 = sbr.rel (%p3855) target = $region134
      $region133: #{net_forward.1} parent=5 // pred_region
        %s3858 = ssub.s32 %s26, 2
        // Predicated region
        $region135: #{net_forward.1} parent=133 // pred_check
          %p3859 = pneg %p417
        $region136: #{net_forward.1} parent=133 // pred_check_branch
          %3861 = sbr.rel (%p3859) target = $region138
        $region137: #{net_forward.1} parent=133 // pred_region
          %s3862 = sand.u32 %s402, 1
          %s3863 = scalar_lea.sflag [#allocation5], %s3862
          %s3864 = sand.u32 %s402, 1
          %s3865 = smul.addr %s3864, 8
          %s3866 = scalar_lea.vmem [#allocation4], %s3865
          %3868 = dma.done %s3863, 128
        $region138: #{net_forward.1} parent=133 // pred_fallthru
          _
      $region134: #{net_forward.1} parent=5 // pred_fallthru
        _
    $region6: #{net_forward.1} parent=1 // loop_footer
      %s30 = sadd.s32 1, %s26
    $region7: #{net_forward.1} parent=1 // loop_footer_branch
      %25 = sbr.rel target = $region3
    $region8: #{net_forward.1} parent=1 // loop_exit
      _
    %3869 = vsyncpa [#allocation5], 1
    %s3870 = scalar_lea.sflag [#allocation5], 1
    %3871 = vsyncpa %s3870, 1

</llo_original>
